<compile_context>
chip_gen: v6e
topology: v6e:2x2x1
jax: 0.10.0
libtpu: 0.0.40
codegen_flags: <defaults>
</compile_context>

<pallas_src>
import math
import functools

import numpy as np
import jax
import jax.numpy as jnp
from jax import lax
from jax.experimental import pallas as pl
from jax.experimental.pallas import tpu as pltpu


def _rup8(n):
    return ((n + 7) // 8) * 8


# --------------------------------------------------------------------------
# tap ordering shared by the kernel and host-side weight packing:
# the 9 |dy|,|dx|<=1 taps come FIRST so the 3x3 head conv (and the "inner"
# part of the 5x5 skip conv) reuse the leading rows of the xm im2col.
# --------------------------------------------------------------------------
INNER_TAPS = tuple((dy, dx) for dy in (-1, 0, 1) for dx in (-1, 0, 1))          # 9
OUTER_TAPS = tuple((dy, dx) for dy in (-2, -1, 0, 1, 2) for dx in (-2, -1, 0, 1, 2)
                   if not (abs(dy) <= 1 and abs(dx) <= 1))                      # 16
ALL_TAPS = INNER_TAPS + OUTER_TAPS                                              # 25
_MASK_ROWS = 32  # pad 25 mask rows -> 32 (sublane multiple)


# --------------------------------------------------------------------------
# roll-convention probe (tiny one-off kernel; makes the im2col shift direction
# provably correct regardless of the backend's rotate convention)
# --------------------------------------------------------------------------

def _detect_roll_like_jnp():
    """True iff pltpu.roll(x, s, axis) == jnp.roll(x, s, axis) on this backend
    (i.e. out[i] = in[(i - s) % n])."""
    def kern(x_ref, o_ref):
        o_ref[...] = pltpu.roll(x_ref[...], 1, axis=1)

    x = jnp.tile(jnp.arange(128, dtype=jnp.float32)[None, :], (8, 1))
    try:
        y = pl.pallas_call(
            kern, out_shape=jax.ShapeDtypeStruct((8, 128), jnp.float32))(x)
        return bool(np.asarray(jax.device_get(y))[0, 1] == 0.0)
    except Exception:
        return True  # fall back to the documented jnp.roll convention


# --------------------------------------------------------------------------
# host-side boundary masks (hoisted out of the kernel; one resident input)
# --------------------------------------------------------------------------

def _host_boundary_masks(H, W, batch_tile):
    """(32, batch_tile*H*W) f32 validity masks, row t <-> ALL_TAPS[t].
    Positions are taken modulo HW, so the same masks also zero any roll that
    would wrap across an image boundary when batch is folded into lanes."""
    HW = H * W
    LW = batch_tile * HW
    pos = np.arange(LW) % HW
    py, px = pos // W, pos % W
    rows = np.zeros((_MASK_ROWS, LW), np.float32)
    for t, (dy, dx) in enumerate(ALL_TAPS):
        ok = (py + dy >= 0) & (py + dy < H) & (px + dx >= 0) & (px + dx < W)
        rows[t] = ok.astype(np.float32)
    return rows


# --------------------------------------------------------------------------
# in-kernel im2col: each tap is an XLU lane roll of the flattened spatial axis
# times a precomputed boundary mask; taps concatenated along (8-aligned)
# sublanes so every KxK conv becomes ONE MXU dot.
# --------------------------------------------------------------------------

def _im2col(act, taps, mask_row0, masks_ref, W, roll_like_jnp):
    LW = act.shape[-1]
    cols = []
    for t, (dy, dx) in enumerate(taps):
        s = dy * W + dx            # want tap[i] = act[i + s] (0 outside image)
        if s == 0:
            cols.append(act)
        else:
            amt = (-s if roll_like_jnp else s) % LW
            shifted = pltpu.roll(act, amt, axis=1)
            cols.append(shifted * masks_ref[mask_row0 + t:mask_row0 + t + 1, :])
    return jnp.concatenate(cols, axis=0)


# --------------------------------------------------------------------------
# the fused whole-network kernel (one grid step per batch tile)
# --------------------------------------------------------------------------

def _fused_wdsr_kernel(x_ref, masks_ref, wh_ref, bh_ref,
                       w1_ref, b1_ref, w2_ref, b2_ref, w3_ref, b3_ref,
                       wt_ref, wsi_ref, wso_ref, bts_ref, o_ref,
                       *, H, W, n_blocks, image_mean, roll_like_jnp):
    f32, bf16 = jnp.float32, jnp.bfloat16

    # mean-subtracted input; padded channels were padded with image_mean in
    # the wrapper, so they are exactly 0 here (weight columns are also 0).
    xm = x_ref[0] - image_mean                                        # (Cin_p, LW)

    # shared xm im2col: inner 3x3 taps, reused by head conv AND skip(inner)
    ph = _im2col(xm, INNER_TAPS, 0, masks_ref, W, roll_like_jnp)      # (9*Cin_p, LW)
    ph_bf = ph.astype(bf16)

    # ---- head: 3x3 conv as a single MXU dot over the shared taps -----------
    y = jnp.dot(wh_ref[...], ph_bf, preferred_element_type=f32) + bh_ref[...]

    # ---- residual blocks: in-kernel loop over stacked active-block weights --
    def block_body(i, y):
        t1 = jnp.dot(w1_ref[i], y.astype(bf16),
                     preferred_element_type=f32) + b1_ref[i]
        t1 = jnp.maximum(t1, 0.0)                                     # (C1_p, LW)
        t2 = jnp.dot(w2_ref[i], t1.astype(bf16),
                     preferred_element_type=f32) + b2_ref[i]
        p3 = _im2col(t2, INNER_TAPS, 0, masks_ref, W, roll_like_jnp)  # (9*C2_p, LW)
        return (jnp.dot(w3_ref[i], p3.astype(bf16),
                        preferred_element_type=f32) + b3_ref[i] + y)

    if n_blocks > 0:
        # full unroll only while the block count is small (scaling guard)
        y = lax.fori_loop(0, n_blocks, block_body, y,
                          unroll=True if n_blocks <= 4 else 4)

    # ---- tail(3x3 on y) + skip(5x5 on xm); no big concat: three dots + adds.
    #      skip reuses ph for its inner 9 taps; '+ image_mean' is folded into
    #      the combined bias (PixelShuffle is a pure permutation). -----------
    pt = _im2col(y, INNER_TAPS, 0, masks_ref, W, roll_like_jnp)       # (9*C_p, LW)
    pso = _im2col(xm, OUTER_TAPS, len(INNER_TAPS), masks_ref, W,
                  roll_like_jnp)                                      # (16*Cin_p, LW)
    out = (jnp.dot(wt_ref[...], pt.astype(bf16), preferred_element_type=f32)
           + jnp.dot(wsi_ref[...], ph_bf, preferred_element_type=f32)
           + jnp.dot(wso_ref[...], pso.astype(bf16), preferred_element_type=f32)
           + bts_ref[...])
    o_ref[...] = out.reshape(o_ref.shape)


# --------------------------------------------------------------------------
# host-side weight packing (weight-norm conv -> padded im2col matrices)
# --------------------------------------------------------------------------

def _conv3_w2d(w_oihw, cin_p, cout_p):
    """(O,I,3,3) -> (cout_p, 9*cin_p); columns ordered (tap in INNER_TAPS
    order, channel), matching the in-kernel tap concat order."""
    O, I, k, _ = w_oihw.shape
    w = jnp.transpose(w_oihw, (0, 2, 3, 1))                           # (O,k,k,I)
    w = jnp.pad(w, ((0, cout_p - O), (0, 0), (0, 0), (0, cin_p - I)))
    return w.reshape(cout_p, k * k * cin_p).astype(jnp.float32)


def _conv5_w2d_split(w_oihw, cin_p, cout_p):
    """(O,I,5,5) -> (inner (cout_p, 9*cin_p), outer (cout_p, 16*cin_p)) with
    the custom tap ordering (inner 3x3 taps first)."""
    O, I, _, _ = w_oihw.shape
    w = jnp.transpose(w_oihw, (0, 2, 3, 1))                           # (O,5,5,I)
    w = jnp.pad(w, ((0, cout_p - O), (0, 0), (0, 0), (0, cin_p - I)))
    inner = jnp.concatenate([w[:, dy + 2, dx + 2, :] for dy, dx in INNER_TAPS],
                            axis=1)
    outer = jnp.concatenate([w[:, dy + 2, dx + 2, :] for dy, dx in OUTER_TAPS],
                            axis=1)
    return inner.astype(jnp.float32), outer.astype(jnp.float32)


def _mat_1x1(w_oihw, cin_p, cout_p):
    w = w_oihw[:, :, 0, 0]
    return jnp.pad(w, ((0, cout_p - w.shape[0]),
                       (0, cin_p - w.shape[1]))).astype(jnp.float32)


def _bias_col(b, cout_p):
    return jnp.pad(b, (0, cout_p - b.shape[0])).reshape(cout_p, 1).astype(jnp.float32)


def _pick_batch_tile(B, HW, target_lanes=1024):
    """Largest divisor of B such that batch_tile*HW <= ~target_lanes."""
    cap = max(1, target_lanes // HW)
    bt = 1
    for d in range(1, B + 1):
        if B % d == 0 and d <= cap:
            bt = d
    return bt


def build_forward(P, *, num_channels, scale, H, W, image_mean, roll_like_jnp):
    """Packs weights into kernel layouts and returns a jitted fwd(x_nchw)."""
    C, C1, C2 = P['C'], P['C1'], P['C2']
    Cin_p, C_p, C1_p, C2_p = _rup8(num_channels), _rup8(C), _rup8(C1), _rup8(C2)
    Cout = scale * scale * num_channels
    Cout_p = _rup8(Cout)          # pad 12 -> 16: sublane-aligned final dot/store
    HW = H * W
    bf16 = jnp.bfloat16

    # bf16 MXU operands (f32 accumulation happens in-kernel); biases stay f32.
    wh2d = _conv3_w2d(P['head_w'], Cin_p, C_p).astype(bf16)           # (C_p, 9*Cin_p)
    bh = _bias_col(P['head_b'], C_p)
    wt2d = _conv3_w2d(P['tail_w'], C_p, Cout_p).astype(bf16)          # (Cout_p, 9*C_p)
    ws_in, ws_out = _conv5_w2d_split(P['skip_w'], Cin_p, Cout_p)
    ws_in, ws_out = ws_in.astype(bf16), ws_out.astype(bf16)
    bts = (_bias_col(P['tail_b'], Cout_p) + _bias_col(P['skip_b'], Cout_p)
           + jnp.float32(image_mean))                                 # mean folded in

    # eval-mode block skip decided ONCE on the host (no trace-time syncs)
    keep = [bool(np.asarray(b['alpha1'])[0] < np.asarray(b['alpha2'])[0])
            for b in P['blocks']]
    active = [b for b, k in zip(P['blocks'], keep) if k]
    n_act = len(active)
    if n_act:
        w1s = jnp.stack([_mat_1x1(b['w1'], C_p, C1_p) for b in active]).astype(bf16)
        b1s = jnp.stack([_bias_col(b['b1'], C1_p) for b in active])
        w2s = jnp.stack([_mat_1x1(b['w2'], C1_p, C2_p) for b in active]).astype(bf16)
        b2s = jnp.stack([_bias_col(b['b2'], C2_p) for b in active])
        w3s = jnp.stack([_conv3_w2d(b['w3'], C2_p, C_p) for b in active]).astype(bf16)
        b3s = jnp.stack([_bias_col(b['b3'], C_p) for b in active])
    else:  # dummies; the in-kernel loop runs 0 times
        w1s = jnp.zeros((1, C1_p, C_p), bf16)
        b1s = jnp.zeros((1, C1_p, 1), jnp.float32)
        w2s = jnp.zeros((1, C2_p, C1_p), bf16)
        b2s = jnp.zeros((1, C2_p, 1), jnp.float32)
        w3s = jnp.zeros((1, C_p, 9 * C2_p), bf16)
        b3s = jnp.zeros((1, C_p, 1), jnp.float32)
    n_stack = max(1, n_act)

    # TODO(synk): BlockBSpeedEstimator is not provided; use each block's
    # channel-count sum (get_num_channels) as a deterministic placeholder.
    speed_curr = jnp.full((len(P['blocks']), 1), float(C + C1 + C2 + C),
                          jnp.float32)
    beta2s = jnp.stack([b['beta2'] for b in P['blocks']])             # (num_blocks, 1)

    kern = functools.partial(_fused_wdsr_kernel, H=H, W=W, n_blocks=n_act,
                             image_mean=float(image_mean),
                             roll_like_jnp=roll_like_jnp)

    def forward(x_nchw):
        B = x_nchw.shape[0]
        bt = _pick_batch_tile(B, HW)          # batch folded into lanes
        n_steps = B // bt
        LW = bt * HW

        masks = jnp.asarray(_host_boundary_masks(H, W, bt))           # (32, LW)

        x_flat = x_nchw.reshape(B, num_channels, HW)
        # pad extra channels with image_mean so they are exactly 0 after the
        # in-kernel mean subtraction (robust even if weight padding changed).
        x_flat = jnp.pad(x_flat, ((0, 0), (0, Cin_p - num_channels), (0, 0)),
                         constant_values=image_mean)
        x_steps = x_flat.reshape(n_steps, bt, Cin_p, HW)
        x_steps = jnp.transpose(x_steps, (0, 2, 1, 3)).reshape(n_steps, Cin_p, LW)

        out = pl.pallas_call(
            kern,
            out_shape=jax.ShapeDtypeStruct((n_steps, Cout_p, LW), jnp.float32),
            grid=(n_steps,),
            in_specs=[
                pl.BlockSpec((1, Cin_p, LW), lambda s: (s, 0, 0)),
                pl.BlockSpec((_MASK_ROWS, LW), lambda s: (0, 0)),
                pl.BlockSpec((C_p, 9 * Cin_p), lambda s: (0, 0)),
                pl.BlockSpec((C_p, 1), lambda s: (0, 0)),
                pl.BlockSpec((n_stack, C1_p, C_p), lambda s: (0, 0, 0)),
                pl.BlockSpec((n_stack, C1_p, 1), lambda s: (0, 0, 0)),
                pl.BlockSpec((n_stack, C2_p, C1_p), lambda s: (0, 0, 0)),
                pl.BlockSpec((n_stack, C2_p, 1), lambda s: (0, 0, 0)),
                pl.BlockSpec((n_stack, C_p, 9 * C2_p), lambda s: (0, 0, 0)),
                pl.BlockSpec((n_stack, C_p, 1), lambda s: (0, 0, 0)),
                pl.BlockSpec((Cout_p, 9 * C_p), lambda s: (0, 0)),
                pl.BlockSpec((Cout_p, 9 * Cin_p), lambda s: (0, 0)),
                pl.BlockSpec((Cout_p, 16 * Cin_p), lambda s: (0, 0)),
                pl.BlockSpec((Cout_p, 1), lambda s: (0, 0)),
            ],
            out_specs=pl.BlockSpec((1, Cout_p, LW), lambda s: (s, 0, 0)),
            compiler_params=pltpu.CompilerParams(
                dimension_semantics=("parallel",)),
        )(x_steps, masks, wh2d, bh, w1s, b1s, w2s, b2s, w3s, b3s,
          wt2d, ws_in, ws_out, bts)

        # un-fold batch from lanes, drop padded output channels
        out = out.reshape(n_steps, Cout_p, bt, HW)
        out = jnp.transpose(out, (0, 2, 1, 3)).reshape(B, Cout_p, HW)[:, :Cout]

        # PixelShuffle(scale) on the tiny pre-shuffle tensor (pure permutation)
        r = scale
        o = out.reshape(B, Cout // (r * r), r, r, H, W)
        o = jnp.transpose(o, (0, 1, 4, 2, 5, 3)).reshape(
            B, Cout // (r * r), H * r, W * r)

        # TODO(synk): self.mask (BinaryConv2d) only exists when
        # width_search=True; with width_search=False it is the identity.
        speed_accu = jnp.sum(beta2s * speed_curr, axis=0)              # (1,)
        return o, speed_accu

    return jax.jit(forward)


# --------------------------------------------------------------------------
# parameter construction (torch weight_norm semantics baked in)
# --------------------------------------------------------------------------

def weight_norm_conv(key, cout, cin, k, g_val):
    """w = g * v / ||v|| (norm over (in, kh, kw) per out channel), bias = 0."""
    v = jax.random.normal(key, (cout, cin, k, k), jnp.float32)
    norm = jnp.sqrt(jnp.sum(v * v, axis=(1, 2, 3), keepdims=True))
    w = (g_val * v / norm).astype(jnp.float32)
    b = jnp.zeros((cout,), jnp.float32)
    return w, b


def build_params(key, num_channels, num_residual_units, num_blocks, scale):
    C = num_residual_units
    C1 = int(C * 6)                 # expand = 6
    C2 = int(C * 0.84)              # linear = 0.84
    Cout = scale * scale * num_channels
    keys = jax.random.split(key, 3 + 5 * num_blocks)
    ki = iter(range(len(keys)))

    head_w, head_b = weight_norm_conv(keys[next(ki)], C, num_channels, 3, 1.0)
    tail_w, tail_b = weight_norm_conv(keys[next(ki)], Cout, C, 3, 1.0)
    skip_w, skip_b = weight_norm_conv(keys[next(ki)], Cout, num_channels, 5, 1.0)

    blocks = []
    res_scale = 1.0 / math.sqrt(num_blocks)
    for _ in range(num_blocks):
        w1, b1 = weight_norm_conv(keys[next(ki)], C1, C, 1, 2.0)
        w2, b2 = weight_norm_conv(keys[next(ki)], C2, C1, 1, 2.0)
        w3, b3 = weight_norm_conv(keys[next(ki)], C, C2, 3, res_scale)
        alpha1 = jax.random.uniform(keys[next(ki)], (1,), minval=0.0, maxval=0.2)
        alpha2 = jax.random.uniform(keys[next(ki)], (1,), minval=0.8, maxval=1.0)
        blocks.append(dict(w1=w1, b1=b1, w2=w2, b2=b2, w3=w3, b3=b3,
                           alpha1=alpha1, alpha2=alpha2,
                           beta1=jnp.zeros((1,), jnp.float32),
                           beta2=jnp.ones((1,), jnp.float32)))
    return dict(head_w=head_w, head_b=head_b, tail_w=tail_w, tail_b=tail_b,
                skip_w=skip_w, skip_b=skip_b, blocks=blocks, C=C, C1=C1, C2=C2)


# --------------------------------------------------------------------------
# pure-JAX f32 reference (NCHW, lax.conv, precision=HIGHEST)
# --------------------------------------------------------------------------

def _conv_ref_nchw(x, w, b):
    k = w.shape[-1]
    pad = k // 2
    y = lax.conv_general_dilated(
        x, w, window_strides=(1, 1), padding=[(pad, pad), (pad, pad)],
        dimension_numbers=('NCHW', 'OIHW', 'NCHW'),
        precision=lax.Precision.HIGHEST)
    return y + b[None, :, None, None]


def ref_forward(x_nchw, P, image_mean, scale):
    xm = x_nchw - image_mean
    y = _conv_ref_nchw(xm, P['head_w'], P['head_b'])
    for blk in P['blocks']:
        if float(blk['alpha1'][0]) >= float(blk['alpha2'][0]):
            continue
        t = jax.nn.relu(_conv_ref_nchw(y, blk['w1'], blk['b1']))
        t = _conv_ref_nchw(t, blk['w2'], blk['b2'])
        t = _conv_ref_nchw(t, blk['w3'], blk['b3'])
        y = t + y
    y = (_conv_ref_nchw(y, P['tail_w'], P['tail_b'])
         + _conv_ref_nchw(xm, P['skip_w'], P['skip_b']))
    B, Cfull, H, W = y.shape
    r = scale
    Cc = Cfull // (r * r)
    y = y.reshape(B, Cc, r, r, H, W)
    y = jnp.transpose(y, (0, 1, 4, 2, 5, 3)).reshape(B, Cc, H * r, W * r)
    return y + image_mean


# --------------------------------------------------------------------------
# main
# --------------------------------------------------------------------------

if __name__ == "__main__":
    image_mean = 0.5
    num_channels = 3
    num_residual_units = 8
    num_blocks = 2
    scale = 2
    B, H, W = 2, 16, 16

    key = jax.random.PRNGKey(0)
    k_param, k_input = jax.random.split(key)
    P = build_params(k_param, num_channels, num_residual_units, num_blocks, scale)
    x = jax.random.normal(k_input, (B, num_channels, H, W), jnp.float32)

    roll_like_jnp = _detect_roll_like_jnp()
    fwd = build_forward(P, num_channels=num_channels, scale=scale, H=H, W=W,
                        image_mean=image_mean, roll_like_jnp=roll_like_jnp)

    out, speed_accu = fwd(x)
    out = np.asarray(jax.block_until_ready(out))
    speed_accu = np.asarray(jax.block_until_ready(speed_accu))

    # correctness check against a pure-JAX f32 (HIGHEST precision) reference.
    # The kernel uses bf16 MXU operands with f32 accumulation, so bound the
    # max error relative to the output scale (bf16 operand quantization over
    # ~8 MXU layers stays far below 3% of the dynamic range).
    out_ref = np.asarray(jax.block_until_ready(
        ref_forward(x, P, image_mean, scale)))
    assert out.shape == (B, num_channels, H * scale, W * scale)
    assert speed_accu.shape == (1,)
    ref_scale = float(np.max(np.abs(out_ref)))
    max_err = float(np.max(np.abs(out - out_ref)))
    assert max_err <= 3e-2 * ref_scale, (max_err, ref_scale)

    print("KERNEL_OK")
</pallas_src>

<mosaic_0001>
module attributes {stable_mosaic.version = 11 : i64} {
  func.func @kern(%arg0: memref<8x128xf32, #tpu.memory_space<vmem>>, %arg1: memref<8x128xf32, #tpu.memory_space<vmem>>) attributes {dimension_semantics = [], scalar_prefetch = 0 : i64, scratch_operands = 0 : i64, tpu.core_type = #tpu.core_type<tc>} {
    %c0 = arith.constant 0 : index
    %c0_0 = arith.constant 0 : index
    %0 = vector.load %arg0[%c0, %c0_0] : memref<8x128xf32, #tpu.memory_space<vmem>>, vector<8x128xf32>
    %c1_i32 = arith.constant 1 : i32
    %1 = tpu.dynamic_rotate %0 by %c1_i32 dim 1 : vector<8x128xf32>, i32 -> vector<8x128xf32>
    %c0_1 = arith.constant 0 : index
    %c0_2 = arith.constant 0 : index
    %2 = vector.load %arg1[%c0_1, %c0_2] : memref<8x128xf32, #tpu.memory_space<vmem>>, vector<8x128xf32>
    tpu.vector_store %arg1[%c0_1, %c0_2], %1 {strides = array<i32>} : memref<8x128xf32, #tpu.memory_space<vmem>>, vector<8x128xf32>,
    return
  }
}

module attributes {stable_mosaic.version = 11 : i64} {
  func.func @_fused_wdsr_kernel(%arg0: i32, %arg1: memref<1x8x512xf32, #tpu.memory_space<vmem>>, %arg2: memref<32x512xf32, #tpu.memory_space<vmem>>, %arg3: memref<8x72xbf16, #tpu.memory_space<vmem>>, %arg4: memref<8x1xf32, #tpu.memory_space<vmem>>, %arg5: memref<2x48x8xbf16, #tpu.memory_space<vmem>>, %arg6: memref<2x48x1xf32, #tpu.memory_space<vmem>>, %arg7: memref<2x8x48xbf16, #tpu.memory_space<vmem>>, %arg8: memref<2x8x1xf32, #tpu.memory_space<vmem>>, %arg9: memref<2x8x72xbf16, #tpu.memory_space<vmem>>, %arg10: memref<2x8x1xf32, #tpu.memory_space<vmem>>, %arg11: memref<16x72xbf16, #tpu.memory_space<vmem>>, %arg12: memref<16x72xbf16, #tpu.memory_space<vmem>>, %arg13: memref<16x128xbf16, #tpu.memory_space<vmem>>, %arg14: memref<16x1xf32, #tpu.memory_space<vmem>>, %arg15: memref<1x16x512xf32, #tpu.memory_space<vmem>>) attributes {dimension_semantics = [#tpu.dimension_semantics<parallel>], iteration_bounds = array<i64: 1>, scalar_prefetch = 0 : i64, scratch_operands = 0 : i64, tpu.core_type = #tpu.core_type<tc>, window_params = [{transform_indices = @transform_0, window_bounds = array<i64: 1, 8, 512>}, {pipeline_mode = #tpu.pipeline_mode<synchronous>, transform_indices = @transform_1, window_bounds = array<i64: 32, 512>}, {pipeline_mode = #tpu.pipeline_mode<synchronous>, transform_indices = @transform_2, window_bounds = array<i64: 8, 72>}, {pipeline_mode = #tpu.pipeline_mode<synchronous>, transform_indices = @transform_3, window_bounds = array<i64: 8, 1>}, {pipeline_mode = #tpu.pipeline_mode<synchronous>, transform_indices = @transform_4, window_bounds = array<i64: 2, 48, 8>}, {pipeline_mode = #tpu.pipeline_mode<synchronous>, transform_indices = @transform_5, window_bounds = array<i64: 2, 48, 1>}, {pipeline_mode = #tpu.pipeline_mode<synchronous>, transform_indices = @transform_6, window_bounds = array<i64: 2, 8, 48>}, {pipeline_mode = #tpu.pipeline_mode<synchronous>, transform_indices = @transform_7, window_bounds = array<i64: 2, 8, 1>}, {pipeline_mode = #tpu.pipeline_mode<synchronous>, transform_indices = @transform_8, window_bounds = array<i64: 2, 8, 72>}, {pipeline_mode = #tpu.pipeline_mode<synchronous>, transform_indices = @transform_9, window_bounds = array<i64: 2, 8, 1>}, {pipeline_mode = #tpu.pipeline_mode<synchronous>, transform_indices = @transform_10, window_bounds = array<i64: 16, 72>}, {pipeline_mode = #tpu.pipeline_mode<synchronous>, transform_indices = @transform_11, window_bounds = array<i64: 16, 72>}, {pipeline_mode = #tpu.pipeline_mode<synchronous>, transform_indices = @transform_12, window_bounds = array<i64: 16, 128>}, {pipeline_mode = #tpu.pipeline_mode<synchronous>, transform_indices = @transform_13, window_bounds = array<i64: 16, 1>}, {transform_indices = @transform_14, window_bounds = array<i64: 1, 16, 512>}]} {
    %c0 = arith.constant 0 : index
    %c0_0 = arith.constant 0 : index
    %c0_1 = arith.constant 0 : index
    %0 = vector.load %arg1[%c0, %c0_0, %c0_1] : memref<1x8x512xf32, #tpu.memory_space<vmem>>, vector<1x8x512xf32>
    %1 = vector.shape_cast %0 : vector<1x8x512xf32> to vector<8x512xf32>
    %cst = arith.constant 5.000000e-01 : f32
    %2 = vector.broadcast %cst : f32 to vector<8x512xf32>
    %3 = arith.subf %1, %2 : vector<8x512xf32>
    %c17_i32 = arith.constant 17 : i32
    %4 = tpu.dynamic_rotate %3 by %c17_i32 dim 1 : vector<8x512xf32>, i32 -> vector<8x512xf32>
    %c0_2 = arith.constant 0 : index
    %c0_3 = arith.constant 0 : index
    %5 = vector.load %arg2[%c0_2, %c0_3] : memref<32x512xf32, #tpu.memory_space<vmem>>, vector<1x512xf32>
    %6 = vector.broadcast %5 : vector<1x512xf32> to vector<8x512xf32>
    %7 = arith.mulf %4, %6 : vector<8x512xf32>
    %c16_i32 = arith.constant 16 : i32
    %8 = tpu.dynamic_rotate %3 by %c16_i32 dim 1 : vector<8x512xf32>, i32 -> vector<8x512xf32>
    %c1 = arith.constant 1 : index
    %c0_4 = arith.constant 0 : index
    %9 = vector.load %arg2[%c1, %c0_4] : memref<32x512xf32, #tpu.memory_space<vmem>>, vector<1x512xf32>
    %10 = vector.broadcast %9 : vector<1x512xf32> to vector<8x512xf32>
    %11 = arith.mulf %8, %10 : vector<8x512xf32>
    %c15_i32 = arith.constant 15 : i32
    %12 = tpu.dynamic_rotate %3 by %c15_i32 dim 1 : vector<8x512xf32>, i32 -> vector<8x512xf32>
    %c2 = arith.constant 2 : index
    %c0_5 = arith.constant 0 : index
    %13 = vector.load %arg2[%c2, %c0_5] : memref<32x512xf32, #tpu.memory_space<vmem>>, vector<1x512xf32>
    %14 = vector.broadcast %13 : vector<1x512xf32> to vector<8x512xf32>
    %15 = arith.mulf %12, %14 : vector<8x512xf32>
    %c1_i32 = arith.constant 1 : i32
    %16 = tpu.dynamic_rotate %3 by %c1_i32 dim 1 : vector<8x512xf32>, i32 -> vector<8x512xf32>
    %c3 = arith.constant 3 : index
    %c0_6 = arith.constant 0 : index
    %17 = vector.load %arg2[%c3, %c0_6] : memref<32x512xf32, #tpu.memory_space<vmem>>, vector<1x512xf32>
    %18 = vector.broadcast %17 : vector<1x512xf32> to vector<8x512xf32>
    %19 = arith.mulf %16, %18 : vector<8x512xf32>
    %c511_i32 = arith.constant 511 : i32
    %20 = tpu.dynamic_rotate %3 by %c511_i32 dim 1 : vector<8x512xf32>, i32 -> vector<8x512xf32>
    %c5 = arith.constant 5 : index
    %c0_7 = arith.constant 0 : index
    %21 = vector.load %arg2[%c5, %c0_7] : memref<32x512xf32, #tpu.memory_space<vmem>>, vector<1x512xf32>
    %22 = vector.broadcast %21 : vector<1x512xf32> to vector<8x512xf32>
    %23 = arith.mulf %20, %22 : vector<8x512xf32>
    %c497_i32 = arith.constant 497 : i32
    %24 = tpu.dynamic_rotate %3 by %c497_i32 dim 1 : vector<8x512xf32>, i32 -> vector<8x512xf32>
    %c6 = arith.constant 6 : index
    %c0_8 = arith.constant 0 : index
    %25 = vector.load %arg2[%c6, %c0_8] : memref<32x512xf32, #tpu.memory_space<vmem>>, vector<1x512xf32>
    %26 = vector.broadcast %25 : vector<1x512xf32> to vector<8x512xf32>
    %27 = arith.mulf %24, %26 : vector<8x512xf32>
    %c496_i32 = arith.constant 496 : i32
    %28 = tpu.dynamic_rotate %3 by %c496_i32 dim 1 : vector<8x512xf32>, i32 -> vector<8x512xf32>
    %c7 = arith.constant 7 : index
    %c0_9 = arith.constant 0 : index
    %29 = vector.load %arg2[%c7, %c0_9] : memref<32x512xf32, #tpu.memory_space<vmem>>, vector<1x512xf32>
    %30 = vector.broadcast %29 : vector<1x512xf32> to vector<8x512xf32>
    %31 = arith.mulf %28, %30 : vector<8x512xf32>
    %c495_i32 = arith.constant 495 : i32
    %32 = tpu.dynamic_rotate %3 by %c495_i32 dim 1 : vector<8x512xf32>, i32 -> vector<8x512xf32>
    %c8 = arith.constant 8 : index
    %c0_10 = arith.constant 0 : index
    %33 = vector.load %arg2[%c8, %c0_10] : memref<32x512xf32, #tpu.memory_space<vmem>>, vector<1x512xf32>
    %34 = vector.broadcast %33 : vector<1x512xf32> to vector<8x512xf32>
    %35 = arith.mulf %32, %34 : vector<8x512xf32>
    %36 = tpu.concatenate %7, %11, %15, %19, %3, %23, %27, %31, %35 in 0 : vector<8x512xf32>, vector<8x512xf32>, vector<8x512xf32>, vector<8x512xf32>, vector<8x512xf32>, vector<8x512xf32>, vector<8x512xf32>, vector<8x512xf32>, vector<8x512xf32> -> vector<72x512xf32>
    %37 = arith.truncf %36 : vector<72x512xf32> to vector<72x512xbf16>
    %c0_11 = arith.constant 0 : index
    %c0_12 = arith.constant 0 : index
    %38 = vector.load %arg3[%c0_11, %c0_12] : memref<8x72xbf16, #tpu.memory_space<vmem>>, vector<8x72xbf16>
    %cst_13 = arith.constant dense<0.000000e+00> : vector<8x512xf32>
    %39 = tpu.matmul %38, %37, %cst_13 {dimension_numbers = #tpu.dot_dimension_numbers<[1], [0], [0], [1], [0, 0, 1, 1], [], []>} : vector<8x72xbf16>, vector<72x512xbf16>, vector<8x512xf32> -> vector<8x512xf32>
    %c0_14 = arith.constant 0 : index
    %c0_15 = arith.constant 0 : index
    %40 = vector.load %arg4[%c0_14, %c0_15] : memref<8x1xf32, #tpu.memory_space<vmem>>, vector<8x1xf32>
    %41 = vector.broadcast %40 : vector<8x1xf32> to vector<8x512xf32>
    %42 = arith.addf %39, %41 : vector<8x512xf32>
    %c0_i32 = arith.constant 0 : i32
    %43 = arith.index_cast %c0_i32 : i32 to index
    %c0_16 = arith.constant 0 : index
    %c0_17 = arith.constant 0 : index
    %44 = vector.load %arg5[%43, %c0_16, %c0_17] : memref<2x48x8xbf16, #tpu.memory_space<vmem>>, vector<1x48x8xbf16>
    %45 = vector.shape_cast %44 : vector<1x48x8xbf16> to vector<48x8xbf16>
    %46 = arith.truncf %42 : vector<8x512xf32> to vector<8x512xbf16>
    %cst_18 = arith.constant dense<0.000000e+00> : vector<48x512xf32>
    %47 = tpu.matmul %45, %46, %cst_18 {dimension_numbers = #tpu.dot_dimension_numbers<[1], [0], [0], [1], [0, 0, 1, 1], [], []>} : vector<48x8xbf16>, vector<8x512xbf16>, vector<48x512xf32> -> vector<48x512xf32>
    %48 = arith.index_cast %c0_i32 : i32 to index
    %c0_19 = arith.constant 0 : index
    %c0_20 = arith.constant 0 : index
    %49 = vector.load %arg6[%48, %c0_19, %c0_20] : memref<2x48x1xf32, #tpu.memory_space<vmem>>, vector<1x48x1xf32>
    %50 = vector.shape_cast %49 : vector<1x48x1xf32> to vector<48x1xf32>
    %51 = vector.broadcast %50 : vector<48x1xf32> to vector<48x512xf32>
    %52 = arith.addf %47, %51 : vector<48x512xf32>
    %cst_21 = arith.constant 0.000000e+00 : f32
    %53 = vector.broadcast %cst_21 : f32 to vector<48x512xf32>
    %54 = arith.maximumf %52, %53 : vector<48x512xf32>
    %55 = arith.index_cast %c0_i32 : i32 to index
    %c0_22 = arith.constant 0 : index
    %c0_23 = arith.constant 0 : index
    %56 = vector.load %arg7[%55, %c0_22, %c0_23] : memref<2x8x48xbf16, #tpu.memory_space<vmem>>, vector<1x8x48xbf16>
    %57 = vector.shape_cast %56 : vector<1x8x48xbf16> to vector<8x48xbf16>
    %58 = arith.truncf %54 : vector<48x512xf32> to vector<48x512xbf16>
    %cst_24 = arith.constant dense<0.000000e+00> : vector<8x512xf32>
    %59 = tpu.matmul %57, %58, %cst_24 {dimension_numbers = #tpu.dot_dimension_numbers<[1], [0], [0], [1], [0, 0, 1, 1], [], []>} : vector<8x48xbf16>, vector<48x512xbf16>, vector<8x512xf32> -> vector<8x512xf32>
    %60 = arith.index_cast %c0_i32 : i32 to index
    %c0_25 = arith.constant 0 : index
    %c0_26 = arith.constant 0 : index
    %61 = vector.load %arg8[%60, %c0_25, %c0_26] : memref<2x8x1xf32, #tpu.memory_space<vmem>>, vector<1x8x1xf32>
    %62 = vector.shape_cast %61 : vector<1x8x1xf32> to vector<8x1xf32>
    %63 = vector.broadcast %62 : vector<8x1xf32> to vector<8x512xf32>
    %64 = arith.addf %59, %63 : vector<8x512xf32>
    %c17_i32_27 = arith.constant 17 : i32
    %65 = tpu.dynamic_rotate %64 by %c17_i32_27 dim 1 : vector<8x512xf32>, i32 -> vector<8x512xf32>
    %c0_28 = arith.constant 0 : index
    %c0_29 = arith.constant 0 : index
    %66 = vector.load %arg2[%c0_28, %c0_29] : memref<32x512xf32, #tpu.memory_space<vmem>>, vector<1x512xf32>
    %67 = vector.broadcast %66 : vector<1x512xf32> to vector<8x512xf32>
    %68 = arith.mulf %65, %67 : vector<8x512xf32>
    %c16_i32_30 = arith.constant 16 : i32
    %69 = tpu.dynamic_rotate %64 by %c16_i32_30 dim 1 : vector<8x512xf32>, i32 -> vector<8x512xf32>
    %c1_31 = arith.constant 1 : index
    %c0_32 = arith.constant 0 : index
    %70 = vector.load %arg2[%c1_31, %c0_32] : memref<32x512xf32, #tpu.memory_space<vmem>>, vector<1x512xf32>
    %71 = vector.broadcast %70 : vector<1x512xf32> to vector<8x512xf32>
    %72 = arith.mulf %69, %71 : vector<8x512xf32>
    %c15_i32_33 = arith.constant 15 : i32
    %73 = tpu.dynamic_rotate %64 by %c15_i32_33 dim 1 : vector<8x512xf32>, i32 -> vector<8x512xf32>
    %c2_34 = arith.constant 2 : index
    %c0_35 = arith.constant 0 : index
    %74 = vector.load %arg2[%c2_34, %c0_35] : memref<32x512xf32, #tpu.memory_space<vmem>>, vector<1x512xf32>
    %75 = vector.broadcast %74 : vector<1x512xf32> to vector<8x512xf32>
    %76 = arith.mulf %73, %75 : vector<8x512xf32>
    %c1_i32_36 = arith.constant 1 : i32
    %77 = tpu.dynamic_rotate %64 by %c1_i32_36 dim 1 : vector<8x512xf32>, i32 -> vector<8x512xf32>
    %c3_37 = arith.constant 3 : index
    %c0_38 = arith.constant 0 : index
    %78 = vector.load %arg2[%c3_37, %c0_38] : memref<32x512xf32, #tpu.memory_space<vmem>>, vector<1x512xf32>
    %79 = vector.broadcast %78 : vector<1x512xf32> to vector<8x512xf32>
    %80 = arith.mulf %77, %79 : vector<8x512xf32>
    %c511_i32_39 = arith.constant 511 : i32
    %81 = tpu.dynamic_rotate %64 by %c511_i32_39 dim 1 : vector<8x512xf32>, i32 -> vector<8x512xf32>
    %c5_40 = arith.constant 5 : index
    %c0_41 = arith.constant 0 : index
    %82 = vector.load %arg2[%c5_40, %c0_41] : memref<32x512xf32, #tpu.memory_space<vmem>>, vector<1x512xf32>
    %83 = vector.broadcast %82 : vector<1x512xf32> to vector<8x512xf32>
    %84 = arith.mulf %81, %83 : vector<8x512xf32>
    %c497_i32_42 = arith.constant 497 : i32
    %85 = tpu.dynamic_rotate %64 by %c497_i32_42 dim 1 : vector<8x512xf32>, i32 -> vector<8x512xf32>
    %c6_43 = arith.constant 6 : index
    %c0_44 = arith.constant 0 : index
    %86 = vector.load %arg2[%c6_43, %c0_44] : memref<32x512xf32, #tpu.memory_space<vmem>>, vector<1x512xf32>
    %87 = vector.broadcast %86 : vector<1x512xf32> to vector<8x512xf32>
    %88 = arith.mulf %85, %87 : vector<8x512xf32>
    %c496_i32_45 = arith.constant 496 : i32
    %89 = tpu.dynamic_rotate %64 by %c496_i32_45 dim 1 : vector<8x512xf32>, i32 -> vector<8x512xf32>
    %c7_46 = arith.constant 7 : index
    %c0_47 = arith.constant 0 : index
    %90 = vector.load %arg2[%c7_46, %c0_47] : memref<32x512xf32, #tpu.memory_space<vmem>>, vector<1x512xf32>
    %91 = vector.broadcast %90 : vector<1x512xf32> to vector<8x512xf32>
    %92 = arith.mulf %89, %91 : vector<8x512xf32>
    %c495_i32_48 = arith.constant 495 : i32
    %93 = tpu.dynamic_rotate %64 by %c495_i32_48 dim 1 : vector<8x512xf32>, i32 -> vector<8x512xf32>
    %c8_49 = arith.constant 8 : index
    %c0_50 = arith.constant 0 : index
    %94 = vector.load %arg2[%c8_49, %c0_50] : memref<32x512xf32, #tpu.memory_space<vmem>>, vector<1x512xf32>
    %95 = vector.broadcast %94 : vector<1x512xf32> to vector<8x512xf32>
    %96 = arith.mulf %93, %95 : vector<8x512xf32>
    %97 = tpu.concatenate %68, %72, %76, %80, %64, %84, %88, %92, %96 in 0 : vector<8x512xf32>, vector<8x512xf32>, vector<8x512xf32>, vector<8x512xf32>, vector<8x512xf32>, vector<8x512xf32>, vector<8x512xf32>, vector<8x512xf32>, vector<8x512xf32> -> vector<72x512xf32>
    %98 = arith.index_cast %c0_i32 : i32 to index
    %c0_51 = arith.constant 0 : index
    %c0_52 = arith.constant 0 : index
    %99 = vector.load %arg9[%98, %c0_51, %c0_52] : memref<2x8x72xbf16, #tpu.memory_space<vmem>>, vector<1x8x72xbf16>
    %100 = vector.shape_cast %99 : vector<1x8x72xbf16> to vector<8x72xbf16>
    %101 = arith.truncf %97 : vector<72x512xf32> to vector<72x512xbf16>
    %cst_53 = arith.constant dense<0.000000e+00> : vector<8x512xf32>
    %102 = tpu.matmul %100, %101, %cst_53 {dimension_numbers = #tpu.dot_dimension_numbers<[1], [0], [0], [1], [0, 0, 1, 1], [], []>} : vector<8x72xbf16>, vector<72x512xbf16>, vector<8x512xf32> -> vector<8x512xf32>
    %103 = arith.index_cast %c0_i32 : i32 to index
    %c0_54 = arith.constant 0 : index
    %c0_55 = arith.constant 0 : index
    %104 = vector.load %arg10[%103, %c0_54, %c0_55] : memref<2x8x1xf32, #tpu.memory_space<vmem>>, vector<1x8x1xf32>
    %105 = vector.shape_cast %104 : vector<1x8x1xf32> to vector<8x1xf32>
    %106 = vector.broadcast %105 : vector<8x1xf32> to vector<8x512xf32>
    %107 = arith.addf %102, %106 : vector<8x512xf32>
    %108 = arith.addf %107, %42 : vector<8x512xf32>
    %c1_i32_56 = arith.constant 1 : i32
    %109 = arith.index_cast %c1_i32_56 : i32 to index
    %c0_57 = arith.constant 0 : index
    %c0_58 = arith.constant 0 : index
    %110 = vector.load %arg5[%109, %c0_57, %c0_58] : memref<2x48x8xbf16, #tpu.memory_space<vmem>>, vector<1x48x8xbf16>
    %111 = vector.shape_cast %110 : vector<1x48x8xbf16> to vector<48x8xbf16>
    %112 = arith.truncf %108 : vector<8x512xf32> to vector<8x512xbf16>
    %cst_59 = arith.constant dense<0.000000e+00> : vector<48x512xf32>
    %113 = tpu.matmul %111, %112, %cst_59 {dimension_numbers = #tpu.dot_dimension_numbers<[1], [0], [0], [1], [0, 0, 1, 1], [], []>} : vector<48x8xbf16>, vector<8x512xbf16>, vector<48x512xf32> -> vector<48x512xf32>
    %114 = arith.index_cast %c1_i32_56 : i32 to index
    %c0_60 = arith.constant 0 : index
    %c0_61 = arith.constant 0 : index
    %115 = vector.load %arg6[%114, %c0_60, %c0_61] : memref<2x48x1xf32, #tpu.memory_space<vmem>>, vector<1x48x1xf32>
    %116 = vector.shape_cast %115 : vector<1x48x1xf32> to vector<48x1xf32>
    %117 = vector.broadcast %116 : vector<48x1xf32> to vector<48x512xf32>
    %118 = arith.addf %113, %117 : vector<48x512xf32>
    %cst_62 = arith.constant 0.000000e+00 : f32
    %119 = vector.broadcast %cst_62 : f32 to vector<48x512xf32>
    %120 = arith.maximumf %118, %119 : vector<48x512xf32>
    %121 = arith.index_cast %c1_i32_56 : i32 to index
    %c0_63 = arith.constant 0 : index
    %c0_64 = arith.constant 0 : index
    %122 = vector.load %arg7[%121, %c0_63, %c0_64] : memref<2x8x48xbf16, #tpu.memory_space<vmem>>, vector<1x8x48xbf16>
    %123 = vector.shape_cast %122 : vector<1x8x48xbf16> to vector<8x48xbf16>
    %124 = arith.truncf %120 : vector<48x512xf32> to vector<48x512xbf16>
    %cst_65 = arith.constant dense<0.000000e+00> : vector<8x512xf32>
    %125 = tpu.matmul %123, %124, %cst_65 {dimension_numbers = #tpu.dot_dimension_numbers<[1], [0], [0], [1], [0, 0, 1, 1], [], []>} : vector<8x48xbf16>, vector<48x512xbf16>, vector<8x512xf32> -> vector<8x512xf32>
    %126 = arith.index_cast %c1_i32_56 : i32 to index
    %c0_66 = arith.constant 0 : index
    %c0_67 = arith.constant 0 : index
    %127 = vector.load %arg8[%126, %c0_66, %c0_67] : memref<2x8x1xf32, #tpu.memory_space<vmem>>, vector<1x8x1xf32>
    %128 = vector.shape_cast %127 : vector<1x8x1xf32> to vector<8x1xf32>
    %129 = vector.broadcast %128 : vector<8x1xf32> to vector<8x512xf32>
    %130 = arith.addf %125, %129 : vector<8x512xf32>
    %c17_i32_68 = arith.constant 17 : i32
    %131 = tpu.dynamic_rotate %130 by %c17_i32_68 dim 1 : vector<8x512xf32>, i32 -> vector<8x512xf32>
    %c0_69 = arith.constant 0 : index
    %c0_70 = arith.constant 0 : index
    %132 = vector.load %arg2[%c0_69, %c0_70] : memref<32x512xf32, #tpu.memory_space<vmem>>, vector<1x512xf32>
    %133 = vector.broadcast %132 : vector<1x512xf32> to vector<8x512xf32>
    %134 = arith.mulf %131, %133 : vector<8x512xf32>
    %c16_i32_71 = arith.constant 16 : i32
    %135 = tpu.dynamic_rotate %130 by %c16_i32_71 dim 1 : vector<8x512xf32>, i32 -> vector<8x512xf32>
    %c1_72 = arith.constant 1 : index
    %c0_73 = arith.constant 0 : index
    %136 = vector.load %arg2[%c1_72, %c0_73] : memref<32x512xf32, #tpu.memory_space<vmem>>, vector<1x512xf32>
    %137 = vector.broadcast %136 : vector<1x512xf32> to vector<8x512xf32>
    %138 = arith.mulf %135, %137 : vector<8x512xf32>
    %c15_i32_74 = arith.constant 15 : i32
    %139 = tpu.dynamic_rotate %130 by %c15_i32_74 dim 1 : vector<8x512xf32>, i32 -> vector<8x512xf32>
    %c2_75 = arith.constant 2 : index
    %c0_76 = arith.constant 0 : index
    %140 = vector.load %arg2[%c2_75, %c0_76] : memref<32x512xf32, #tpu.memory_space<vmem>>, vector<1x512xf32>
    %141 = vector.broadcast %140 : vector<1x512xf32> to vector<8x512xf32>
    %142 = arith.mulf %139, %141 : vector<8x512xf32>
    %c1_i32_77 = arith.constant 1 : i32
    %143 = tpu.dynamic_rotate %130 by %c1_i32_77 dim 1 : vector<8x512xf32>, i32 -> vector<8x512xf32>
    %c3_78 = arith.constant 3 : index
    %c0_79 = arith.constant 0 : index
    %144 = vector.load %arg2[%c3_78, %c0_79] : memref<32x512xf32, #tpu.memory_space<vmem>>, vector<1x512xf32>
    %145 = vector.broadcast %144 : vector<1x512xf32> to vector<8x512xf32>
    %146 = arith.mulf %143, %145 : vector<8x512xf32>
    %c511_i32_80 = arith.constant 511 : i32
    %147 = tpu.dynamic_rotate %130 by %c511_i32_80 dim 1 : vector<8x512xf32>, i32 -> vector<8x512xf32>
    %c5_81 = arith.constant 5 : index
    %c0_82 = arith.constant 0 : index
    %148 = vector.load %arg2[%c5_81, %c0_82] : memref<32x512xf32, #tpu.memory_space<vmem>>, vector<1x512xf32>
    %149 = vector.broadcast %148 : vector<1x512xf32> to vector<8x512xf32>
    %150 = arith.mulf %147, %149 : vector<8x512xf32>
    %c497_i32_83 = arith.constant 497 : i32
    %151 = tpu.dynamic_rotate %130 by %c497_i32_83 dim 1 : vector<8x512xf32>, i32 -> vector<8x512xf32>
    %c6_84 = arith.constant 6 : index
    %c0_85 = arith.constant 0 : index
    %152 = vector.load %arg2[%c6_84, %c0_85] : memref<32x512xf32, #tpu.memory_space<vmem>>, vector<1x512xf32>
    %153 = vector.broadcast %152 : vector<1x512xf32> to vector<8x512xf32>
    %154 = arith.mulf %151, %153 : vector<8x512xf32>
    %c496_i32_86 = arith.constant 496 : i32
    %155 = tpu.dynamic_rotate %130 by %c496_i32_86 dim 1 : vector<8x512xf32>, i32 -> vector<8x512xf32>
    %c7_87 = arith.constant 7 : index
    %c0_88 = arith.constant 0 : index
    %156 = vector.load %arg2[%c7_87, %c0_88] : memref<32x512xf32, #tpu.memory_space<vmem>>, vector<1x512xf32>
    %157 = vector.broadcast %156 : vector<1x512xf32> to vector<8x512xf32>
    %158 = arith.mulf %155, %157 : vector<8x512xf32>
    %c495_i32_89 = arith.constant 495 : i32
    %159 = tpu.dynamic_rotate %130 by %c495_i32_89 dim 1 : vector<8x512xf32>, i32 -> vector<8x512xf32>
    %c8_90 = arith.constant 8 : index
    %c0_91 = arith.constant 0 : index
    %160 = vector.load %arg2[%c8_90, %c0_91] : memref<32x512xf32, #tpu.memory_space<vmem>>, vector<1x512xf32>
    %161 = vector.broadcast %160 : vector<1x512xf32> to vector<8x512xf32>
    %162 = arith.mulf %159, %161 : vector<8x512xf32>
    %163 = tpu.concatenate %134, %138, %142, %146, %130, %150, %154, %158, %162 in 0 : vector<8x512xf32>, vector<8x512xf32>, vector<8x512xf32>, vector<8x512xf32>, vector<8x512xf32>, vector<8x512xf32>, vector<8x512xf32>, vector<8x512xf32>, vector<8x512xf32> -> vector<72x512xf32>
    %164 = arith.index_cast %c1_i32_56 : i32 to index
    %c0_92 = arith.constant 0 : index
    %c0_93 = arith.constant 0 : index
    %165 = vector.load %arg9[%164, %c0_92, %c0_93] : memref<2x8x72xbf16, #tpu.memory_space<vmem>>, vector<1x8x72xbf16>
    %166 = vector.shape_cast %165 : vector<1x8x72xbf16> to vector<8x72xbf16>
    %167 = arith.truncf %163 : vector<72x512xf32> to vector<72x512xbf16>
    %cst_94 = arith.constant dense<0.000000e+00> : vector<8x512xf32>
    %168 = tpu.matmul %166, %167, %cst_94 {dimension_numbers = #tpu.dot_dimension_numbers<[1], [0], [0], [1], [0, 0, 1, 1], [], []>} : vector<8x72xbf16>, vector<72x512xbf16>, vector<8x512xf32> -> vector<8x512xf32>
    %169 = arith.index_cast %c1_i32_56 : i32 to index
    %c0_95 = arith.constant 0 : index
    %c0_96 = arith.constant 0 : index
    %170 = vector.load %arg10[%169, %c0_95, %c0_96] : memref<2x8x1xf32, #tpu.memory_space<vmem>>, vector<1x8x1xf32>
    %171 = vector.shape_cast %170 : vector<1x8x1xf32> to vector<8x1xf32>
    %172 = vector.broadcast %171 : vector<8x1xf32> to vector<8x512xf32>
    %173 = arith.addf %168, %172 : vector<8x512xf32>
    %174 = arith.addf %173, %108 : vector<8x512xf32>
    %c2_i32 = arith.constant 2 : i32
    %c17_i32_97 = arith.constant 17 : i32
    %175 = tpu.dynamic_rotate %174 by %c17_i32_97 dim 1 : vector<8x512xf32>, i32 -> vector<8x512xf32>
    %c0_98 = arith.constant 0 : index
    %c0_99 = arith.constant 0 : index
    %176 = vector.load %arg2[%c0_98, %c0_99] : memref<32x512xf32, #tpu.memory_space<vmem>>, vector<1x512xf32>
    %177 = vector.broadcast %176 : vector<1x512xf32> to vector<8x512xf32>
    %178 = arith.mulf %175, %177 : vector<8x512xf32>
    %c16_i32_100 = arith.constant 16 : i32
    %179 = tpu.dynamic_rotate %174 by %c16_i32_100 dim 1 : vector<8x512xf32>, i32 -> vector<8x512xf32>
    %c1_101 = arith.constant 1 : index
    %c0_102 = arith.constant 0 : index
    %180 = vector.load %arg2[%c1_101, %c0_102] : memref<32x512xf32, #tpu.memory_space<vmem>>, vector<1x512xf32>
    %181 = vector.broadcast %180 : vector<1x512xf32> to vector<8x512xf32>
    %182 = arith.mulf %179, %181 : vector<8x512xf32>
    %c15_i32_103 = arith.constant 15 : i32
    %183 = tpu.dynamic_rotate %174 by %c15_i32_103 dim 1 : vector<8x512xf32>, i32 -> vector<8x512xf32>
    %c2_104 = arith.constant 2 : index
    %c0_105 = arith.constant 0 : index
    %184 = vector.load %arg2[%c2_104, %c0_105] : memref<32x512xf32, #tpu.memory_space<vmem>>, vector<1x512xf32>
    %185 = vector.broadcast %184 : vector<1x512xf32> to vector<8x512xf32>
    %186 = arith.mulf %183, %185 : vector<8x512xf32>
    %c1_i32_106 = arith.constant 1 : i32
    %187 = tpu.dynamic_rotate %174 by %c1_i32_106 dim 1 : vector<8x512xf32>, i32 -> vector<8x512xf32>
    %c3_107 = arith.constant 3 : index
    %c0_108 = arith.constant 0 : index
    %188 = vector.load %arg2[%c3_107, %c0_108] : memref<32x512xf32, #tpu.memory_space<vmem>>, vector<1x512xf32>
    %189 = vector.broadcast %188 : vector<1x512xf32> to vector<8x512xf32>
    %190 = arith.mulf %187, %189 : vector<8x512xf32>
    %c511_i32_109 = arith.constant 511 : i32
    %191 = tpu.dynamic_rotate %174 by %c511_i32_109 dim 1 : vector<8x512xf32>, i32 -> vector<8x512xf32>
    %c5_110 = arith.constant 5 : index
    %c0_111 = arith.constant 0 : index
    %192 = vector.load %arg2[%c5_110, %c0_111] : memref<32x512xf32, #tpu.memory_space<vmem>>, vector<1x512xf32>
    %193 = vector.broadcast %192 : vector<1x512xf32> to vector<8x512xf32>
    %194 = arith.mulf %191, %193 : vector<8x512xf32>
    %c497_i32_112 = arith.constant 497 : i32
    %195 = tpu.dynamic_rotate %174 by %c497_i32_112 dim 1 : vector<8x512xf32>, i32 -> vector<8x512xf32>
    %c6_113 = arith.constant 6 : index
    %c0_114 = arith.constant 0 : index
    %196 = vector.load %arg2[%c6_113, %c0_114] : memref<32x512xf32, #tpu.memory_space<vmem>>, vector<1x512xf32>
    %197 = vector.broadcast %196 : vector<1x512xf32> to vector<8x512xf32>
    %198 = arith.mulf %195, %197 : vector<8x512xf32>
    %c496_i32_115 = arith.constant 496 : i32
    %199 = tpu.dynamic_rotate %174 by %c496_i32_115 dim 1 : vector<8x512xf32>, i32 -> vector<8x512xf32>
    %c7_116 = arith.constant 7 : index
    %c0_117 = arith.constant 0 : index
    %200 = vector.load %arg2[%c7_116, %c0_117] : memref<32x512xf32, #tpu.memory_space<vmem>>, vector<1x512xf32>
    %201 = vector.broadcast %200 : vector<1x512xf32> to vector<8x512xf32>
    %202 = arith.mulf %199, %201 : vector<8x512xf32>
    %c495_i32_118 = arith.constant 495 : i32
    %203 = tpu.dynamic_rotate %174 by %c495_i32_118 dim 1 : vector<8x512xf32>, i32 -> vector<8x512xf32>
    %c8_119 = arith.constant 8 : index
    %c0_120 = arith.constant 0 : index
    %204 = vector.load %arg2[%c8_119, %c0_120] : memref<32x512xf32, #tpu.memory_space<vmem>>, vector<1x512xf32>
    %205 = vector.broadcast %204 : vector<1x512xf32> to vector<8x512xf32>
    %206 = arith.mulf %203, %205 : vector<8x512xf32>
    %207 = tpu.concatenate %178, %182, %186, %190, %174, %194, %198, %202, %206 in 0 : vector<8x512xf32>, vector<8x512xf32>, vector<8x512xf32>, vector<8x512xf32>, vector<8x512xf32>, vector<8x512xf32>, vector<8x512xf32>, vector<8x512xf32>, vector<8x512xf32> -> vector<72x512xf32>
    %c34_i32 = arith.constant 34 : i32
    %208 = tpu.dynamic_rotate %3 by %c34_i32 dim 1 : vector<8x512xf32>, i32 -> vector<8x512xf32>
    %c9 = arith.constant 9 : index
    %c0_121 = arith.constant 0 : index
    %209 = vector.load %arg2[%c9, %c0_121] : memref<32x512xf32, #tpu.memory_space<vmem>>, vector<1x512xf32>
    %210 = vector.broadcast %209 : vector<1x512xf32> to vector<8x512xf32>
    %211 = arith.mulf %208, %210 : vector<8x512xf32>
    %c33_i32 = arith.constant 33 : i32
    %212 = tpu.dynamic_rotate %3 by %c33_i32 dim 1 : vector<8x512xf32>, i32 -> vector<8x512xf32>
    %c10 = arith.constant 10 : index
    %c0_122 = arith.constant 0 : index
    %213 = vector.load %arg2[%c10, %c0_122] : memref<32x512xf32, #tpu.memory_space<vmem>>, vector<1x512xf32>
    %214 = vector.broadcast %213 : vector<1x512xf32> to vector<8x512xf32>
    %215 = arith.mulf %212, %214 : vector<8x512xf32>
    %c32_i32 = arith.constant 32 : i32
    %216 = tpu.dynamic_rotate %3 by %c32_i32 dim 1 : vector<8x512xf32>, i32 -> vector<8x512xf32>
    %c11 = arith.constant 11 : index
    %c0_123 = arith.constant 0 : index
    %217 = vector.load %arg2[%c11, %c0_123] : memref<32x512xf32, #tpu.memory_space<vmem>>, vector<1x512xf32>
    %218 = vector.broadcast %217 : vector<1x512xf32> to vector<8x512xf32>
    %219 = arith.mulf %216, %218 : vector<8x512xf32>
    %c31_i32 = arith.constant 31 : i32
    %220 = tpu.dynamic_rotate %3 by %c31_i32 dim 1 : vector<8x512xf32>, i32 -> vector<8x512xf32>
    %c12 = arith.constant 12 : index
    %c0_124 = arith.constant 0 : index
    %221 = vector.load %arg2[%c12, %c0_124] : memref<32x512xf32, #tpu.memory_space<vmem>>, vector<1x512xf32>
    %222 = vector.broadcast %221 : vector<1x512xf32> to vector<8x512xf32>
    %223 = arith.mulf %220, %222 : vector<8x512xf32>
    %c30_i32 = arith.constant 30 : i32
    %224 = tpu.dynamic_rotate %3 by %c30_i32 dim 1 : vector<8x512xf32>, i32 -> vector<8x512xf32>
    %c13 = arith.constant 13 : index
    %c0_125 = arith.constant 0 : index
    %225 = vector.load %arg2[%c13, %c0_125] : memref<32x512xf32, #tpu.memory_space<vmem>>, vector<1x512xf32>
    %226 = vector.broadcast %225 : vector<1x512xf32> to vector<8x512xf32>
    %227 = arith.mulf %224, %226 : vector<8x512xf32>
    %c18_i32 = arith.constant 18 : i32
    %228 = tpu.dynamic_rotate %3 by %c18_i32 dim 1 : vector<8x512xf32>, i32 -> vector<8x512xf32>
    %c14 = arith.constant 14 : index
    %c0_126 = arith.constant 0 : index
    %229 = vector.load %arg2[%c14, %c0_126] : memref<32x512xf32, #tpu.memory_space<vmem>>, vector<1x512xf32>
    %230 = vector.broadcast %229 : vector<1x512xf32> to vector<8x512xf32>
    %231 = arith.mulf %228, %230 : vector<8x512xf32>
    %c14_i32 = arith.constant 14 : i32
    %232 = tpu.dynamic_rotate %3 by %c14_i32 dim 1 : vector<8x512xf32>, i32 -> vector<8x512xf32>
    %c15 = arith.constant 15 : index
    %c0_127 = arith.constant 0 : index
    %233 = vector.load %arg2[%c15, %c0_127] : memref<32x512xf32, #tpu.memory_space<vmem>>, vector<1x512xf32>
    %234 = vector.broadcast %233 : vector<1x512xf32> to vector<8x512xf32>
    %235 = arith.mulf %232, %234 : vector<8x512xf32>
    %c2_i32_128 = arith.constant 2 : i32
    %236 = tpu.dynamic_rotate %3 by %c2_i32_128 dim 1 : vector<8x512xf32>, i32 -> vector<8x512xf32>
    %c16 = arith.constant 16 : index
    %c0_129 = arith.constant 0 : index
    %237 = vector.load %arg2[%c16, %c0_129] : memref<32x512xf32, #tpu.memory_space<vmem>>, vector<1x512xf32>
    %238 = vector.broadcast %237 : vector<1x512xf32> to vector<8x512xf32>
    %239 = arith.mulf %236, %238 : vector<8x512xf32>
    %c510_i32 = arith.constant 510 : i32
    %240 = tpu.dynamic_rotate %3 by %c510_i32 dim 1 : vector<8x512xf32>, i32 -> vector<8x512xf32>
    %c17 = arith.constant 17 : index
    %c0_130 = arith.constant 0 : index
    %241 = vector.load %arg2[%c17, %c0_130] : memref<32x512xf32, #tpu.memory_space<vmem>>, vector<1x512xf32>
    %242 = vector.broadcast %241 : vector<1x512xf32> to vector<8x512xf32>
    %243 = arith.mulf %240, %242 : vector<8x512xf32>
    %c498_i32 = arith.constant 498 : i32
    %244 = tpu.dynamic_rotate %3 by %c498_i32 dim 1 : vector<8x512xf32>, i32 -> vector<8x512xf32>
    %c18 = arith.constant 18 : index
    %c0_131 = arith.constant 0 : index
    %245 = vector.load %arg2[%c18, %c0_131] : memref<32x512xf32, #tpu.memory_space<vmem>>, vector<1x512xf32>
    %246 = vector.broadcast %245 : vector<1x512xf32> to vector<8x512xf32>
    %247 = arith.mulf %244, %246 : vector<8x512xf32>
    %c494_i32 = arith.constant 494 : i32
    %248 = tpu.dynamic_rotate %3 by %c494_i32 dim 1 : vector<8x512xf32>, i32 -> vector<8x512xf32>
    %c19 = arith.constant 19 : index
    %c0_132 = arith.constant 0 : index
    %249 = vector.load %arg2[%c19, %c0_132] : memref<32x512xf32, #tpu.memory_space<vmem>>, vector<1x512xf32>
    %250 = vector.broadcast %249 : vector<1x512xf32> to vector<8x512xf32>
    %251 = arith.mulf %248, %250 : vector<8x512xf32>
    %c482_i32 = arith.constant 482 : i32
    %252 = tpu.dynamic_rotate %3 by %c482_i32 dim 1 : vector<8x512xf32>, i32 -> vector<8x512xf32>
    %c20 = arith.constant 20 : index
    %c0_133 = arith.constant 0 : index
    %253 = vector.load %arg2[%c20, %c0_133] : memref<32x512xf32, #tpu.memory_space<vmem>>, vector<1x512xf32>
    %254 = vector.broadcast %253 : vector<1x512xf32> to vector<8x512xf32>
    %255 = arith.mulf %252, %254 : vector<8x512xf32>
    %c481_i32 = arith.constant 481 : i32
    %256 = tpu.dynamic_rotate %3 by %c481_i32 dim 1 : vector<8x512xf32>, i32 -> vector<8x512xf32>
    %c21 = arith.constant 21 : index
    %c0_134 = arith.constant 0 : index
    %257 = vector.load %arg2[%c21, %c0_134] : memref<32x512xf32, #tpu.memory_space<vmem>>, vector<1x512xf32>
    %258 = vector.broadcast %257 : vector<1x512xf32> to vector<8x512xf32>
    %259 = arith.mulf %256, %258 : vector<8x512xf32>
    %c480_i32 = arith.constant 480 : i32
    %260 = tpu.dynamic_rotate %3 by %c480_i32 dim 1 : vector<8x512xf32>, i32 -> vector<8x512xf32>
    %c22 = arith.constant 22 : index
    %c0_135 = arith.constant 0 : index
    %261 = vector.load %arg2[%c22, %c0_135] : memref<32x512xf32, #tpu.memory_space<vmem>>, vector<1x512xf32>
    %262 = vector.broadcast %261 : vector<1x512xf32> to vector<8x512xf32>
    %263 = arith.mulf %260, %262 : vector<8x512xf32>
    %c479_i32 = arith.constant 479 : i32
    %264 = tpu.dynamic_rotate %3 by %c479_i32 dim 1 : vector<8x512xf32>, i32 -> vector<8x512xf32>
    %c23 = arith.constant 23 : index
    %c0_136 = arith.constant 0 : index
    %265 = vector.load %arg2[%c23, %c0_136] : memref<32x512xf32, #tpu.memory_space<vmem>>, vector<1x512xf32>
    %266 = vector.broadcast %265 : vector<1x512xf32> to vector<8x512xf32>
    %267 = arith.mulf %264, %266 : vector<8x512xf32>
    %c478_i32 = arith.constant 478 : i32
    %268 = tpu.dynamic_rotate %3 by %c478_i32 dim 1 : vector<8x512xf32>, i32 -> vector<8x512xf32>
    %c24 = arith.constant 24 : index
    %c0_137 = arith.constant 0 : index
    %269 = vector.load %arg2[%c24, %c0_137] : memref<32x512xf32, #tpu.memory_space<vmem>>, vector<1x512xf32>
    %270 = vector.broadcast %269 : vector<1x512xf32> to vector<8x512xf32>
    %271 = arith.mulf %268, %270 : vector<8x512xf32>
    %272 = tpu.concatenate %211, %215, %219, %223, %227, %231, %235, %239, %243, %247, %251, %255, %259, %263, %267, %271 in 0 : vector<8x512xf32>, vector<8x512xf32>, vector<8x512xf32>, vector<8x512xf32>, vector<8x512xf32>, vector<8x512xf32>, vector<8x512xf32>, vector<8x512xf32>, vector<8x512xf32>, vector<8x512xf32>, vector<8x512xf32>, vector<8x512xf32>, vector<8x512xf32>, vector<8x512xf32>, vector<8x512xf32>, vector<8x512xf32> -> vector<128x512xf32>
    %c0_138 = arith.constant 0 : index
    %c0_139 = arith.constant 0 : index
    %273 = vector.load %arg11[%c0_138, %c0_139] : memref<16x72xbf16, #tpu.memory_space<vmem>>, vector<16x72xbf16>
    %274 = arith.truncf %207 : vector<72x512xf32> to vector<72x512xbf16>
    %cst_140 = arith.constant dense<0.000000e+00> : vector<16x512xf32>
    %275 = tpu.matmul %273, %274, %cst_140 {dimension_numbers = #tpu.dot_dimension_numbers<[1], [0], [0], [1], [0, 0, 1, 1], [], []>} : vector<16x72xbf16>, vector<72x512xbf16>, vector<16x512xf32> -> vector<16x512xf32>
    %c0_141 = arith.constant 0 : index
    %c0_142 = arith.constant 0 : index
    %276 = vector.load %arg12[%c0_141, %c0_142] : memref<16x72xbf16, #tpu.memory_space<vmem>>, vector<16x72xbf16>
    %cst_143 = arith.constant dense<0.000000e+00> : vector<16x512xf32>
    %277 = tpu.matmul %276, %37, %cst_143 {dimension_numbers = #tpu.dot_dimension_numbers<[1], [0], [0], [1], [0, 0, 1, 1], [], []>} : vector<16x72xbf16>, vector<72x512xbf16>, vector<16x512xf32> -> vector<16x512xf32>
    %278 = arith.addf %275, %277 : vector<16x512xf32>
    %c0_144 = arith.constant 0 : index
    %c0_145 = arith.constant 0 : index
    %279 = vector.load %arg13[%c0_144, %c0_145] : memref<16x128xbf16, #tpu.memory_space<vmem>>, vector<16x128xbf16>
    %280 = arith.truncf %272 : vector<128x512xf32> to vector<128x512xbf16>
    %cst_146 = arith.constant dense<0.000000e+00> : vector<16x512xf32>
    %281 = tpu.matmul %279, %280, %cst_146 {dimension_numbers = #tpu.dot_dimension_numbers<[1], [0], [0], [1], [0, 0, 1, 1], [], []>} : vector<16x128xbf16>, vector<128x512xbf16>, vector<16x512xf32> -> vector<16x512xf32>
    %282 = arith.addf %278, %281 : vector<16x512xf32>
    %c0_147 = arith.constant 0 : index
    %c0_148 = arith.constant 0 : index
    %283 = vector.load %arg14[%c0_147, %c0_148] : memref<16x1xf32, #tpu.memory_space<vmem>>, vector<16x1xf32>
    %284 = vector.broadcast %283 : vector<16x1xf32> to vector<16x512xf32>
    %285 = arith.addf %282, %284 : vector<16x512xf32>
    %286 = vector.shape_cast %285 : vector<16x512xf32> to vector<1x16x512xf32>
    %c0_149 = arith.constant 0 : index
    %c0_150 = arith.constant 0 : index
    %c0_151 = arith.constant 0 : index
    %287 = vector.load %arg15[%c0_149, %c0_150, %c0_151] : memref<1x16x512xf32, #tpu.memory_space<vmem>>, vector<1x16x512xf32>
    tpu.vector_store %arg15[%c0_149, %c0_150, %c0_151], %286 {strides = array<i32>} : memref<1x16x512xf32, #tpu.memory_space<vmem>>, vector<1x16x512xf32>,
    return
  }
  func.func @transform_0(%arg0: i32) -> (i32, i32, i32) {
    %c0_i32 = arith.constant 0 : i32
    %c0_i32_0 = arith.constant 0 : i32
    %c0_i32_1 = arith.constant 0 : i32
    return %arg0, %c0_i32, %c0_i32_0 : i32, i32, i32
  }
  func.func @transform_1(%arg0: i32) -> (i32, i32) {
    %c0_i32 = arith.constant 0 : i32
    %c0_i32_0 = arith.constant 0 : i32
    %c0_i32_1 = arith.constant 0 : i32
    return %c0_i32, %c0_i32_0 : i32, i32
  }
  func.func @transform_2(%arg0: i32) -> (i32, i32) {
    %c0_i32 = arith.constant 0 : i32
    %c0_i32_0 = arith.constant 0 : i32
    %c0_i32_1 = arith.constant 0 : i32
    return %c0_i32, %c0_i32_0 : i32, i32
  }
  func.func @transform_3(%arg0: i32) -> (i32, i32) {
    %c0_i32 = arith.constant 0 : i32
    %c0_i32_0 = arith.constant 0 : i32
    %c0_i32_1 = arith.constant 0 : i32
    return %c0_i32, %c0_i32_0 : i32, i32
  }
  func.func @transform_4(%arg0: i32) -> (i32, i32, i32) {
    %c0_i32 = arith.constant 0 : i32
    %c0_i32_0 = arith.constant 0 : i32
    %c0_i32_1 = arith.constant 0 : i32
    %c0_i32_2 = arith.constant 0 : i32
    return %c0_i32, %c0_i32_0, %c0_i32_1 : i32, i32, i32
  }
  func.func @transform_5(%arg0: i32) -> (i32, i32, i32) {
    %c0_i32 = arith.constant 0 : i32
    %c0_i32_0 = arith.constant 0 : i32
    %c0_i32_1 = arith.constant 0 : i32
    %c0_i32_2 = arith.constant 0 : i32
    return %c0_i32, %c0_i32_0, %c0_i32_1 : i32, i32, i32
  }
  func.func @transform_6(%arg0: i32) -> (i32, i32, i32) {
    %c0_i32 = arith.constant 0 : i32
    %c0_i32_0 = arith.constant 0 : i32
    %c0_i32_1 = arith.constant 0 : i32
    %c0_i32_2 = arith.constant 0 : i32
    return %c0_i32, %c0_i32_0, %c0_i32_1 : i32, i32, i32
  }
  func.func @transform_7(%arg0: i32) -> (i32, i32, i32) {
    %c0_i32 = arith.constant 0 : i32
    %c0_i32_0 = arith.constant 0 : i32
    %c0_i32_1 = arith.constant 0 : i32
    %c0_i32_2 = arith.constant 0 : i32
    return %c0_i32, %c0_i32_0, %c0_i32_1 : i32, i32, i32
  }
  func.func @transform_8(%arg0: i32) -> (i32, i32, i32) {
    %c0_i32 = arith.constant 0 : i32
    %c0_i32_0 = arith.constant 0 : i32
    %c0_i32_1 = arith.constant 0 : i32
    %c0_i32_2 = arith.constant 0 : i32
    return %c0_i32, %c0_i32_0, %c0_i32_1 : i32, i32, i32
  }
  func.func @transform_9(%arg0: i32) -> (i32, i32, i32) {
    %c0_i32 = arith.constant 0 : i32
    %c0_i32_0 = arith.constant 0 : i32
    %c0_i32_1 = arith.constant 0 : i32
    %c0_i32_2 = arith.constant 0 : i32
    return %c0_i32, %c0_i32_0, %c0_i32_1 : i32, i32, i32
  }
  func.func @transform_10(%arg0: i32) -> (i32, i32) {
    %c0_i32 = arith.constant 0 : i32
    %c0_i32_0 = arith.constant 0 : i32
    %c0_i32_1 = arith.constant 0 : i32
    return %c0_i32, %c0_i32_0 : i32, i32
  }
  func.func @transform_11(%arg0: i32) -> (i32, i32) {
    %c0_i32 = arith.constant 0 : i32
    %c0_i32_0 = arith.constant 0 : i32
    %c0_i32_1 = arith.constant 0 : i32
    return %c0_i32, %c0_i32_0 : i32, i32
  }
  func.func @transform_12(%arg0: i32) -> (i32, i32) {
    %c0_i32 = arith.constant 0 : i32
    %c0_i32_0 = arith.constant 0 : i32
    %c0_i32_1 = arith.constant 0 : i32
    return %c0_i32, %c0_i32_0 : i32, i32
  }
  func.func @transform_13(%arg0: i32) -> (i32, i32) {
    %c0_i32 = arith.constant 0 : i32
    %c0_i32_0 = arith.constant 0 : i32
    %c0_i32_1 = arith.constant 0 : i32
    return %c0_i32, %c0_i32_0 : i32, i32
  }
  func.func @transform_14(%arg0: i32) -> (i32, i32, i32) {
    %c0_i32 = arith.constant 0 : i32
    %c0_i32_0 = arith.constant 0 : i32
    %c0_i32_1 = arith.constant 0 : i32
    return %arg0, %c0_i32, %c0_i32_0 : i32, i32, i32
  }
}

</mosaic_0001>

<llo_original>
// kernel: tpu_custom_call.1
$region0: #{tpu_custom_call.1}
  #allocation0 [shape = 'u32[]', space=smem, size = 0x4, offset = 0x4, fixed_abs, tag = 'smem constant byte address 0x4 - core index']
  #allocation1 [shape = 'u32[144,128]{1,0:T(1,128)}', space=vmem, size = 0x12000, scoped, tag = 'internal scratch']
  %s0 = inlined_call_operand.hbm [shape: f32[8,128], index: 0, kind: input, shape index: {}]
  %s1 = inlined_call_operand.hbm [shape: f32[8,128], index: 1, kind: output, shape index: {}]
  %s2 = sld [smem:[#allocation0]]
  $region18: #{tpu_custom_call.1} parent=0
    _
  %s4 = ssub.s32 1, %s2
  %s5 = scalar_select 0, %s4, %s2
  $region1: #{tpu_custom_call.1} parent=0
    #allocation2 [shape = 'u8[4096]{0}', space=vmem, size = 0x1000, scoped, tag = 'input window, operand 0, single buffered']
    #allocation3 [shape = 's32[1]{0}', space=sflag, size = 0x4, scoped, tag = 'scoped memory for tpu_custom_call.1']
    #allocation4 [shape = 's32[1]{0}', space=sflag, size = 0x4, scoped, tag = 'scoped memory for tpu_custom_call.1']
    #allocation5 [shape = 'u8[4096]{0}', space=vmem, size = 0x1000, scoped, tag = 'output window, operand 0, single buffered']
    %6 = vsyncpa [#allocation3], 0
    %7 = vsyncpa [#allocation4], 0
    // Predicated region
    $region2: #{tpu_custom_call.1} parent=1 // pred_check
      _
    $region3: #{tpu_custom_call.1} parent=1 // pred_check_branch
      %9 = sbr.rel (0) target = $region5
    $region4: #{tpu_custom_call.1} parent=1 // pred_region
      %s11 = ssub.s32 128, 128
      %12 = vsyncadd [#allocation3], %s11
      %s14 = sshll.u32 [#allocation2], 4
      %s15 = int_to_ptr.vmem [resolvable:$true] %s14
      %17 = dma.hbm_to_vmem [thread:$0]  %s0, 128, %s15, [#allocation3]
    $region5: #{tpu_custom_call.1} parent=1 // pred_fallthru
      _
    // Predicated region
    $region6: #{tpu_custom_call.1} parent=1 // pred_check
      _
    $region7: #{tpu_custom_call.1} parent=1 // pred_check_branch
      %19 = sbr.rel (0) target = $region9
    $region8: #{tpu_custom_call.1} parent=1 // pred_region
      %20 = dma.done [#allocation3], 128
    $region9: #{tpu_custom_call.1} parent=1 // pred_fallthru
      _
    %v21 = vld [vmem:[#allocation2] sm:$0xff]
    %22 = vrot.lane.b32.xlu0 %v21, 1
    %v23 = vpop.permute.xlu0 %22
    %24 = vst [vmem:[#allocation5] sm:$0xff] %v23
    // Predicated region
    $region10: #{tpu_custom_call.1} parent=1 // pred_check
      _
    $region11: #{tpu_custom_call.1} parent=1 // pred_check_branch
      %26 = sbr.rel (0) target = $region13
    $region12: #{tpu_custom_call.1} parent=1 // pred_region
      %s28 = ssub.s32 128, 128
      %29 = vsyncadd [#allocation4], %s28
      %s31 = sshll.u32 [#allocation5], 4
      %s32 = int_to_ptr.vmem [resolvable:$true] %s31
      %34 = dma.vmem_to_hbm [thread:$0]  %s32, 128, %s1, [#allocation4]
    $region13: #{tpu_custom_call.1} parent=1 // pred_fallthru
      _
    // Predicated region
    $region14: #{tpu_custom_call.1} parent=1 // pred_check
      _
    $region15: #{tpu_custom_call.1} parent=1 // pred_check_branch
      %36 = sbr.rel (0) target = $region17
    $region16: #{tpu_custom_call.1} parent=1 // pred_region
      %37 = dma.done [#allocation4], 128
    $region17: #{tpu_custom_call.1} parent=1 // pred_fallthru
      _
    %38 = vsyncpa [#allocation3], 1
    %39 = vsyncpa [#allocation4], 1

// kernel: forward.1
$region0: #{forward.1}
  #allocation0 [shape = 'u32[]', space=smem, size = 0x4, offset = 0x4, fixed_abs, tag = 'smem constant byte address 0x4 - core index']
  #allocation1 [shape = 'u32[144,128]{1,0:T(1,128)}', space=vmem, size = 0x12000, scoped, tag = 'internal scratch']
  %s0 = inlined_call_operand.vmem [shape: f32[1,8,512], index: 0, kind: input, shape index: {}]
  %s1 = inlined_call_operand.hbm [shape: f32[32,512], index: 1, kind: input, shape index: {}]
  %s2 = inlined_call_operand.hbm [shape: bf16[8,72], index: 2, kind: input, shape index: {}]
  %s3 = inlined_call_operand.vmem [shape: f32[8,1], index: 3, kind: input, shape index: {}]
  %s4 = inlined_call_operand.hbm [shape: bf16[2,48,8], index: 4, kind: input, shape index: {}]
  %s5 = inlined_call_operand.vmem [shape: f32[2,48,1], index: 5, kind: input, shape index: {}]
  %s6 = inlined_call_operand.hbm [shape: bf16[2,8,48], index: 6, kind: input, shape index: {}]
  %s7 = inlined_call_operand.vmem [shape: f32[2,8,1], index: 7, kind: input, shape index: {}, may-alias: {7,9}]
  %s8 = inlined_call_operand.hbm [shape: bf16[2,8,72], index: 8, kind: input, shape index: {}]
  %s9 = inlined_call_operand.vmem [shape: f32[2,8,1], index: 9, kind: input, shape index: {}, may-alias: {7,9}]
  %s10 = inlined_call_operand.hbm [shape: bf16[16,72], index: 10, kind: input, shape index: {}]
  %s11 = inlined_call_operand.hbm [shape: bf16[16,72], index: 11, kind: input, shape index: {}]
  %s12 = inlined_call_operand.hbm [shape: bf16[16,128], index: 12, kind: input, shape index: {}]
  %s13 = inlined_call_operand.vmem [shape: f32[16,1], index: 13, kind: input, shape index: {}]
  %s14 = inlined_call_operand.vmem [shape: f32[1,16,512], index: 14, kind: output, shape index: {}]
  %s15 = sld [smem:[#allocation0]]
  $region98: #{forward.1} parent=0
    _
  %s17 = ssub.s32 1, %s15
  %s18 = scalar_select 0, %s17, %s15
  $region1: #{forward.1} parent=0
    #allocation2 [shape = 'u8[65536]{0}', space=vmem, size = 0x10000, scoped, tag = 'input window, operand 1, single buffered']
    #allocation3 [shape = 's32[1]{0}', space=sflag, size = 0x4, scoped, tag = 'scoped memory for forward.1']
    #allocation4 [shape = 'u8[2048]{0}', space=vmem, size = 0x800, scoped, tag = 'input window, operand 2, single buffered']
    #allocation5 [shape = 's32[1]{0}', space=sflag, size = 0x4, scoped, tag = 'scoped memory for forward.1']
    #allocation6 [shape = 'u8[24576]{0}', space=vmem, size = 0x6000, scoped, tag = 'input window, operand 4, single buffered']
    #allocation7 [shape = 'u8[4096]{0}', space=vmem, size = 0x1000, scoped, tag = 'input window, operand 6, single buffered']
    #allocation8 [shape = 's32[1]{0}', space=sflag, size = 0x4, scoped, tag = 'scoped memory for forward.1']
    #allocation9 [shape = 'u8[4096]{0}', space=vmem, size = 0x1000, scoped, tag = 'input window, operand 8, single buffered']
    #allocation10 [shape = 'u8[4096]{0}', space=vmem, size = 0x1000, scoped, tag = 'input window, operand 10, single buffered']
    #allocation11 [shape = 's32[1]{0}', space=sflag, size = 0x4, scoped, tag = 'scoped memory for forward.1']
    #allocation12 [shape = 'u8[4096]{0}', space=vmem, size = 0x1000, scoped, tag = 'input window, operand 11, single buffered']
    #allocation13 [shape = 'u8[4096]{0}', space=vmem, size = 0x1000, scoped, tag = 'input window, operand 12, single buffered']
    #allocation14 [shape = 's32[1]{0}', space=sflag, size = 0x4, scoped, tag = 'scoped memory for forward.1']
    %19 = vsyncpa [#allocation3], 0
    %20 = vsyncpa [#allocation5], 0
    %21 = vsyncpa [#allocation8], 0
    %22 = vsyncpa [#allocation11], 0
    %23 = vsyncpa [#allocation14], 0
    // Predicated region
    $region2: #{forward.1} parent=1 // pred_check
      _
    $region3: #{forward.1} parent=1 // pred_check_branch
      %25 = sbr.rel (0) target = $region5
    $region4: #{forward.1} parent=1 // pred_region
      _
    $region5: #{forward.1} parent=1 // pred_fallthru
      _
    // Predicated region
    $region6: #{forward.1} parent=1 // pred_check
      _
    $region7: #{forward.1} parent=1 // pred_check_branch
      %27 = sbr.rel (0) target = $region9
    $region8: #{forward.1} parent=1 // pred_region
      %s29 = ssub.s32 2048, 2048
      %30 = vsyncadd [#allocation3], %s29
      %s31 = sshll.u32 [#allocation2], 4
      %s32 = int_to_ptr.vmem [resolvable:$true] %s31
      %37 = dma.hbm_to_vmem [thread:$0]  %s1, 2048, %s32, [#allocation3], 512, 512, 32
    $region9: #{forward.1} parent=1 // pred_fallthru
      _
    // Predicated region
    $region10: #{forward.1} parent=1 // pred_check
      _
    $region11: #{forward.1} parent=1 // pred_check_branch
      %39 = sbr.rel (0) target = $region13
    $region12: #{forward.1} parent=1 // pred_region
      %s41 = ssub.s32 64, 64
      %42 = vsyncadd [#allocation5], %s41
      %s44 = sshll.u32 [#allocation4], 4
      %s45 = int_to_ptr.vmem [resolvable:$true] %s44
      %47 = dma.hbm_to_vmem [thread:$0]  %s2, 64, %s45, [#allocation5]
    $region13: #{forward.1} parent=1 // pred_fallthru
      _
    // Predicated region
    $region14: #{forward.1} parent=1 // pred_check
      _
    $region15: #{forward.1} parent=1 // pred_check_branch
      %49 = sbr.rel (0) target = $region17
    $region16: #{forward.1} parent=1 // pred_region
      _
    $region17: #{forward.1} parent=1 // pred_fallthru
      _
    // Predicated region
    $region18: #{forward.1} parent=1 // pred_check
      _
    $region19: #{forward.1} parent=1 // pred_check_branch
      %51 = sbr.rel (0) target = $region21
    $region20: #{forward.1} parent=1 // pred_region
      %s53 = ssub.s32 768, 768
      %54 = vsyncadd [#allocation5], %s53
      %s55 = sshll.u32 [#allocation6], 4
      %s56 = int_to_ptr.vmem [resolvable:$true] %s55
      %61 = dma.hbm_to_vmem [thread:$0]  %s4, 768, %s56, [#allocation5], 64, 64, 4
    $region21: #{forward.1} parent=1 // pred_fallthru
      _
    // Predicated region
    $region22: #{forward.1} parent=1 // pred_check
      _
    $region23: #{forward.1} parent=1 // pred_check_branch
      %63 = sbr.rel (0) target = $region25
    $region24: #{forward.1} parent=1 // pred_region
      _
    $region25: #{forward.1} parent=1 // pred_fallthru
      _
    // Predicated region
    $region26: #{forward.1} parent=1 // pred_check
      _
    $region27: #{forward.1} parent=1 // pred_check_branch
      %65 = sbr.rel (0) target = $region29
    $region28: #{forward.1} parent=1 // pred_region
      %s67 = ssub.s32 128, 128
      %68 = vsyncadd [#allocation8], %s67
      %s69 = sshll.u32 [#allocation7], 4
      %s70 = int_to_ptr.vmem [resolvable:$true] %s69
      %75 = dma.hbm_to_vmem [thread:$0]  %s6, 128, %s70, [#allocation8], 64, 64, 4
    $region29: #{forward.1} parent=1 // pred_fallthru
      _
    // Predicated region
    $region30: #{forward.1} parent=1 // pred_check
      _
    $region31: #{forward.1} parent=1 // pred_check_branch
      %77 = sbr.rel (0) target = $region33
    $region32: #{forward.1} parent=1 // pred_region
      _
    $region33: #{forward.1} parent=1 // pred_fallthru
      _
    // Predicated region
    $region34: #{forward.1} parent=1 // pred_check
      _
    $region35: #{forward.1} parent=1 // pred_check_branch
      %79 = sbr.rel (0) target = $region37
    $region36: #{forward.1} parent=1 // pred_region
      %s81 = ssub.s32 128, 128
      %82 = vsyncadd [#allocation8], %s81
      %s83 = sshll.u32 [#allocation9], 4
      %s84 = int_to_ptr.vmem [resolvable:$true] %s83
      %89 = dma.hbm_to_vmem [thread:$0]  %s8, 128, %s84, [#allocation8], 64, 64, 4
    $region37: #{forward.1} parent=1 // pred_fallthru
      _
    // Predicated region
    $region38: #{forward.1} parent=1 // pred_check
      _
    $region39: #{forward.1} parent=1 // pred_check_branch
      %91 = sbr.rel (0) target = $region41
    $region40: #{forward.1} parent=1 // pred_region
      _
    $region41: #{forward.1} parent=1 // pred_fallthru
      _
    // Predicated region
    $region42: #{forward.1} parent=1 // pred_check
      _
    $region43: #{forward.1} parent=1 // pred_check_branch
      %93 = sbr.rel (0) target = $region45
    $region44: #{forward.1} parent=1 // pred_region
      %s95 = ssub.s32 128, 128
      %96 = vsyncadd [#allocation11], %s95
      %s97 = sshll.u32 [#allocation10], 4
      %s98 = int_to_ptr.vmem [resolvable:$true] %s97
      %103 = dma.hbm_to_vmem [thread:$0]  %s10, 128, %s98, [#allocation11], 64, 64, 4
    $region45: #{forward.1} parent=1 // pred_fallthru
      _
    // Predicated region
    $region46: #{forward.1} parent=1 // pred_check
      _
    $region47: #{forward.1} parent=1 // pred_check_branch
      %105 = sbr.rel (0) target = $region49
    $region48: #{forward.1} parent=1 // pred_region
      %s107 = ssub.s32 128, 128
      %108 = vsyncadd [#allocation11], %s107
      %s109 = sshll.u32 [#allocation12], 4
      %s110 = int_to_ptr.vmem [resolvable:$true] %s109
      %115 = dma.hbm_to_vmem [thread:$0]  %s11, 128, %s110, [#allocation11], 64, 64, 4
    $region49: #{forward.1} parent=1 // pred_fallthru
      _
    // Predicated region
    $region50: #{forward.1} parent=1 // pred_check
      _
    $region51: #{forward.1} parent=1 // pred_check_branch
      %117 = sbr.rel (0) target = $region53
    $region52: #{forward.1} parent=1 // pred_region
      %s119 = ssub.s32 128, 128
      %120 = vsyncadd [#allocation14], %s119
      %s121 = sshll.u32 [#allocation13], 4
      %s122 = int_to_ptr.vmem [resolvable:$true] %s121
      %127 = dma.hbm_to_vmem [thread:$0]  %s12, 128, %s122, [#allocation14], 64, 64, 4
    $region53: #{forward.1} parent=1 // pred_fallthru
      _
    // Predicated region
    $region54: #{forward.1} parent=1 // pred_check
      _
    $region55: #{forward.1} parent=1 // pred_check_branch
      %129 = sbr.rel (0) target = $region57
    $region56: #{forward.1} parent=1 // pred_region
      _
    $region57: #{forward.1} parent=1 // pred_fallthru
      _
    // Predicated region
    $region58: #{forward.1} parent=1 // pred_check
      _
    $region59: #{forward.1} parent=1 // pred_check_branch
      %131 = sbr.rel (0) target = $region61
    $region60: #{forward.1} parent=1 // pred_region
      %132 = dma.done [#allocation3], 2048
    $region61: #{forward.1} parent=1 // pred_fallthru
      _
    // Predicated region
    $region62: #{forward.1} parent=1 // pred_check
      _
    $region63: #{forward.1} parent=1 // pred_check_branch
      %134 = sbr.rel (0) target = $region65
    $region64: #{forward.1} parent=1 // pred_region
      %135 = dma.done [#allocation5], 64
    $region65: #{forward.1} parent=1 // pred_fallthru
      _
    // Predicated region
    $region66: #{forward.1} parent=1 // pred_check
      _
    $region67: #{forward.1} parent=1 // pred_check_branch
      %137 = sbr.rel (0) target = $region69
    $region68: #{forward.1} parent=1 // pred_region
      %138 = dma.done [#allocation5], 768
    $region69: #{forward.1} parent=1 // pred_fallthru
      _
    // Predicated region
    $region70: #{forward.1} parent=1 // pred_check
      _
    $region71: #{forward.1} parent=1 // pred_check_branch
      %140 = sbr.rel (0) target = $region73
    $region72: #{forward.1} parent=1 // pred_region
      %141 = dma.done [#allocation8], 128
    $region73: #{forward.1} parent=1 // pred_fallthru
      _
    // Predicated region
    $region74: #{forward.1} parent=1 // pred_check
      _
    $region75: #{forward.1} parent=1 // pred_check_branch
      %143 = sbr.rel (0) target = $region77
    $region76: #{forward.1} parent=1 // pred_region
      %144 = dma.done [#allocation8], 128
    $region77: #{forward.1} parent=1 // pred_fallthru
      _
    // Predicated region
    $region78: #{forward.1} parent=1 // pred_check
      _
    $region79: #{forward.1} parent=1 // pred_check_branch
      %146 = sbr.rel (0) target = $region81
    $region80: #{forward.1} parent=1 // pred_region
      %147 = dma.done [#allocation11], 128
    $region81: #{forward.1} parent=1 // pred_fallthru
      _
    // Predicated region
    $region82: #{forward.1} parent=1 // pred_check
      _
    $region83: #{forward.1} parent=1 // pred_check_branch
      %149 = sbr.rel (0) target = $region85
    $region84: #{forward.1} parent=1 // pred_region
      %150 = dma.done [#allocation11], 128
    $region85: #{forward.1} parent=1 // pred_fallthru
      _
    // Predicated region
    $region86: #{forward.1} parent=1 // pred_check
      _
    $region87: #{forward.1} parent=1 // pred_check_branch
      %152 = sbr.rel (0) target = $region89
    $region88: #{forward.1} parent=1 // pred_region
      %153 = dma.done [#allocation14], 128
    $region89: #{forward.1} parent=1 // pred_fallthru
      _
    %v155 = vld [vmem:[%s0] sm:$0xff]
    %v156 = vld [vmem:[%s0 + $0x8] sm:$0xff]
    %v157 = vld [vmem:[%s0 + $0x10] sm:$0xff]
    %v158 = vld [vmem:[%s0 + $0x18] sm:$0xff]
    %v159 = vsub.f32 %v155, 0.5
    %v160 = vsub.f32 %v156, 0.5
    %v161 = vsub.f32 %v157, 0.5
    %v162 = vsub.f32 %v158, 0.5
    %163 = vrot.lane.b32.xlu0 %v159, 17
    %v164 = vpop.permute.xlu0 %163
    %165 = vrot.lane.b32.xlu0 %v160, 17
    %v166 = vpop.permute.xlu0 %165
    %167 = vrot.lane.b32.xlu0 %v161, 17
    %v168 = vpop.permute.xlu0 %167
    %169 = vrot.lane.b32.xlu0 %v162, 17
    %v170 = vpop.permute.xlu0 %169
    %v171 = vlaneseq
    %v172 = vand.u32 %v171, 127
    %vm173 = vcmp.lt.s32.totalorder %v172, 17
    %v174 = vsel %vm173, %v168, %v170
    %v175 = vsel %vm173, %v166, %v168
    %v176 = vsel %vm173, %v164, %v166
    %v177 = vsel %vm173, %v170, %v164
    %v178 = vld [vmem:[#allocation2] ss:$8 sm:$0xf]
    %v180 = vlaneseq
    %v181 = vshrl.u32 %v180, 7
    %v182 = vsub.s32 0, %v181
    %v183 = vrot.slane %v178, %v182
    %v184 = vlaneseq
    %v185 = vshrl.u32 %v184, 7
    %v186 = vsub.s32 1, %v185
    %v187 = vrot.slane %v178, %v186
    %v188 = vlaneseq
    %v189 = vshrl.u32 %v188, 7
    %v190 = vsub.s32 2, %v189
    %v191 = vrot.slane %v178, %v190
    %v192 = vlaneseq
    %v193 = vshrl.u32 %v192, 7
    %v194 = vsub.s32 3, %v193
    %v195 = vrot.slane %v178, %v194
    %v200 = vmul.f32 %v177, %v183
    %v201 = vmul.f32 %v176, %v187
    %v202 = vmul.f32 %v175, %v191
    %v203 = vmul.f32 %v174, %v195
    %204 = vrot.lane.b32.xlu0 %v159, 16
    %v205 = vpop.permute.xlu0 %204
    %206 = vrot.lane.b32.xlu0 %v160, 16
    %v207 = vpop.permute.xlu0 %206
    %208 = vrot.lane.b32.xlu0 %v161, 16
    %v209 = vpop.permute.xlu0 %208
    %210 = vrot.lane.b32.xlu0 %v162, 16
    %v211 = vpop.permute.xlu0 %210
    %vm212 = vcmp.lt.s32.totalorder %v172, 16
    %v213 = vsel %vm212, %v209, %v211
    %v214 = vsel %vm212, %v207, %v209
    %v215 = vsel %vm212, %v205, %v207
    %v216 = vsel %vm212, %v211, %v205
    %s217 = scalar_lea.vmem [#allocation2], 1
    %v218 = vld [vmem:[%s217] ss:$8 sm:$0xf]
    %v220 = vlaneseq
    %v221 = vshrl.u32 %v220, 7
    %v222 = vsub.s32 0, %v221
    %v223 = vrot.slane %v218, %v222
    %v224 = vlaneseq
    %v225 = vshrl.u32 %v224, 7
    %v226 = vsub.s32 1, %v225
    %v227 = vrot.slane %v218, %v226
    %v228 = vlaneseq
    %v229 = vshrl.u32 %v228, 7
    %v230 = vsub.s32 2, %v229
    %v231 = vrot.slane %v218, %v230
    %v232 = vlaneseq
    %v233 = vshrl.u32 %v232, 7
    %v234 = vsub.s32 3, %v233
    %v235 = vrot.slane %v218, %v234
    %v240 = vmul.f32 %v216, %v223
    %v241 = vmul.f32 %v215, %v227
    %v242 = vmul.f32 %v214, %v231
    %v243 = vmul.f32 %v213, %v235
    %244 = vrot.lane.b32.xlu0 %v159, 15
    %v245 = vpop.permute.xlu0 %244
    %246 = vrot.lane.b32.xlu0 %v160, 15
    %v247 = vpop.permute.xlu0 %246
    %248 = vrot.lane.b32.xlu0 %v161, 15
    %v249 = vpop.permute.xlu0 %248
    %250 = vrot.lane.b32.xlu0 %v162, 15
    %v251 = vpop.permute.xlu0 %250
    %vm252 = vcmp.lt.s32.totalorder %v172, 15
    %v253 = vsel %vm252, %v249, %v251
    %v254 = vsel %vm252, %v247, %v249
    %v255 = vsel %vm252, %v245, %v247
    %v256 = vsel %vm252, %v251, %v245
    %s257 = scalar_lea.vmem [#allocation2], 2
    %v258 = vld [vmem:[%s257] ss:$8 sm:$0xf]
    %v260 = vlaneseq
    %v261 = vshrl.u32 %v260, 7
    %v262 = vsub.s32 0, %v261
    %v263 = vrot.slane %v258, %v262
    %v264 = vlaneseq
    %v265 = vshrl.u32 %v264, 7
    %v266 = vsub.s32 1, %v265
    %v267 = vrot.slane %v258, %v266
    %v268 = vlaneseq
    %v269 = vshrl.u32 %v268, 7
    %v270 = vsub.s32 2, %v269
    %v271 = vrot.slane %v258, %v270
    %v272 = vlaneseq
    %v273 = vshrl.u32 %v272, 7
    %v274 = vsub.s32 3, %v273
    %v275 = vrot.slane %v258, %v274
    %v280 = vmul.f32 %v256, %v263
    %v281 = vmul.f32 %v255, %v267
    %v282 = vmul.f32 %v254, %v271
    %v283 = vmul.f32 %v253, %v275
    %284 = vrot.lane.b32.xlu0 %v159, 1
    %v285 = vpop.permute.xlu0 %284
    %286 = vrot.lane.b32.xlu0 %v160, 1
    %v287 = vpop.permute.xlu0 %286
    %288 = vrot.lane.b32.xlu0 %v161, 1
    %v289 = vpop.permute.xlu0 %288
    %290 = vrot.lane.b32.xlu0 %v162, 1
    %v291 = vpop.permute.xlu0 %290
    %vm292 = vcmp.lt.s32.totalorder %v172, 1
    %v293 = vsel %vm292, %v289, %v291
    %v294 = vsel %vm292, %v287, %v289
    %v295 = vsel %vm292, %v285, %v287
    %v296 = vsel %vm292, %v291, %v285
    %s297 = scalar_lea.vmem [#allocation2], 3
    %v298 = vld [vmem:[%s297] ss:$8 sm:$0xf]
    %v300 = vlaneseq
    %v301 = vshrl.u32 %v300, 7
    %v302 = vsub.s32 0, %v301
    %v303 = vrot.slane %v298, %v302
    %v304 = vlaneseq
    %v305 = vshrl.u32 %v304, 7
    %v306 = vsub.s32 1, %v305
    %v307 = vrot.slane %v298, %v306
    %v308 = vlaneseq
    %v309 = vshrl.u32 %v308, 7
    %v310 = vsub.s32 2, %v309
    %v311 = vrot.slane %v298, %v310
    %v312 = vlaneseq
    %v313 = vshrl.u32 %v312, 7
    %v314 = vsub.s32 3, %v313
    %v315 = vrot.slane %v298, %v314
    %v320 = vmul.f32 %v296, %v303
    %v321 = vmul.f32 %v295, %v307
    %v322 = vmul.f32 %v294, %v311
    %v323 = vmul.f32 %v293, %v315
    %324 = vrot.lane.b32.xlu0 %v159, 127
    %v325 = vpop.permute.xlu0 %324
    %326 = vrot.lane.b32.xlu0 %v160, 127
    %v327 = vpop.permute.xlu0 %326
    %328 = vrot.lane.b32.xlu0 %v161, 127
    %v329 = vpop.permute.xlu0 %328
    %330 = vrot.lane.b32.xlu0 %v162, 127
    %v331 = vpop.permute.xlu0 %330
    %vm332 = vcmp.lt.s32.totalorder %v172, 127
    %v333 = vsel %vm332, %v329, %v331
    %v334 = vsel %vm332, %v327, %v329
    %v335 = vsel %vm332, %v325, %v327
    %v336 = vsel %vm332, %v331, %v325
    %s337 = scalar_lea.vmem [#allocation2], 5
    %v338 = vld [vmem:[%s337] ss:$8 sm:$0xf]
    %v340 = vlaneseq
    %v341 = vshrl.u32 %v340, 7
    %v342 = vsub.s32 0, %v341
    %v343 = vrot.slane %v338, %v342
    %v344 = vlaneseq
    %v345 = vshrl.u32 %v344, 7
    %v346 = vsub.s32 1, %v345
    %v347 = vrot.slane %v338, %v346
    %v348 = vlaneseq
    %v349 = vshrl.u32 %v348, 7
    %v350 = vsub.s32 2, %v349
    %v351 = vrot.slane %v338, %v350
    %v352 = vlaneseq
    %v353 = vshrl.u32 %v352, 7
    %v354 = vsub.s32 3, %v353
    %v355 = vrot.slane %v338, %v354
    %v360 = vmul.f32 %v335, %v343
    %v361 = vmul.f32 %v334, %v347
    %v362 = vmul.f32 %v333, %v351
    %v363 = vmul.f32 %v336, %v355
    %364 = vrot.lane.b32.xlu0 %v159, 113
    %v365 = vpop.permute.xlu0 %364
    %366 = vrot.lane.b32.xlu0 %v160, 113
    %v367 = vpop.permute.xlu0 %366
    %368 = vrot.lane.b32.xlu0 %v161, 113
    %v369 = vpop.permute.xlu0 %368
    %370 = vrot.lane.b32.xlu0 %v162, 113
    %v371 = vpop.permute.xlu0 %370
    %vm372 = vcmp.lt.s32.totalorder %v172, 113
    %v373 = vsel %vm372, %v369, %v371
    %v374 = vsel %vm372, %v367, %v369
    %v375 = vsel %vm372, %v365, %v367
    %v376 = vsel %vm372, %v371, %v365
    %s377 = scalar_lea.vmem [#allocation2], 6
    %v378 = vld [vmem:[%s377] ss:$8 sm:$0xf]
    %v380 = vlaneseq
    %v381 = vshrl.u32 %v380, 7
    %v382 = vsub.s32 0, %v381
    %v383 = vrot.slane %v378, %v382
    %v384 = vlaneseq
    %v385 = vshrl.u32 %v384, 7
    %v386 = vsub.s32 1, %v385
    %v387 = vrot.slane %v378, %v386
    %v388 = vlaneseq
    %v389 = vshrl.u32 %v388, 7
    %v390 = vsub.s32 2, %v389
    %v391 = vrot.slane %v378, %v390
    %v392 = vlaneseq
    %v393 = vshrl.u32 %v392, 7
    %v394 = vsub.s32 3, %v393
    %v395 = vrot.slane %v378, %v394
    %v400 = vmul.f32 %v375, %v383
    %v401 = vmul.f32 %v374, %v387
    %v402 = vmul.f32 %v373, %v391
    %v403 = vmul.f32 %v376, %v395
    %404 = vrot.lane.b32.xlu0 %v159, 112
    %v405 = vpop.permute.xlu0 %404
    %406 = vrot.lane.b32.xlu0 %v160, 112
    %v407 = vpop.permute.xlu0 %406
    %408 = vrot.lane.b32.xlu0 %v161, 112
    %v409 = vpop.permute.xlu0 %408
    %410 = vrot.lane.b32.xlu0 %v162, 112
    %v411 = vpop.permute.xlu0 %410
    %vm412 = vcmp.lt.s32.totalorder %v172, 112
    %v413 = vsel %vm412, %v409, %v411
    %v414 = vsel %vm412, %v407, %v409
    %v415 = vsel %vm412, %v405, %v407
    %v416 = vsel %vm412, %v411, %v405
    %s417 = scalar_lea.vmem [#allocation2], 7
    %v418 = vld [vmem:[%s417] ss:$8 sm:$0xf]
    %v420 = vlaneseq
    %v421 = vshrl.u32 %v420, 7
    %v422 = vsub.s32 0, %v421
    %v423 = vrot.slane %v418, %v422
    %v424 = vlaneseq
    %v425 = vshrl.u32 %v424, 7
    %v426 = vsub.s32 1, %v425
    %v427 = vrot.slane %v418, %v426
    %v428 = vlaneseq
    %v429 = vshrl.u32 %v428, 7
    %v430 = vsub.s32 2, %v429
    %v431 = vrot.slane %v418, %v430
    %v432 = vlaneseq
    %v433 = vshrl.u32 %v432, 7
    %v434 = vsub.s32 3, %v433
    %v435 = vrot.slane %v418, %v434
    %v440 = vmul.f32 %v415, %v423
    %v441 = vmul.f32 %v414, %v427
    %v442 = vmul.f32 %v413, %v431
    %v443 = vmul.f32 %v416, %v435
    %444 = vrot.lane.b32.xlu0 %v159, 111
    %v445 = vpop.permute.xlu0 %444
    %446 = vrot.lane.b32.xlu0 %v160, 111
    %v447 = vpop.permute.xlu0 %446
    %448 = vrot.lane.b32.xlu0 %v161, 111
    %v449 = vpop.permute.xlu0 %448
    %450 = vrot.lane.b32.xlu0 %v162, 111
    %v451 = vpop.permute.xlu0 %450
    %vm452 = vcmp.lt.s32.totalorder %v172, 111
    %v453 = vsel %vm452, %v449, %v451
    %v454 = vsel %vm452, %v447, %v449
    %v455 = vsel %vm452, %v445, %v447
    %v456 = vsel %vm452, %v451, %v445
    %s457 = scalar_lea.vmem [#allocation2], 32
    %v458 = vld [vmem:[%s457] ss:$8 sm:$0xf]
    %v460 = vlaneseq
    %v461 = vshrl.u32 %v460, 7
    %v462 = vsub.s32 0, %v461
    %v463 = vrot.slane %v458, %v462
    %v464 = vlaneseq
    %v465 = vshrl.u32 %v464, 7
    %v466 = vsub.s32 1, %v465
    %v467 = vrot.slane %v458, %v466
    %v468 = vlaneseq
    %v469 = vshrl.u32 %v468, 7
    %v470 = vsub.s32 2, %v469
    %v471 = vrot.slane %v458, %v470
    %v472 = vlaneseq
    %v473 = vshrl.u32 %v472, 7
    %v474 = vsub.s32 3, %v473
    %v475 = vrot.slane %v458, %v474
    %v480 = vmul.f32 %v455, %v463
    %v481 = vmul.f32 %v454, %v467
    %v482 = vmul.f32 %v453, %v471
    %v483 = vmul.f32 %v456, %v475
    %v484 = vpack.c.bf16 %v240, %v200
    %v485 = vpack.c.bf16 %v241, %v201
    %v486 = vpack.c.bf16 %v242, %v202
    %v487 = vpack.c.bf16 %v243, %v203
    %v488 = vpack.c.bf16 %v320, %v280
    %v489 = vpack.c.bf16 %v321, %v281
    %v490 = vpack.c.bf16 %v322, %v282
    %v491 = vpack.c.bf16 %v323, %v283
    %v492 = vpack.c.bf16 %v360, %v159
    %v493 = vpack.c.bf16 %v361, %v160
    %v494 = vpack.c.bf16 %v362, %v161
    %v495 = vpack.c.bf16 %v363, %v162
    %v496 = vpack.c.bf16 %v440, %v400
    %v497 = vpack.c.bf16 %v441, %v401
    %v498 = vpack.c.bf16 %v442, %v402
    %v499 = vpack.c.bf16 %v443, %v403
    %v500 = vpack.c.bf16 %v480, %v480
    %v501 = vpack.c.bf16 %v481, %v481
    %v502 = vpack.c.bf16 %v482, %v482
    %v503 = vpack.c.bf16 %v483, %v483
    %v504 = vld [vmem:[#allocation4] sm:$0xf]
    %v505 = vld [vmem:[%s3] sm:$0xff]
    %507 = vset.pattern.permute.xlu0 0
    %508 = vperm.xlu0 %507, %v505
    %v509 = vpop.permute.xlu0 %508
    %vm511 = vcmask 588800
    %v513 = vsel %vm511, %v504, 0
    %vm515 = vcmask 1043456
    %v517 = vsel %vm515, %v500, 0
    %v520 = vsel %vm515, %v501, 0
    %v523 = vsel %vm515, %v502, 0
    %v526 = vsel %vm515, %v503, 0
    %528 = vmatprep.subr.bf16.mxu0 0
    %529 = vmatpush1.bf16.msra.mxu0 0
    %530 = vmatprep.subr.bf16.mxu0 0
    %531 = vmatpush1.bf16.msra.mxu0 0
    %532 = vmatprep.subr.bf16.mxu0 0
    %533 = vmatpush1.bf16.msra.mxu0 0
    %534 = vmatprep.subr.bf16.mxu0 %v520
    %535 = vmatpush1.bf16.msra.mxu0 %v517
    %536 = vmatprep.subr.bf16.mxu0 %v497
    %537 = vmatpush1.bf16.msra.mxu0 %v496
    %538 = vmatprep.subr.bf16.mxu0 %v493
    %539 = vmatpush1.bf16.msra.mxu0 %v492
    %540 = vmatprep.subr.bf16.mxu0 %v489
    %541 = vmatpush1.bf16.msra.mxu0 %v488
    %542 = vmatprep.subr.bf16.mxu0 %v485
    %543 = vmatpush1.bf16.msra.mxu0 %v484
    %544 = vmatprep.subr.bf16.mxu0 0
    %545 = vmatpush2.bf16.msra.mxu0 0
    %546 = vmatprep.subr.bf16.mxu0 0
    %547 = vmatpush2.bf16.msra.mxu0 0
    %548 = vmatprep.subr.bf16.mxu0 0
    %549 = vmatpush2.bf16.msra.mxu0 0
    %550 = vmatprep.subr.bf16.mxu0 0
    %551 = vmatpush2.bf16.msra.mxu0 0
    %552 = vmatprep.subr.bf16.mxu0 0
    %553 = vmatpush2.bf16.msra.mxu0 0
    %554 = vmatprep.subr.bf16.mxu0 0
    %555 = vmatpush2.bf16.msra.mxu0 0
    %556 = vmatprep.subr.bf16.mxu0 0
    %557 = vmatpush2.bf16.msra.mxu0 0
    %558 = vmatprep.subr.bf16.mxu0 0
    %559 = vmatpush2.bf16.msra.mxu0 0
    %560 = vmatprep.mubr.bf16.mxu0 0
    %561 = vmatmul.mubr.bf16.gmra.mxu0 %v513
    %v562 = vpop.f32.mrf.mxu0
    %v563 = vadd.f32 %v509, %v562
    %v564 = vpop.f32.mrf.mxu0
    %v565 = vadd.f32 %v509, %v564
    %v566 = vpop.f32.mrf.mxu0
    %v567 = vpop.f32.mrf.mxu0
    %568 = vdwg.mxu0
    %569 = vmatprep.subr.bf16.mxu0 0
    %570 = vmatpush1.bf16.msra.mxu0 0
    %571 = vmatprep.subr.bf16.mxu0 0
    %572 = vmatpush1.bf16.msra.mxu0 0
    %573 = vmatprep.subr.bf16.mxu0 0
    %574 = vmatpush1.bf16.msra.mxu0 0
    %575 = vmatprep.subr.bf16.mxu0 %v526
    %576 = vmatpush1.bf16.msra.mxu0 %v523
    %577 = vmatprep.subr.bf16.mxu0 %v499
    %578 = vmatpush1.bf16.msra.mxu0 %v498
    %579 = vmatprep.subr.bf16.mxu0 %v495
    %580 = vmatpush1.bf16.msra.mxu0 %v494
    %581 = vmatprep.subr.bf16.mxu0 %v491
    %582 = vmatpush1.bf16.msra.mxu0 %v490
    %583 = vmatprep.subr.bf16.mxu0 %v487
    %584 = vmatpush1.bf16.msra.mxu0 %v486
    %585 = vmatprep.subr.bf16.mxu0 0
    %586 = vmatpush2.bf16.msra.mxu0 0
    %587 = vmatprep.subr.bf16.mxu0 0
    %588 = vmatpush2.bf16.msra.mxu0 0
    %589 = vmatprep.subr.bf16.mxu0 0
    %590 = vmatpush2.bf16.msra.mxu0 0
    %591 = vmatprep.subr.bf16.mxu0 0
    %592 = vmatpush2.bf16.msra.mxu0 0
    %593 = vmatprep.subr.bf16.mxu0 0
    %594 = vmatpush2.bf16.msra.mxu0 0
    %595 = vmatprep.subr.bf16.mxu0 0
    %596 = vmatpush2.bf16.msra.mxu0 0
    %597 = vmatprep.subr.bf16.mxu0 0
    %598 = vmatpush2.bf16.msra.mxu0 0
    %599 = vmatprep.subr.bf16.mxu0 0
    %600 = vmatpush2.bf16.msra.mxu0 0
    %601 = vmatprep.mubr.bf16.mxu0 0
    %602 = vmatmul.mubr.bf16.gmra.mxu0 %v513
    %v603 = vpop.f32.mrf.mxu0
    %v604 = vadd.f32 %v509, %v603
    %v605 = vpop.f32.mrf.mxu0
    %v606 = vadd.f32 %v509, %v605
    %v607 = vpop.f32.mrf.mxu0
    %v608 = vpop.f32.mrf.mxu0
    %609 = vdwg.mxu0
    %v610 = vld [vmem:[#allocation6] sm:$0xf]
    %v611 = vld [vmem:[#allocation6 + $0x4] sm:$0xf]
    %v612 = vld [vmem:[#allocation6 + $0x8] sm:$0xf]
    %v613 = vld [vmem:[#allocation6 + $0xc] sm:$0xf]
    %v614 = vld [vmem:[#allocation6 + $0x10] sm:$0xf]
    %v615 = vld [vmem:[#allocation6 + $0x14] sm:$0xf]
    %v616 = vpack.c.bf16 %v563, %v563
    %v617 = vpack.c.bf16 %v565, %v565
    %v618 = vpack.c.bf16 %v604, %v604
    %v619 = vpack.c.bf16 %v606, %v606
    %v620 = vld [vmem:[%s5] sm:$0xff]
    %v621 = vld [vmem:[%s5 + $0x8] sm:$0xff]
    %v622 = vld [vmem:[%s5 + $0x10] sm:$0xff]
    %v623 = vld [vmem:[%s5 + $0x18] sm:$0xff]
    %v624 = vld [vmem:[%s5 + $0x20] sm:$0xff]
    %v625 = vld [vmem:[%s5 + $0x28] sm:$0xff]
    %627 = vset.pattern.permute.xlu0 0
    %628 = vperm.xlu0 %627, %v620
    %v629 = vpop.permute.xlu0 %628
    %632 = vset.pattern.permute.xlu0 0
    %633 = vperm.xlu0 %632, %v621
    %v634 = vpop.permute.xlu0 %633
    %637 = vset.pattern.permute.xlu0 0
    %638 = vperm.xlu0 %637, %v622
    %v639 = vpop.permute.xlu0 %638
    %642 = vset.pattern.permute.xlu0 0
    %643 = vperm.xlu0 %642, %v623
    %v644 = vpop.permute.xlu0 %643
    %647 = vset.pattern.permute.xlu0 0
    %648 = vperm.xlu0 %647, %v624
    %v649 = vpop.permute.xlu0 %648
    %652 = vset.pattern.permute.xlu0 0
    %653 = vperm.xlu0 %652, %v625
    %v654 = vpop.permute.xlu0 %653
    %v662 = vunpack.c.l.b16 %v610
    %v663 = vunpack.c.l.b16 %v611
    %v664 = vunpack.c.l.b16 %v612
    %v665 = vunpack.c.l.b16 %v613
    %v666 = vunpack.c.l.b16 %v614
    %v667 = vunpack.c.l.b16 %v615
    %v668 = vpack.c.b16 %v663, %v662
    %v669 = vpack.c.b16 %v665, %v664
    %v670 = vpack.c.b16 %v667, %v666
    %vm671 = vcmask 64512
    %v673 = vsel %vm671, %v668, 0
    %v676 = vsel %vm671, %v669, 0
    %v679 = vsel %vm671, %v670, 0
    %v682 = vsel %vm515, %v616, 0
    %v685 = vsel %vm515, %v617, 0
    %v688 = vsel %vm515, %v618, 0
    %v691 = vsel %vm515, %v619, 0
    %693 = vmatprep.subr.bf16.mxu0 0
    %694 = vmatpush1.bf16.msra.mxu0 0
    %695 = vmatprep.subr.bf16.mxu0 0
    %696 = vmatpush1.bf16.msra.mxu0 0
    %697 = vmatprep.subr.bf16.mxu0 0
    %698 = vmatpush1.bf16.msra.mxu0 0
    %699 = vmatprep.subr.bf16.mxu0 0
    %700 = vmatpush1.bf16.msra.mxu0 0
    %701 = vmatprep.subr.bf16.mxu0 0
    %702 = vmatpush1.bf16.msra.mxu0 0
    %703 = vmatprep.subr.bf16.mxu0 0
    %704 = vmatpush1.bf16.msra.mxu0 0
    %705 = vmatprep.subr.bf16.mxu0 0
    %706 = vmatpush1.bf16.msra.mxu0 0
    %707 = vmatprep.subr.bf16.mxu0 %v685
    %708 = vmatpush1.bf16.msra.mxu0 %v682
    %709 = vmatprep.subr.bf16.mxu0 0
    %710 = vmatpush2.bf16.msra.mxu0 0
    %711 = vmatprep.subr.bf16.mxu0 0
    %712 = vmatpush2.bf16.msra.mxu0 0
    %713 = vmatprep.subr.bf16.mxu0 0
    %714 = vmatpush2.bf16.msra.mxu0 0
    %715 = vmatprep.subr.bf16.mxu0 0
    %716 = vmatpush2.bf16.msra.mxu0 0
    %717 = vmatprep.subr.bf16.mxu0 0
    %718 = vmatpush2.bf16.msra.mxu0 0
    %719 = vmatprep.subr.bf16.mxu0 0
    %720 = vmatpush2.bf16.msra.mxu0 0
    %721 = vmatprep.subr.bf16.mxu0 0
    %722 = vmatpush2.bf16.msra.mxu0 0
    %723 = vmatprep.subr.bf16.mxu0 0
    %724 = vmatpush2.bf16.msra.mxu0 0
    %725 = vmatprep.mubr.bf16.mxu0 0
    %726 = vmatmul.mubr.bf16.gmra.mxu0 %v673
    %v727 = vpop.f32.mrf.mxu0
    %v728 = vadd.f32 %v629, %v727
    %v729 = vpop.f32.mrf.mxu0
    %v730 = vadd.f32 %v629, %v729
    %v731 = vpop.f32.mrf.mxu0
    %v732 = vadd.f32 %v634, %v731
    %v733 = vpop.f32.mrf.mxu0
    %v734 = vadd.f32 %v634, %v733
    %735 = vmatprep.mubr.bf16.mxu0 0
    %736 = vmatmul.mubr.bf16.gmra.mxu0 %v676
    %v737 = vpop.f32.mrf.mxu0
    %v738 = vadd.f32 %v639, %v737
    %v739 = vpop.f32.mrf.mxu0
    %v740 = vadd.f32 %v639, %v739
    %v741 = vpop.f32.mrf.mxu0
    %v742 = vadd.f32 %v644, %v741
    %v743 = vpop.f32.mrf.mxu0
    %v744 = vadd.f32 %v644, %v743
    %745 = vmatprep.mubr.bf16.mxu0 0
    %746 = vmatmul.mubr.bf16.gmra.mxu0 %v679
    %v747 = vpop.f32.mrf.mxu0
    %v748 = vadd.f32 %v649, %v747
    %v749 = vpop.f32.mrf.mxu0
    %v750 = vadd.f32 %v649, %v749
    %v751 = vpop.f32.mrf.mxu0
    %v752 = vadd.f32 %v654, %v751
    %v753 = vpop.f32.mrf.mxu0
    %v754 = vadd.f32 %v654, %v753
    %755 = vdwg.mxu0
    %756 = vmatprep.subr.bf16.mxu0 0
    %757 = vmatpush1.bf16.msra.mxu0 0
    %758 = vmatprep.subr.bf16.mxu0 0
    %759 = vmatpush1.bf16.msra.mxu0 0
    %760 = vmatprep.subr.bf16.mxu0 0
    %761 = vmatpush1.bf16.msra.mxu0 0
    %762 = vmatprep.subr.bf16.mxu0 0
    %763 = vmatpush1.bf16.msra.mxu0 0
    %764 = vmatprep.subr.bf16.mxu0 0
    %765 = vmatpush1.bf16.msra.mxu0 0
    %766 = vmatprep.subr.bf16.mxu0 0
    %767 = vmatpush1.bf16.msra.mxu0 0
    %768 = vmatprep.subr.bf16.mxu0 0
    %769 = vmatpush1.bf16.msra.mxu0 0
    %770 = vmatprep.subr.bf16.mxu0 %v691
    %771 = vmatpush1.bf16.msra.mxu0 %v688
    %772 = vmatprep.subr.bf16.mxu0 0
    %773 = vmatpush2.bf16.msra.mxu0 0
    %774 = vmatprep.subr.bf16.mxu0 0
    %775 = vmatpush2.bf16.msra.mxu0 0
    %776 = vmatprep.subr.bf16.mxu0 0
    %777 = vmatpush2.bf16.msra.mxu0 0
    %778 = vmatprep.subr.bf16.mxu0 0
    %779 = vmatpush2.bf16.msra.mxu0 0
    %780 = vmatprep.subr.bf16.mxu0 0
    %781 = vmatpush2.bf16.msra.mxu0 0
    %782 = vmatprep.subr.bf16.mxu0 0
    %783 = vmatpush2.bf16.msra.mxu0 0
    %784 = vmatprep.subr.bf16.mxu0 0
    %785 = vmatpush2.bf16.msra.mxu0 0
    %786 = vmatprep.subr.bf16.mxu0 0
    %787 = vmatpush2.bf16.msra.mxu0 0
    %788 = vmatprep.mubr.bf16.mxu0 0
    %789 = vmatmul.mubr.bf16.gmra.mxu0 %v673
    %v790 = vpop.f32.mrf.mxu0
    %v791 = vadd.f32 %v629, %v790
    %v792 = vpop.f32.mrf.mxu0
    %v793 = vadd.f32 %v629, %v792
    %v794 = vpop.f32.mrf.mxu0
    %v795 = vadd.f32 %v634, %v794
    %v796 = vpop.f32.mrf.mxu0
    %v797 = vadd.f32 %v634, %v796
    %798 = vmatprep.mubr.bf16.mxu0 0
    %799 = vmatmul.mubr.bf16.gmra.mxu0 %v676
    %v800 = vpop.f32.mrf.mxu0
    %v801 = vadd.f32 %v639, %v800
    %v802 = vpop.f32.mrf.mxu0
    %v803 = vadd.f32 %v639, %v802
    %v804 = vpop.f32.mrf.mxu0
    %v805 = vadd.f32 %v644, %v804
    %v806 = vpop.f32.mrf.mxu0
    %v807 = vadd.f32 %v644, %v806
    %808 = vmatprep.mubr.bf16.mxu0 0
    %809 = vmatmul.mubr.bf16.gmra.mxu0 %v679
    %v810 = vpop.f32.mrf.mxu0
    %v811 = vadd.f32 %v649, %v810
    %v812 = vpop.f32.mrf.mxu0
    %v813 = vadd.f32 %v649, %v812
    %v814 = vpop.f32.mrf.mxu0
    %v815 = vadd.f32 %v654, %v814
    %v816 = vpop.f32.mrf.mxu0
    %v817 = vadd.f32 %v654, %v816
    %818 = vdwg.mxu0
    %v819 = vmax.f32 %v728, 0.0
    %v820 = vmax.f32 %v730, 0.0
    %v821 = vmax.f32 %v791, 0.0
    %v822 = vmax.f32 %v793, 0.0
    %v823 = vmax.f32 %v732, 0.0
    %v824 = vmax.f32 %v734, 0.0
    %v825 = vmax.f32 %v795, 0.0
    %v826 = vmax.f32 %v797, 0.0
    %v827 = vmax.f32 %v738, 0.0
    %v828 = vmax.f32 %v740, 0.0
    %v829 = vmax.f32 %v801, 0.0
    %v830 = vmax.f32 %v803, 0.0
    %v831 = vmax.f32 %v742, 0.0
    %v832 = vmax.f32 %v744, 0.0
    %v833 = vmax.f32 %v805, 0.0
    %v834 = vmax.f32 %v807, 0.0
    %v835 = vmax.f32 %v748, 0.0
    %v836 = vmax.f32 %v750, 0.0
    %v837 = vmax.f32 %v811, 0.0
    %v838 = vmax.f32 %v813, 0.0
    %v839 = vmax.f32 %v752, 0.0
    %v840 = vmax.f32 %v754, 0.0
    %v841 = vmax.f32 %v815, 0.0
    %v842 = vmax.f32 %v817, 0.0
    %v843 = vld [vmem:[#allocation7] sm:$0xf]
    %v844 = vpack.c.bf16 %v823, %v819
    %v845 = vpack.c.bf16 %v824, %v820
    %v846 = vpack.c.bf16 %v825, %v821
    %v847 = vpack.c.bf16 %v826, %v822
    %v848 = vpack.c.bf16 %v831, %v827
    %v849 = vpack.c.bf16 %v832, %v828
    %v850 = vpack.c.bf16 %v833, %v829
    %v851 = vpack.c.bf16 %v834, %v830
    %v852 = vpack.c.bf16 %v839, %v835
    %v853 = vpack.c.bf16 %v840, %v836
    %v854 = vpack.c.bf16 %v841, %v837
    %v855 = vpack.c.bf16 %v842, %v838
    %v856 = vld [vmem:[%s7] sm:$0xff]
    %858 = vset.pattern.permute.xlu0 0
    %859 = vperm.xlu0 %858, %v856
    %v860 = vpop.permute.xlu0 %859
    %vm862 = vcmask 392192
    %v864 = vsel %vm862, %v843, 0
    %866 = vmatprep.subr.bf16.mxu0 0
    %867 = vmatpush1.bf16.msra.mxu0 0
    %868 = vmatprep.subr.bf16.mxu0 0
    %869 = vmatpush1.bf16.msra.mxu0 0
    %870 = vmatprep.subr.bf16.mxu0 0
    %871 = vmatpush1.bf16.msra.mxu0 0
    %872 = vmatprep.subr.bf16.mxu0 0
    %873 = vmatpush1.bf16.msra.mxu0 0
    %874 = vmatprep.subr.bf16.mxu0 0
    %875 = vmatpush1.bf16.msra.mxu0 0
    %876 = vmatprep.subr.bf16.mxu0 %v853
    %877 = vmatpush1.bf16.msra.mxu0 %v852
    %878 = vmatprep.subr.bf16.mxu0 %v849
    %879 = vmatpush1.bf16.msra.mxu0 %v848
    %880 = vmatprep.subr.bf16.mxu0 %v845
    %881 = vmatpush1.bf16.msra.mxu0 %v844
    %882 = vmatprep.subr.bf16.mxu0 0
    %883 = vmatpush2.bf16.msra.mxu0 0
    %884 = vmatprep.subr.bf16.mxu0 0
    %885 = vmatpush2.bf16.msra.mxu0 0
    %886 = vmatprep.subr.bf16.mxu0 0
    %887 = vmatpush2.bf16.msra.mxu0 0
    %888 = vmatprep.subr.bf16.mxu0 0
    %889 = vmatpush2.bf16.msra.mxu0 0
    %890 = vmatprep.subr.bf16.mxu0 0
    %891 = vmatpush2.bf16.msra.mxu0 0
    %892 = vmatprep.subr.bf16.mxu0 0
    %893 = vmatpush2.bf16.msra.mxu0 0
    %894 = vmatprep.subr.bf16.mxu0 0
    %895 = vmatpush2.bf16.msra.mxu0 0
    %896 = vmatprep.subr.bf16.mxu0 0
    %897 = vmatpush2.bf16.msra.mxu0 0
    %898 = vmatprep.mubr.bf16.mxu0 0
    %899 = vmatmul.mubr.bf16.gmra.mxu0 %v864
    %v900 = vpop.f32.mrf.mxu0
    %v901 = vadd.f32 %v860, %v900
    %v902 = vpop.f32.mrf.mxu0
    %v903 = vadd.f32 %v860, %v902
    %v904 = vpop.f32.mrf.mxu0
    %v905 = vpop.f32.mrf.mxu0
    %906 = vdwg.mxu0
    %907 = vmatprep.subr.bf16.mxu0 0
    %908 = vmatpush1.bf16.msra.mxu0 0
    %909 = vmatprep.subr.bf16.mxu0 0
    %910 = vmatpush1.bf16.msra.mxu0 0
    %911 = vmatprep.subr.bf16.mxu0 0
    %912 = vmatpush1.bf16.msra.mxu0 0
    %913 = vmatprep.subr.bf16.mxu0 0
    %914 = vmatpush1.bf16.msra.mxu0 0
    %915 = vmatprep.subr.bf16.mxu0 0
    %916 = vmatpush1.bf16.msra.mxu0 0
    %917 = vmatprep.subr.bf16.mxu0 %v855
    %918 = vmatpush1.bf16.msra.mxu0 %v854
    %919 = vmatprep.subr.bf16.mxu0 %v851
    %920 = vmatpush1.bf16.msra.mxu0 %v850
    %921 = vmatprep.subr.bf16.mxu0 %v847
    %922 = vmatpush1.bf16.msra.mxu0 %v846
    %923 = vmatprep.subr.bf16.mxu0 0
    %924 = vmatpush2.bf16.msra.mxu0 0
    %925 = vmatprep.subr.bf16.mxu0 0
    %926 = vmatpush2.bf16.msra.mxu0 0
    %927 = vmatprep.subr.bf16.mxu0 0
    %928 = vmatpush2.bf16.msra.mxu0 0
    %929 = vmatprep.subr.bf16.mxu0 0
    %930 = vmatpush2.bf16.msra.mxu0 0
    %931 = vmatprep.subr.bf16.mxu0 0
    %932 = vmatpush2.bf16.msra.mxu0 0
    %933 = vmatprep.subr.bf16.mxu0 0
    %934 = vmatpush2.bf16.msra.mxu0 0
    %935 = vmatprep.subr.bf16.mxu0 0
    %936 = vmatpush2.bf16.msra.mxu0 0
    %937 = vmatprep.subr.bf16.mxu0 0
    %938 = vmatpush2.bf16.msra.mxu0 0
    %939 = vmatprep.mubr.bf16.mxu0 0
    %940 = vmatmul.mubr.bf16.gmra.mxu0 %v864
    %v941 = vpop.f32.mrf.mxu0
    %v942 = vadd.f32 %v860, %v941
    %v943 = vpop.f32.mrf.mxu0
    %v944 = vadd.f32 %v860, %v943
    %v945 = vpop.f32.mrf.mxu0
    %v946 = vpop.f32.mrf.mxu0
    %947 = vdwg.mxu0
    %948 = vrot.lane.b32.xlu0 %v901, 17
    %v949 = vpop.permute.xlu0 %948
    %950 = vrot.lane.b32.xlu0 %v903, 17
    %v951 = vpop.permute.xlu0 %950
    %952 = vrot.lane.b32.xlu0 %v942, 17
    %v953 = vpop.permute.xlu0 %952
    %954 = vrot.lane.b32.xlu0 %v944, 17
    %v955 = vpop.permute.xlu0 %954
    %v956 = vsel %vm173, %v953, %v955
    %v957 = vsel %vm173, %v951, %v953
    %v958 = vsel %vm173, %v949, %v951
    %v959 = vsel %vm173, %v955, %v949
    %v960 = vmul.f32 %v959, %v183
    %v961 = vmul.f32 %v958, %v187
    %v962 = vmul.f32 %v957, %v191
    %v963 = vmul.f32 %v956, %v195
    %964 = vrot.lane.b32.xlu0 %v901, 16
    %v965 = vpop.permute.xlu0 %964
    %966 = vrot.lane.b32.xlu0 %v903, 16
    %v967 = vpop.permute.xlu0 %966
    %968 = vrot.lane.b32.xlu0 %v942, 16
    %v969 = vpop.permute.xlu0 %968
    %970 = vrot.lane.b32.xlu0 %v944, 16
    %v971 = vpop.permute.xlu0 %970
    %v972 = vsel %vm212, %v969, %v971
    %v973 = vsel %vm212, %v967, %v969
    %v974 = vsel %vm212, %v965, %v967
    %v975 = vsel %vm212, %v971, %v965
    %v976 = vmul.f32 %v975, %v223
    %v977 = vmul.f32 %v974, %v227
    %v978 = vmul.f32 %v973, %v231
    %v979 = vmul.f32 %v972, %v235
    %980 = vrot.lane.b32.xlu0 %v901, 15
    %v981 = vpop.permute.xlu0 %980
    %982 = vrot.lane.b32.xlu0 %v903, 15
    %v983 = vpop.permute.xlu0 %982
    %984 = vrot.lane.b32.xlu0 %v942, 15
    %v985 = vpop.permute.xlu0 %984
    %986 = vrot.lane.b32.xlu0 %v944, 15
    %v987 = vpop.permute.xlu0 %986
    %v988 = vsel %vm252, %v985, %v987
    %v989 = vsel %vm252, %v983, %v985
    %v990 = vsel %vm252, %v981, %v983
    %v991 = vsel %vm252, %v987, %v981
    %v992 = vmul.f32 %v991, %v263
    %v993 = vmul.f32 %v990, %v267
    %v994 = vmul.f32 %v989, %v271
    %v995 = vmul.f32 %v988, %v275
    %996 = vrot.lane.b32.xlu0 %v901, 1
    %v997 = vpop.permute.xlu0 %996
    %998 = vrot.lane.b32.xlu0 %v903, 1
    %v999 = vpop.permute.xlu0 %998
    %1000 = vrot.lane.b32.xlu0 %v942, 1
    %v1001 = vpop.permute.xlu0 %1000
    %1002 = vrot.lane.b32.xlu0 %v944, 1
    %v1003 = vpop.permute.xlu0 %1002
    %v1004 = vsel %vm292, %v1001, %v1003
    %v1005 = vsel %vm292, %v999, %v1001
    %v1006 = vsel %vm292, %v997, %v999
    %v1007 = vsel %vm292, %v1003, %v997
    %v1008 = vmul.f32 %v1007, %v303
    %v1009 = vmul.f32 %v1006, %v307
    %v1010 = vmul.f32 %v1005, %v311
    %v1011 = vmul.f32 %v1004, %v315
    %1012 = vrot.lane.b32.xlu0 %v901, 127
    %v1013 = vpop.permute.xlu0 %1012
    %1014 = vrot.lane.b32.xlu0 %v903, 127
    %v1015 = vpop.permute.xlu0 %1014
    %1016 = vrot.lane.b32.xlu0 %v942, 127
    %v1017 = vpop.permute.xlu0 %1016
    %1018 = vrot.lane.b32.xlu0 %v944, 127
    %v1019 = vpop.permute.xlu0 %1018
    %v1020 = vsel %vm332, %v1017, %v1019
    %v1021 = vsel %vm332, %v1015, %v1017
    %v1022 = vsel %vm332, %v1013, %v1015
    %v1023 = vsel %vm332, %v1019, %v1013
    %v1024 = vmul.f32 %v1022, %v343
    %v1025 = vmul.f32 %v1021, %v347
    %v1026 = vmul.f32 %v1020, %v351
    %v1027 = vmul.f32 %v1023, %v355
    %1028 = vrot.lane.b32.xlu0 %v901, 113
    %v1029 = vpop.permute.xlu0 %1028
    %1030 = vrot.lane.b32.xlu0 %v903, 113
    %v1031 = vpop.permute.xlu0 %1030
    %1032 = vrot.lane.b32.xlu0 %v942, 113
    %v1033 = vpop.permute.xlu0 %1032
    %1034 = vrot.lane.b32.xlu0 %v944, 113
    %v1035 = vpop.permute.xlu0 %1034
    %v1036 = vsel %vm372, %v1033, %v1035
    %v1037 = vsel %vm372, %v1031, %v1033
    %v1038 = vsel %vm372, %v1029, %v1031
    %v1039 = vsel %vm372, %v1035, %v1029
    %v1040 = vmul.f32 %v1038, %v383
    %v1041 = vmul.f32 %v1037, %v387
    %v1042 = vmul.f32 %v1036, %v391
    %v1043 = vmul.f32 %v1039, %v395
    %1044 = vrot.lane.b32.xlu0 %v901, 112
    %v1045 = vpop.permute.xlu0 %1044
    %1046 = vrot.lane.b32.xlu0 %v903, 112
    %v1047 = vpop.permute.xlu0 %1046
    %1048 = vrot.lane.b32.xlu0 %v942, 112
    %v1049 = vpop.permute.xlu0 %1048
    %1050 = vrot.lane.b32.xlu0 %v944, 112
    %v1051 = vpop.permute.xlu0 %1050
    %v1052 = vsel %vm412, %v1049, %v1051
    %v1053 = vsel %vm412, %v1047, %v1049
    %v1054 = vsel %vm412, %v1045, %v1047
    %v1055 = vsel %vm412, %v1051, %v1045
    %v1056 = vmul.f32 %v1054, %v423
    %v1057 = vmul.f32 %v1053, %v427
    %v1058 = vmul.f32 %v1052, %v431
    %v1059 = vmul.f32 %v1055, %v435
    %1060 = vrot.lane.b32.xlu0 %v901, 111
    %v1061 = vpop.permute.xlu0 %1060
    %1062 = vrot.lane.b32.xlu0 %v903, 111
    %v1063 = vpop.permute.xlu0 %1062
    %1064 = vrot.lane.b32.xlu0 %v942, 111
    %v1065 = vpop.permute.xlu0 %1064
    %1066 = vrot.lane.b32.xlu0 %v944, 111
    %v1067 = vpop.permute.xlu0 %1066
    %v1068 = vsel %vm452, %v1065, %v1067
    %v1069 = vsel %vm452, %v1063, %v1065
    %v1070 = vsel %vm452, %v1061, %v1063
    %v1071 = vsel %vm452, %v1067, %v1061
    %v1072 = vmul.f32 %v1070, %v463
    %v1073 = vmul.f32 %v1069, %v467
    %v1074 = vmul.f32 %v1068, %v471
    %v1075 = vmul.f32 %v1071, %v475
    %v1076 = vld [vmem:[#allocation9] sm:$0xf]
    %v1077 = vpack.c.bf16 %v976, %v960
    %v1078 = vpack.c.bf16 %v977, %v961
    %v1079 = vpack.c.bf16 %v978, %v962
    %v1080 = vpack.c.bf16 %v979, %v963
    %v1081 = vpack.c.bf16 %v1008, %v992
    %v1082 = vpack.c.bf16 %v1009, %v993
    %v1083 = vpack.c.bf16 %v1010, %v994
    %v1084 = vpack.c.bf16 %v1011, %v995
    %v1085 = vpack.c.bf16 %v1024, %v901
    %v1086 = vpack.c.bf16 %v1025, %v903
    %v1087 = vpack.c.bf16 %v1026, %v942
    %v1088 = vpack.c.bf16 %v1027, %v944
    %v1089 = vpack.c.bf16 %v1056, %v1040
    %v1090 = vpack.c.bf16 %v1057, %v1041
    %v1091 = vpack.c.bf16 %v1058, %v1042
    %v1092 = vpack.c.bf16 %v1059, %v1043
    %v1093 = vpack.c.bf16 %v1072, %v1072
    %v1094 = vpack.c.bf16 %v1073, %v1073
    %v1095 = vpack.c.bf16 %v1074, %v1074
    %v1096 = vpack.c.bf16 %v1075, %v1075
    %v1097 = vld [vmem:[%s9] sm:$0xff]
    %1099 = vset.pattern.permute.xlu0 0
    %1100 = vperm.xlu0 %1099, %v1097
    %v1101 = vpop.permute.xlu0 %1100
    %v1104 = vsel %vm511, %v1076, 0
    %v1107 = vsel %vm515, %v1093, 0
    %v1110 = vsel %vm515, %v1094, 0
    %v1113 = vsel %vm515, %v1095, 0
    %v1116 = vsel %vm515, %v1096, 0
    %1118 = vmatprep.subr.bf16.mxu0 0
    %1119 = vmatpush1.bf16.msra.mxu0 0
    %1120 = vmatprep.subr.bf16.mxu0 0
    %1121 = vmatpush1.bf16.msra.mxu0 0
    %1122 = vmatprep.subr.bf16.mxu0 0
    %1123 = vmatpush1.bf16.msra.mxu0 0
    %1124 = vmatprep.subr.bf16.mxu0 %v1110
    %1125 = vmatpush1.bf16.msra.mxu0 %v1107
    %1126 = vmatprep.subr.bf16.mxu0 %v1090
    %1127 = vmatpush1.bf16.msra.mxu0 %v1089
    %1128 = vmatprep.subr.bf16.mxu0 %v1086
    %1129 = vmatpush1.bf16.msra.mxu0 %v1085
    %1130 = vmatprep.subr.bf16.mxu0 %v1082
    %1131 = vmatpush1.bf16.msra.mxu0 %v1081
    %1132 = vmatprep.subr.bf16.mxu0 %v1078
    %1133 = vmatpush1.bf16.msra.mxu0 %v1077
    %1134 = vmatprep.subr.bf16.mxu0 0
    %1135 = vmatpush2.bf16.msra.mxu0 0
    %1136 = vmatprep.subr.bf16.mxu0 0
    %1137 = vmatpush2.bf16.msra.mxu0 0
    %1138 = vmatprep.subr.bf16.mxu0 0
    %1139 = vmatpush2.bf16.msra.mxu0 0
    %1140 = vmatprep.subr.bf16.mxu0 0
    %1141 = vmatpush2.bf16.msra.mxu0 0
    %1142 = vmatprep.subr.bf16.mxu0 0
    %1143 = vmatpush2.bf16.msra.mxu0 0
    %1144 = vmatprep.subr.bf16.mxu0 0
    %1145 = vmatpush2.bf16.msra.mxu0 0
    %1146 = vmatprep.subr.bf16.mxu0 0
    %1147 = vmatpush2.bf16.msra.mxu0 0
    %1148 = vmatprep.subr.bf16.mxu0 0
    %1149 = vmatpush2.bf16.msra.mxu0 0
    %1150 = vmatprep.mubr.bf16.mxu0 0
    %1151 = vmatmul.mubr.bf16.gmra.mxu0 %v1104
    %v1152 = vpop.f32.mrf.mxu0
    %v1153 = vadd.f32 %v1101, %v1152
    %v1154 = vpop.f32.mrf.mxu0
    %v1155 = vadd.f32 %v1101, %v1154
    %v1156 = vpop.f32.mrf.mxu0
    %v1157 = vpop.f32.mrf.mxu0
    %1158 = vdwg.mxu0
    %1159 = vmatprep.subr.bf16.mxu0 0
    %1160 = vmatpush1.bf16.msra.mxu0 0
    %1161 = vmatprep.subr.bf16.mxu0 0
    %1162 = vmatpush1.bf16.msra.mxu0 0
    %1163 = vmatprep.subr.bf16.mxu0 0
    %1164 = vmatpush1.bf16.msra.mxu0 0
    %1165 = vmatprep.subr.bf16.mxu0 %v1116
    %1166 = vmatpush1.bf16.msra.mxu0 %v1113
    %1167 = vmatprep.subr.bf16.mxu0 %v1092
    %1168 = vmatpush1.bf16.msra.mxu0 %v1091
    %1169 = vmatprep.subr.bf16.mxu0 %v1088
    %1170 = vmatpush1.bf16.msra.mxu0 %v1087
    %1171 = vmatprep.subr.bf16.mxu0 %v1084
    %1172 = vmatpush1.bf16.msra.mxu0 %v1083
    %1173 = vmatprep.subr.bf16.mxu0 %v1080
    %1174 = vmatpush1.bf16.msra.mxu0 %v1079
    %1175 = vmatprep.subr.bf16.mxu0 0
    %1176 = vmatpush2.bf16.msra.mxu0 0
    %1177 = vmatprep.subr.bf16.mxu0 0
    %1178 = vmatpush2.bf16.msra.mxu0 0
    %1179 = vmatprep.subr.bf16.mxu0 0
    %1180 = vmatpush2.bf16.msra.mxu0 0
    %1181 = vmatprep.subr.bf16.mxu0 0
    %1182 = vmatpush2.bf16.msra.mxu0 0
    %1183 = vmatprep.subr.bf16.mxu0 0
    %1184 = vmatpush2.bf16.msra.mxu0 0
    %1185 = vmatprep.subr.bf16.mxu0 0
    %1186 = vmatpush2.bf16.msra.mxu0 0
    %1187 = vmatprep.subr.bf16.mxu0 0
    %1188 = vmatpush2.bf16.msra.mxu0 0
    %1189 = vmatprep.subr.bf16.mxu0 0
    %1190 = vmatpush2.bf16.msra.mxu0 0
    %1191 = vmatprep.mubr.bf16.mxu0 0
    %1192 = vmatmul.mubr.bf16.gmra.mxu0 %v1104
    %v1193 = vpop.f32.mrf.mxu0
    %v1194 = vadd.f32 %v1101, %v1193
    %v1195 = vpop.f32.mrf.mxu0
    %v1196 = vadd.f32 %v1101, %v1195
    %v1197 = vpop.f32.mrf.mxu0
    %v1198 = vpop.f32.mrf.mxu0
    %1199 = vdwg.mxu0
    %v1200 = vadd.f32 %v1153, %v563
    %v1201 = vadd.f32 %v1155, %v565
    %v1202 = vadd.f32 %v1194, %v604
    %v1203 = vadd.f32 %v1196, %v606
    %s1204 = scalar_lea.vmem [#allocation6], 24
    %v1205 = vld [vmem:[%s1204] sm:$0xf]
    %v1206 = vld [vmem:[%s1204 + $0x4] sm:$0xf]
    %v1207 = vld [vmem:[%s1204 + $0x8] sm:$0xf]
    %v1208 = vld [vmem:[%s1204 + $0xc] sm:$0xf]
    %v1209 = vld [vmem:[%s1204 + $0x10] sm:$0xf]
    %v1210 = vld [vmem:[%s1204 + $0x14] sm:$0xf]
    %v1211 = vpack.c.bf16 %v1200, %v1200
    %v1212 = vpack.c.bf16 %v1201, %v1201
    %v1213 = vpack.c.bf16 %v1202, %v1202
    %v1214 = vpack.c.bf16 %v1203, %v1203
    %s1215 = scalar_lea.vmem %s5, 48
    %v1216 = vld [vmem:[%s1215] sm:$0xff]
    %v1217 = vld [vmem:[%s1215 + $0x8] sm:$0xff]
    %v1218 = vld [vmem:[%s1215 + $0x10] sm:$0xff]
    %v1219 = vld [vmem:[%s1215 + $0x18] sm:$0xff]
    %v1220 = vld [vmem:[%s1215 + $0x20] sm:$0xff]
    %v1221 = vld [vmem:[%s1215 + $0x28] sm:$0xff]
    %1223 = vset.pattern.permute.xlu0 0
    %1224 = vperm.xlu0 %1223, %v1216
    %v1225 = vpop.permute.xlu0 %1224
    %1228 = vset.pattern.permute.xlu0 0
    %1229 = vperm.xlu0 %1228, %v1217
    %v1230 = vpop.permute.xlu0 %1229
    %1233 = vset.pattern.permute.xlu0 0
    %1234 = vperm.xlu0 %1233, %v1218
    %v1235 = vpop.permute.xlu0 %1234
    %1238 = vset.pattern.permute.xlu0 0
    %1239 = vperm.xlu0 %1238, %v1219
    %v1240 = vpop.permute.xlu0 %1239
    %1243 = vset.pattern.permute.xlu0 0
    %1244 = vperm.xlu0 %1243, %v1220
    %v1245 = vpop.permute.xlu0 %1244
    %1248 = vset.pattern.permute.xlu0 0
    %1249 = vperm.xlu0 %1248, %v1221
    %v1250 = vpop.permute.xlu0 %1249
    %v1258 = vunpack.c.l.b16 %v1205
    %v1259 = vunpack.c.l.b16 %v1206
    %v1260 = vunpack.c.l.b16 %v1207
    %v1261 = vunpack.c.l.b16 %v1208
    %v1262 = vunpack.c.l.b16 %v1209
    %v1263 = vunpack.c.l.b16 %v1210
    %v1264 = vpack.c.b16 %v1259, %v1258
    %v1265 = vpack.c.b16 %v1261, %v1260
    %v1266 = vpack.c.b16 %v1263, %v1262
    %v1268 = vsel %vm671, %v1264, 0
    %v1271 = vsel %vm671, %v1265, 0
    %v1274 = vsel %vm671, %v1266, 0
    %v1277 = vsel %vm515, %v1211, 0
    %v1280 = vsel %vm515, %v1212, 0
    %v1283 = vsel %vm515, %v1213, 0
    %v1286 = vsel %vm515, %v1214, 0
    %1288 = vmatprep.subr.bf16.mxu0 0
    %1289 = vmatpush1.bf16.msra.mxu0 0
    %1290 = vmatprep.subr.bf16.mxu0 0
    %1291 = vmatpush1.bf16.msra.mxu0 0
    %1292 = vmatprep.subr.bf16.mxu0 0
    %1293 = vmatpush1.bf16.msra.mxu0 0
    %1294 = vmatprep.subr.bf16.mxu0 0
    %1295 = vmatpush1.bf16.msra.mxu0 0
    %1296 = vmatprep.subr.bf16.mxu0 0
    %1297 = vmatpush1.bf16.msra.mxu0 0
    %1298 = vmatprep.subr.bf16.mxu0 0
    %1299 = vmatpush1.bf16.msra.mxu0 0
    %1300 = vmatprep.subr.bf16.mxu0 0
    %1301 = vmatpush1.bf16.msra.mxu0 0
    %1302 = vmatprep.subr.bf16.mxu0 %v1280
    %1303 = vmatpush1.bf16.msra.mxu0 %v1277
    %1304 = vmatprep.subr.bf16.mxu0 0
    %1305 = vmatpush2.bf16.msra.mxu0 0
    %1306 = vmatprep.subr.bf16.mxu0 0
    %1307 = vmatpush2.bf16.msra.mxu0 0
    %1308 = vmatprep.subr.bf16.mxu0 0
    %1309 = vmatpush2.bf16.msra.mxu0 0
    %1310 = vmatprep.subr.bf16.mxu0 0
    %1311 = vmatpush2.bf16.msra.mxu0 0
    %1312 = vmatprep.subr.bf16.mxu0 0
    %1313 = vmatpush2.bf16.msra.mxu0 0
    %1314 = vmatprep.subr.bf16.mxu0 0
    %1315 = vmatpush2.bf16.msra.mxu0 0
    %1316 = vmatprep.subr.bf16.mxu0 0
    %1317 = vmatpush2.bf16.msra.mxu0 0
    %1318 = vmatprep.subr.bf16.mxu0 0
    %1319 = vmatpush2.bf16.msra.mxu0 0
    %1320 = vmatprep.mubr.bf16.mxu0 0
    %1321 = vmatmul.mubr.bf16.gmra.mxu0 %v1268
    %v1322 = vpop.f32.mrf.mxu0
    %v1323 = vadd.f32 %v1225, %v1322
    %v1324 = vpop.f32.mrf.mxu0
    %v1325 = vadd.f32 %v1225, %v1324
    %v1326 = vpop.f32.mrf.mxu0
    %v1327 = vadd.f32 %v1230, %v1326
    %v1328 = vpop.f32.mrf.mxu0
    %v1329 = vadd.f32 %v1230, %v1328
    %1330 = vmatprep.mubr.bf16.mxu0 0
    %1331 = vmatmul.mubr.bf16.gmra.mxu0 %v1271
    %v1332 = vpop.f32.mrf.mxu0
    %v1333 = vadd.f32 %v1235, %v1332
    %v1334 = vpop.f32.mrf.mxu0
    %v1335 = vadd.f32 %v1235, %v1334
    %v1336 = vpop.f32.mrf.mxu0
    %v1337 = vadd.f32 %v1240, %v1336
    %v1338 = vpop.f32.mrf.mxu0
    %v1339 = vadd.f32 %v1240, %v1338
    %1340 = vmatprep.mubr.bf16.mxu0 0
    %1341 = vmatmul.mubr.bf16.gmra.mxu0 %v1274
    %v1342 = vpop.f32.mrf.mxu0
    %v1343 = vadd.f32 %v1245, %v1342
    %v1344 = vpop.f32.mrf.mxu0
    %v1345 = vadd.f32 %v1245, %v1344
    %v1346 = vpop.f32.mrf.mxu0
    %v1347 = vadd.f32 %v1250, %v1346
    %v1348 = vpop.f32.mrf.mxu0
    %v1349 = vadd.f32 %v1250, %v1348
    %1350 = vdwg.mxu0
    %1351 = vmatprep.subr.bf16.mxu0 0
    %1352 = vmatpush1.bf16.msra.mxu0 0
    %1353 = vmatprep.subr.bf16.mxu0 0
    %1354 = vmatpush1.bf16.msra.mxu0 0
    %1355 = vmatprep.subr.bf16.mxu0 0
    %1356 = vmatpush1.bf16.msra.mxu0 0
    %1357 = vmatprep.subr.bf16.mxu0 0
    %1358 = vmatpush1.bf16.msra.mxu0 0
    %1359 = vmatprep.subr.bf16.mxu0 0
    %1360 = vmatpush1.bf16.msra.mxu0 0
    %1361 = vmatprep.subr.bf16.mxu0 0
    %1362 = vmatpush1.bf16.msra.mxu0 0
    %1363 = vmatprep.subr.bf16.mxu0 0
    %1364 = vmatpush1.bf16.msra.mxu0 0
    %1365 = vmatprep.subr.bf16.mxu0 %v1286
    %1366 = vmatpush1.bf16.msra.mxu0 %v1283
    %1367 = vmatprep.subr.bf16.mxu0 0
    %1368 = vmatpush2.bf16.msra.mxu0 0
    %1369 = vmatprep.subr.bf16.mxu0 0
    %1370 = vmatpush2.bf16.msra.mxu0 0
    %1371 = vmatprep.subr.bf16.mxu0 0
    %1372 = vmatpush2.bf16.msra.mxu0 0
    %1373 = vmatprep.subr.bf16.mxu0 0
    %1374 = vmatpush2.bf16.msra.mxu0 0
    %1375 = vmatprep.subr.bf16.mxu0 0
    %1376 = vmatpush2.bf16.msra.mxu0 0
    %1377 = vmatprep.subr.bf16.mxu0 0
    %1378 = vmatpush2.bf16.msra.mxu0 0
    %1379 = vmatprep.subr.bf16.mxu0 0
    %1380 = vmatpush2.bf16.msra.mxu0 0
    %1381 = vmatprep.subr.bf16.mxu0 0
    %1382 = vmatpush2.bf16.msra.mxu0 0
    %1383 = vmatprep.mubr.bf16.mxu0 0
    %1384 = vmatmul.mubr.bf16.gmra.mxu0 %v1268
    %v1385 = vpop.f32.mrf.mxu0
    %v1386 = vadd.f32 %v1225, %v1385
    %v1387 = vpop.f32.mrf.mxu0
    %v1388 = vadd.f32 %v1225, %v1387
    %v1389 = vpop.f32.mrf.mxu0
    %v1390 = vadd.f32 %v1230, %v1389
    %v1391 = vpop.f32.mrf.mxu0
    %v1392 = vadd.f32 %v1230, %v1391
    %1393 = vmatprep.mubr.bf16.mxu0 0
    %1394 = vmatmul.mubr.bf16.gmra.mxu0 %v1271
    %v1395 = vpop.f32.mrf.mxu0
    %v1396 = vadd.f32 %v1235, %v1395
    %v1397 = vpop.f32.mrf.mxu0
    %v1398 = vadd.f32 %v1235, %v1397
    %v1399 = vpop.f32.mrf.mxu0
    %v1400 = vadd.f32 %v1240, %v1399
    %v1401 = vpop.f32.mrf.mxu0
    %v1402 = vadd.f32 %v1240, %v1401
    %1403 = vmatprep.mubr.bf16.mxu0 0
    %1404 = vmatmul.mubr.bf16.gmra.mxu0 %v1274
    %v1405 = vpop.f32.mrf.mxu0
    %v1406 = vadd.f32 %v1245, %v1405
    %v1407 = vpop.f32.mrf.mxu0
    %v1408 = vadd.f32 %v1245, %v1407
    %v1409 = vpop.f32.mrf.mxu0
    %v1410 = vadd.f32 %v1250, %v1409
    %v1411 = vpop.f32.mrf.mxu0
    %v1412 = vadd.f32 %v1250, %v1411
    %1413 = vdwg.mxu0
    %v1414 = vmax.f32 %v1323, 0.0
    %v1415 = vmax.f32 %v1325, 0.0
    %v1416 = vmax.f32 %v1386, 0.0
    %v1417 = vmax.f32 %v1388, 0.0
    %v1418 = vmax.f32 %v1327, 0.0
    %v1419 = vmax.f32 %v1329, 0.0
    %v1420 = vmax.f32 %v1390, 0.0
    %v1421 = vmax.f32 %v1392, 0.0
    %v1422 = vmax.f32 %v1333, 0.0
    %v1423 = vmax.f32 %v1335, 0.0
    %v1424 = vmax.f32 %v1396, 0.0
    %v1425 = vmax.f32 %v1398, 0.0
    %v1426 = vmax.f32 %v1337, 0.0
    %v1427 = vmax.f32 %v1339, 0.0
    %v1428 = vmax.f32 %v1400, 0.0
    %v1429 = vmax.f32 %v1402, 0.0
    %v1430 = vmax.f32 %v1343, 0.0
    %v1431 = vmax.f32 %v1345, 0.0
    %v1432 = vmax.f32 %v1406, 0.0
    %v1433 = vmax.f32 %v1408, 0.0
    %v1434 = vmax.f32 %v1347, 0.0
    %v1435 = vmax.f32 %v1349, 0.0
    %v1436 = vmax.f32 %v1410, 0.0
    %v1437 = vmax.f32 %v1412, 0.0
    %s1438 = scalar_lea.vmem [#allocation7], 4
    %v1439 = vld [vmem:[%s1438] sm:$0xf]
    %v1440 = vpack.c.bf16 %v1418, %v1414
    %v1441 = vpack.c.bf16 %v1419, %v1415
    %v1442 = vpack.c.bf16 %v1420, %v1416
    %v1443 = vpack.c.bf16 %v1421, %v1417
    %v1444 = vpack.c.bf16 %v1426, %v1422
    %v1445 = vpack.c.bf16 %v1427, %v1423
    %v1446 = vpack.c.bf16 %v1428, %v1424
    %v1447 = vpack.c.bf16 %v1429, %v1425
    %v1448 = vpack.c.bf16 %v1434, %v1430
    %v1449 = vpack.c.bf16 %v1435, %v1431
    %v1450 = vpack.c.bf16 %v1436, %v1432
    %v1451 = vpack.c.bf16 %v1437, %v1433
    %s1452 = scalar_lea.vmem %s7, 8
    %v1453 = vld [vmem:[%s1452] sm:$0xff]
    %1455 = vset.pattern.permute.xlu0 0
    %1456 = vperm.xlu0 %1455, %v1453
    %v1457 = vpop.permute.xlu0 %1456
    %v1460 = vsel %vm862, %v1439, 0
    %1462 = vmatprep.subr.bf16.mxu0 0
    %1463 = vmatpush1.bf16.msra.mxu0 0
    %1464 = vmatprep.subr.bf16.mxu0 0
    %1465 = vmatpush1.bf16.msra.mxu0 0
    %1466 = vmatprep.subr.bf16.mxu0 0
    %1467 = vmatpush1.bf16.msra.mxu0 0
    %1468 = vmatprep.subr.bf16.mxu0 0
    %1469 = vmatpush1.bf16.msra.mxu0 0
    %1470 = vmatprep.subr.bf16.mxu0 0
    %1471 = vmatpush1.bf16.msra.mxu0 0
    %1472 = vmatprep.subr.bf16.mxu0 %v1449
    %1473 = vmatpush1.bf16.msra.mxu0 %v1448
    %1474 = vmatprep.subr.bf16.mxu0 %v1445
    %1475 = vmatpush1.bf16.msra.mxu0 %v1444
    %1476 = vmatprep.subr.bf16.mxu0 %v1441
    %1477 = vmatpush1.bf16.msra.mxu0 %v1440
    %1478 = vmatprep.subr.bf16.mxu0 0
    %1479 = vmatpush2.bf16.msra.mxu0 0
    %1480 = vmatprep.subr.bf16.mxu0 0
    %1481 = vmatpush2.bf16.msra.mxu0 0
    %1482 = vmatprep.subr.bf16.mxu0 0
    %1483 = vmatpush2.bf16.msra.mxu0 0
    %1484 = vmatprep.subr.bf16.mxu0 0
    %1485 = vmatpush2.bf16.msra.mxu0 0
    %1486 = vmatprep.subr.bf16.mxu0 0
    %1487 = vmatpush2.bf16.msra.mxu0 0
    %1488 = vmatprep.subr.bf16.mxu0 0
    %1489 = vmatpush2.bf16.msra.mxu0 0
    %1490 = vmatprep.subr.bf16.mxu0 0
    %1491 = vmatpush2.bf16.msra.mxu0 0
    %1492 = vmatprep.subr.bf16.mxu0 0
    %1493 = vmatpush2.bf16.msra.mxu0 0
    %1494 = vmatprep.mubr.bf16.mxu0 0
    %1495 = vmatmul.mubr.bf16.gmra.mxu0 %v1460
    %v1496 = vpop.f32.mrf.mxu0
    %v1497 = vadd.f32 %v1457, %v1496
    %v1498 = vpop.f32.mrf.mxu0
    %v1499 = vadd.f32 %v1457, %v1498
    %v1500 = vpop.f32.mrf.mxu0
    %v1501 = vpop.f32.mrf.mxu0
    %1502 = vdwg.mxu0
    %1503 = vmatprep.subr.bf16.mxu0 0
    %1504 = vmatpush1.bf16.msra.mxu0 0
    %1505 = vmatprep.subr.bf16.mxu0 0
    %1506 = vmatpush1.bf16.msra.mxu0 0
    %1507 = vmatprep.subr.bf16.mxu0 0
    %1508 = vmatpush1.bf16.msra.mxu0 0
    %1509 = vmatprep.subr.bf16.mxu0 0
    %1510 = vmatpush1.bf16.msra.mxu0 0
    %1511 = vmatprep.subr.bf16.mxu0 0
    %1512 = vmatpush1.bf16.msra.mxu0 0
    %1513 = vmatprep.subr.bf16.mxu0 %v1451
    %1514 = vmatpush1.bf16.msra.mxu0 %v1450
    %1515 = vmatprep.subr.bf16.mxu0 %v1447
    %1516 = vmatpush1.bf16.msra.mxu0 %v1446
    %1517 = vmatprep.subr.bf16.mxu0 %v1443
    %1518 = vmatpush1.bf16.msra.mxu0 %v1442
    %1519 = vmatprep.subr.bf16.mxu0 0
    %1520 = vmatpush2.bf16.msra.mxu0 0
    %1521 = vmatprep.subr.bf16.mxu0 0
    %1522 = vmatpush2.bf16.msra.mxu0 0
    %1523 = vmatprep.subr.bf16.mxu0 0
    %1524 = vmatpush2.bf16.msra.mxu0 0
    %1525 = vmatprep.subr.bf16.mxu0 0
    %1526 = vmatpush2.bf16.msra.mxu0 0
    %1527 = vmatprep.subr.bf16.mxu0 0
    %1528 = vmatpush2.bf16.msra.mxu0 0
    %1529 = vmatprep.subr.bf16.mxu0 0
    %1530 = vmatpush2.bf16.msra.mxu0 0
    %1531 = vmatprep.subr.bf16.mxu0 0
    %1532 = vmatpush2.bf16.msra.mxu0 0
    %1533 = vmatprep.subr.bf16.mxu0 0
    %1534 = vmatpush2.bf16.msra.mxu0 0
    %1535 = vmatprep.mubr.bf16.mxu0 0
    %1536 = vmatmul.mubr.bf16.gmra.mxu0 %v1460
    %v1537 = vpop.f32.mrf.mxu0
    %v1538 = vadd.f32 %v1457, %v1537
    %v1539 = vpop.f32.mrf.mxu0
    %v1540 = vadd.f32 %v1457, %v1539
    %v1541 = vpop.f32.mrf.mxu0
    %v1542 = vpop.f32.mrf.mxu0
    %1543 = vdwg.mxu0
    %1544 = vrot.lane.b32.xlu0 %v1497, 17
    %v1545 = vpop.permute.xlu0 %1544
    %1546 = vrot.lane.b32.xlu0 %v1499, 17
    %v1547 = vpop.permute.xlu0 %1546
    %1548 = vrot.lane.b32.xlu0 %v1538, 17
    %v1549 = vpop.permute.xlu0 %1548
    %1550 = vrot.lane.b32.xlu0 %v1540, 17
    %v1551 = vpop.permute.xlu0 %1550
    %v1552 = vsel %vm173, %v1549, %v1551
    %v1553 = vsel %vm173, %v1547, %v1549
    %v1554 = vsel %vm173, %v1545, %v1547
    %v1555 = vsel %vm173, %v1551, %v1545
    %v1556 = vmul.f32 %v1555, %v183
    %v1557 = vmul.f32 %v1554, %v187
    %v1558 = vmul.f32 %v1553, %v191
    %v1559 = vmul.f32 %v1552, %v195
    %1560 = vrot.lane.b32.xlu0 %v1497, 16
    %v1561 = vpop.permute.xlu0 %1560
    %1562 = vrot.lane.b32.xlu0 %v1499, 16
    %v1563 = vpop.permute.xlu0 %1562
    %1564 = vrot.lane.b32.xlu0 %v1538, 16
    %v1565 = vpop.permute.xlu0 %1564
    %1566 = vrot.lane.b32.xlu0 %v1540, 16
    %v1567 = vpop.permute.xlu0 %1566
    %v1568 = vsel %vm212, %v1565, %v1567
    %v1569 = vsel %vm212, %v1563, %v1565
    %v1570 = vsel %vm212, %v1561, %v1563
    %v1571 = vsel %vm212, %v1567, %v1561
    %v1572 = vmul.f32 %v1571, %v223
    %v1573 = vmul.f32 %v1570, %v227
    %v1574 = vmul.f32 %v1569, %v231
    %v1575 = vmul.f32 %v1568, %v235
    %1576 = vrot.lane.b32.xlu0 %v1497, 15
    %v1577 = vpop.permute.xlu0 %1576
    %1578 = vrot.lane.b32.xlu0 %v1499, 15
    %v1579 = vpop.permute.xlu0 %1578
    %1580 = vrot.lane.b32.xlu0 %v1538, 15
    %v1581 = vpop.permute.xlu0 %1580
    %1582 = vrot.lane.b32.xlu0 %v1540, 15
    %v1583 = vpop.permute.xlu0 %1582
    %v1584 = vsel %vm252, %v1581, %v1583
    %v1585 = vsel %vm252, %v1579, %v1581
    %v1586 = vsel %vm252, %v1577, %v1579
    %v1587 = vsel %vm252, %v1583, %v1577
    %v1588 = vmul.f32 %v1587, %v263
    %v1589 = vmul.f32 %v1586, %v267
    %v1590 = vmul.f32 %v1585, %v271
    %v1591 = vmul.f32 %v1584, %v275
    %1592 = vrot.lane.b32.xlu0 %v1497, 1
    %v1593 = vpop.permute.xlu0 %1592
    %1594 = vrot.lane.b32.xlu0 %v1499, 1
    %v1595 = vpop.permute.xlu0 %1594
    %1596 = vrot.lane.b32.xlu0 %v1538, 1
    %v1597 = vpop.permute.xlu0 %1596
    %1598 = vrot.lane.b32.xlu0 %v1540, 1
    %v1599 = vpop.permute.xlu0 %1598
    %v1600 = vsel %vm292, %v1597, %v1599
    %v1601 = vsel %vm292, %v1595, %v1597
    %v1602 = vsel %vm292, %v1593, %v1595
    %v1603 = vsel %vm292, %v1599, %v1593
    %v1604 = vmul.f32 %v1603, %v303
    %v1605 = vmul.f32 %v1602, %v307
    %v1606 = vmul.f32 %v1601, %v311
    %v1607 = vmul.f32 %v1600, %v315
    %1608 = vrot.lane.b32.xlu0 %v1497, 127
    %v1609 = vpop.permute.xlu0 %1608
    %1610 = vrot.lane.b32.xlu0 %v1499, 127
    %v1611 = vpop.permute.xlu0 %1610
    %1612 = vrot.lane.b32.xlu0 %v1538, 127
    %v1613 = vpop.permute.xlu0 %1612
    %1614 = vrot.lane.b32.xlu0 %v1540, 127
    %v1615 = vpop.permute.xlu0 %1614
    %v1616 = vsel %vm332, %v1613, %v1615
    %v1617 = vsel %vm332, %v1611, %v1613
    %v1618 = vsel %vm332, %v1609, %v1611
    %v1619 = vsel %vm332, %v1615, %v1609
    %v1620 = vmul.f32 %v1618, %v343
    %v1621 = vmul.f32 %v1617, %v347
    %v1622 = vmul.f32 %v1616, %v351
    %v1623 = vmul.f32 %v1619, %v355
    %1624 = vrot.lane.b32.xlu0 %v1497, 113
    %v1625 = vpop.permute.xlu0 %1624
    %1626 = vrot.lane.b32.xlu0 %v1499, 113
    %v1627 = vpop.permute.xlu0 %1626
    %1628 = vrot.lane.b32.xlu0 %v1538, 113
    %v1629 = vpop.permute.xlu0 %1628
    %1630 = vrot.lane.b32.xlu0 %v1540, 113
    %v1631 = vpop.permute.xlu0 %1630
    %v1632 = vsel %vm372, %v1629, %v1631
    %v1633 = vsel %vm372, %v1627, %v1629
    %v1634 = vsel %vm372, %v1625, %v1627
    %v1635 = vsel %vm372, %v1631, %v1625
    %v1636 = vmul.f32 %v1634, %v383
    %v1637 = vmul.f32 %v1633, %v387
    %v1638 = vmul.f32 %v1632, %v391
    %v1639 = vmul.f32 %v1635, %v395
    %1640 = vrot.lane.b32.xlu0 %v1497, 112
    %v1641 = vpop.permute.xlu0 %1640
    %1642 = vrot.lane.b32.xlu0 %v1499, 112
    %v1643 = vpop.permute.xlu0 %1642
    %1644 = vrot.lane.b32.xlu0 %v1538, 112
    %v1645 = vpop.permute.xlu0 %1644
    %1646 = vrot.lane.b32.xlu0 %v1540, 112
    %v1647 = vpop.permute.xlu0 %1646
    %v1648 = vsel %vm412, %v1645, %v1647
    %v1649 = vsel %vm412, %v1643, %v1645
    %v1650 = vsel %vm412, %v1641, %v1643
    %v1651 = vsel %vm412, %v1647, %v1641
    %v1652 = vmul.f32 %v1650, %v423
    %v1653 = vmul.f32 %v1649, %v427
    %v1654 = vmul.f32 %v1648, %v431
    %v1655 = vmul.f32 %v1651, %v435
    %1656 = vrot.lane.b32.xlu0 %v1497, 111
    %v1657 = vpop.permute.xlu0 %1656
    %1658 = vrot.lane.b32.xlu0 %v1499, 111
    %v1659 = vpop.permute.xlu0 %1658
    %1660 = vrot.lane.b32.xlu0 %v1538, 111
    %v1661 = vpop.permute.xlu0 %1660
    %1662 = vrot.lane.b32.xlu0 %v1540, 111
    %v1663 = vpop.permute.xlu0 %1662
    %v1664 = vsel %vm452, %v1661, %v1663
    %v1665 = vsel %vm452, %v1659, %v1661
    %v1666 = vsel %vm452, %v1657, %v1659
    %v1667 = vsel %vm452, %v1663, %v1657
    %v1668 = vmul.f32 %v1666, %v463
    %v1669 = vmul.f32 %v1665, %v467
    %v1670 = vmul.f32 %v1664, %v471
    %v1671 = vmul.f32 %v1667, %v475
    %s1672 = scalar_lea.vmem [#allocation9], 4
    %v1673 = vld [vmem:[%s1672] sm:$0xf]
    %v1674 = vpack.c.bf16 %v1572, %v1556
    %v1675 = vpack.c.bf16 %v1573, %v1557
    %v1676 = vpack.c.bf16 %v1574, %v1558
    %v1677 = vpack.c.bf16 %v1575, %v1559
    %v1678 = vpack.c.bf16 %v1604, %v1588
    %v1679 = vpack.c.bf16 %v1605, %v1589
    %v1680 = vpack.c.bf16 %v1606, %v1590
    %v1681 = vpack.c.bf16 %v1607, %v1591
    %v1682 = vpack.c.bf16 %v1620, %v1497
    %v1683 = vpack.c.bf16 %v1621, %v1499
    %v1684 = vpack.c.bf16 %v1622, %v1538
    %v1685 = vpack.c.bf16 %v1623, %v1540
    %v1686 = vpack.c.bf16 %v1652, %v1636
    %v1687 = vpack.c.bf16 %v1653, %v1637
    %v1688 = vpack.c.bf16 %v1654, %v1638
    %v1689 = vpack.c.bf16 %v1655, %v1639
    %v1690 = vpack.c.bf16 %v1668, %v1668
    %v1691 = vpack.c.bf16 %v1669, %v1669
    %v1692 = vpack.c.bf16 %v1670, %v1670
    %v1693 = vpack.c.bf16 %v1671, %v1671
    %s1694 = scalar_lea.vmem %s9, 8
    %v1695 = vld [vmem:[%s1694] sm:$0xff]
    %1697 = vset.pattern.permute.xlu0 0
    %1698 = vperm.xlu0 %1697, %v1695
    %v1699 = vpop.permute.xlu0 %1698
    %v1702 = vsel %vm511, %v1673, 0
    %v1705 = vsel %vm515, %v1690, 0
    %v1708 = vsel %vm515, %v1691, 0
    %v1711 = vsel %vm515, %v1692, 0
    %v1714 = vsel %vm515, %v1693, 0
    %1716 = vmatprep.subr.bf16.mxu0 0
    %1717 = vmatpush1.bf16.msra.mxu0 0
    %1718 = vmatprep.subr.bf16.mxu0 0
    %1719 = vmatpush1.bf16.msra.mxu0 0
    %1720 = vmatprep.subr.bf16.mxu0 0
    %1721 = vmatpush1.bf16.msra.mxu0 0
    %1722 = vmatprep.subr.bf16.mxu0 %v1708
    %1723 = vmatpush1.bf16.msra.mxu0 %v1705
    %1724 = vmatprep.subr.bf16.mxu0 %v1687
    %1725 = vmatpush1.bf16.msra.mxu0 %v1686
    %1726 = vmatprep.subr.bf16.mxu0 %v1683
    %1727 = vmatpush1.bf16.msra.mxu0 %v1682
    %1728 = vmatprep.subr.bf16.mxu0 %v1679
    %1729 = vmatpush1.bf16.msra.mxu0 %v1678
    %1730 = vmatprep.subr.bf16.mxu0 %v1675
    %1731 = vmatpush1.bf16.msra.mxu0 %v1674
    %1732 = vmatprep.subr.bf16.mxu0 0
    %1733 = vmatpush2.bf16.msra.mxu0 0
    %1734 = vmatprep.subr.bf16.mxu0 0
    %1735 = vmatpush2.bf16.msra.mxu0 0
    %1736 = vmatprep.subr.bf16.mxu0 0
    %1737 = vmatpush2.bf16.msra.mxu0 0
    %1738 = vmatprep.subr.bf16.mxu0 0
    %1739 = vmatpush2.bf16.msra.mxu0 0
    %1740 = vmatprep.subr.bf16.mxu0 0
    %1741 = vmatpush2.bf16.msra.mxu0 0
    %1742 = vmatprep.subr.bf16.mxu0 0
    %1743 = vmatpush2.bf16.msra.mxu0 0
    %1744 = vmatprep.subr.bf16.mxu0 0
    %1745 = vmatpush2.bf16.msra.mxu0 0
    %1746 = vmatprep.subr.bf16.mxu0 0
    %1747 = vmatpush2.bf16.msra.mxu0 0
    %1748 = vmatprep.mubr.bf16.mxu0 0
    %1749 = vmatmul.mubr.bf16.gmra.mxu0 %v1702
    %v1750 = vpop.f32.mrf.mxu0
    %v1751 = vadd.f32 %v1699, %v1750
    %v1752 = vpop.f32.mrf.mxu0
    %v1753 = vadd.f32 %v1699, %v1752
    %v1754 = vpop.f32.mrf.mxu0
    %v1755 = vpop.f32.mrf.mxu0
    %1756 = vdwg.mxu0
    %1757 = vmatprep.subr.bf16.mxu0 0
    %1758 = vmatpush1.bf16.msra.mxu0 0
    %1759 = vmatprep.subr.bf16.mxu0 0
    %1760 = vmatpush1.bf16.msra.mxu0 0
    %1761 = vmatprep.subr.bf16.mxu0 0
    %1762 = vmatpush1.bf16.msra.mxu0 0
    %1763 = vmatprep.subr.bf16.mxu0 %v1714
    %1764 = vmatpush1.bf16.msra.mxu0 %v1711
    %1765 = vmatprep.subr.bf16.mxu0 %v1689
    %1766 = vmatpush1.bf16.msra.mxu0 %v1688
    %1767 = vmatprep.subr.bf16.mxu0 %v1685
    %1768 = vmatpush1.bf16.msra.mxu0 %v1684
    %1769 = vmatprep.subr.bf16.mxu0 %v1681
    %1770 = vmatpush1.bf16.msra.mxu0 %v1680
    %1771 = vmatprep.subr.bf16.mxu0 %v1677
    %1772 = vmatpush1.bf16.msra.mxu0 %v1676
    %1773 = vmatprep.subr.bf16.mxu0 0
    %1774 = vmatpush2.bf16.msra.mxu0 0
    %1775 = vmatprep.subr.bf16.mxu0 0
    %1776 = vmatpush2.bf16.msra.mxu0 0
    %1777 = vmatprep.subr.bf16.mxu0 0
    %1778 = vmatpush2.bf16.msra.mxu0 0
    %1779 = vmatprep.subr.bf16.mxu0 0
    %1780 = vmatpush2.bf16.msra.mxu0 0
    %1781 = vmatprep.subr.bf16.mxu0 0
    %1782 = vmatpush2.bf16.msra.mxu0 0
    %1783 = vmatprep.subr.bf16.mxu0 0
    %1784 = vmatpush2.bf16.msra.mxu0 0
    %1785 = vmatprep.subr.bf16.mxu0 0
    %1786 = vmatpush2.bf16.msra.mxu0 0
    %1787 = vmatprep.subr.bf16.mxu0 0
    %1788 = vmatpush2.bf16.msra.mxu0 0
    %1789 = vmatprep.mubr.bf16.mxu0 0
    %1790 = vmatmul.mubr.bf16.gmra.mxu0 %v1702
    %v1791 = vpop.f32.mrf.mxu0
    %v1792 = vadd.f32 %v1699, %v1791
    %v1793 = vpop.f32.mrf.mxu0
    %v1794 = vadd.f32 %v1699, %v1793
    %v1795 = vpop.f32.mrf.mxu0
    %v1796 = vpop.f32.mrf.mxu0
    %1797 = vdwg.mxu0
    %v1798 = vadd.f32 %v1751, %v1200
    %v1799 = vadd.f32 %v1753, %v1201
    %v1800 = vadd.f32 %v1792, %v1202
    %v1801 = vadd.f32 %v1794, %v1203
    %1802 = vrot.lane.b32.xlu0 %v1798, 17
    %v1803 = vpop.permute.xlu0 %1802
    %1804 = vrot.lane.b32.xlu0 %v1799, 17
    %v1805 = vpop.permute.xlu0 %1804
    %1806 = vrot.lane.b32.xlu0 %v1800, 17
    %v1807 = vpop.permute.xlu0 %1806
    %1808 = vrot.lane.b32.xlu0 %v1801, 17
    %v1809 = vpop.permute.xlu0 %1808
    %v1810 = vsel %vm173, %v1807, %v1809
    %v1811 = vsel %vm173, %v1805, %v1807
    %v1812 = vsel %vm173, %v1803, %v1805
    %v1813 = vsel %vm173, %v1809, %v1803
    %v1814 = vmul.f32 %v1813, %v183
    %v1815 = vmul.f32 %v1812, %v187
    %v1816 = vmul.f32 %v1811, %v191
    %v1817 = vmul.f32 %v1810, %v195
    %1818 = vrot.lane.b32.xlu0 %v1798, 16
    %v1819 = vpop.permute.xlu0 %1818
    %1820 = vrot.lane.b32.xlu0 %v1799, 16
    %v1821 = vpop.permute.xlu0 %1820
    %1822 = vrot.lane.b32.xlu0 %v1800, 16
    %v1823 = vpop.permute.xlu0 %1822
    %1824 = vrot.lane.b32.xlu0 %v1801, 16
    %v1825 = vpop.permute.xlu0 %1824
    %v1826 = vsel %vm212, %v1823, %v1825
    %v1827 = vsel %vm212, %v1821, %v1823
    %v1828 = vsel %vm212, %v1819, %v1821
    %v1829 = vsel %vm212, %v1825, %v1819
    %v1830 = vmul.f32 %v1829, %v223
    %v1831 = vmul.f32 %v1828, %v227
    %v1832 = vmul.f32 %v1827, %v231
    %v1833 = vmul.f32 %v1826, %v235
    %1834 = vrot.lane.b32.xlu0 %v1798, 15
    %v1835 = vpop.permute.xlu0 %1834
    %1836 = vrot.lane.b32.xlu0 %v1799, 15
    %v1837 = vpop.permute.xlu0 %1836
    %1838 = vrot.lane.b32.xlu0 %v1800, 15
    %v1839 = vpop.permute.xlu0 %1838
    %1840 = vrot.lane.b32.xlu0 %v1801, 15
    %v1841 = vpop.permute.xlu0 %1840
    %v1842 = vsel %vm252, %v1839, %v1841
    %v1843 = vsel %vm252, %v1837, %v1839
    %v1844 = vsel %vm252, %v1835, %v1837
    %v1845 = vsel %vm252, %v1841, %v1835
    %v1846 = vmul.f32 %v1845, %v263
    %v1847 = vmul.f32 %v1844, %v267
    %v1848 = vmul.f32 %v1843, %v271
    %v1849 = vmul.f32 %v1842, %v275
    %1850 = vrot.lane.b32.xlu0 %v1798, 1
    %v1851 = vpop.permute.xlu0 %1850
    %1852 = vrot.lane.b32.xlu0 %v1799, 1
    %v1853 = vpop.permute.xlu0 %1852
    %1854 = vrot.lane.b32.xlu0 %v1800, 1
    %v1855 = vpop.permute.xlu0 %1854
    %1856 = vrot.lane.b32.xlu0 %v1801, 1
    %v1857 = vpop.permute.xlu0 %1856
    %v1858 = vsel %vm292, %v1855, %v1857
    %v1859 = vsel %vm292, %v1853, %v1855
    %v1860 = vsel %vm292, %v1851, %v1853
    %v1861 = vsel %vm292, %v1857, %v1851
    %v1862 = vmul.f32 %v1861, %v303
    %v1863 = vmul.f32 %v1860, %v307
    %v1864 = vmul.f32 %v1859, %v311
    %v1865 = vmul.f32 %v1858, %v315
    %1866 = vrot.lane.b32.xlu0 %v1798, 127
    %v1867 = vpop.permute.xlu0 %1866
    %1868 = vrot.lane.b32.xlu0 %v1799, 127
    %v1869 = vpop.permute.xlu0 %1868
    %1870 = vrot.lane.b32.xlu0 %v1800, 127
    %v1871 = vpop.permute.xlu0 %1870
    %1872 = vrot.lane.b32.xlu0 %v1801, 127
    %v1873 = vpop.permute.xlu0 %1872
    %v1874 = vsel %vm332, %v1871, %v1873
    %v1875 = vsel %vm332, %v1869, %v1871
    %v1876 = vsel %vm332, %v1867, %v1869
    %v1877 = vsel %vm332, %v1873, %v1867
    %v1878 = vmul.f32 %v1876, %v343
    %v1879 = vmul.f32 %v1875, %v347
    %v1880 = vmul.f32 %v1874, %v351
    %v1881 = vmul.f32 %v1877, %v355
    %1882 = vrot.lane.b32.xlu0 %v1798, 113
    %v1883 = vpop.permute.xlu0 %1882
    %1884 = vrot.lane.b32.xlu0 %v1799, 113
    %v1885 = vpop.permute.xlu0 %1884
    %1886 = vrot.lane.b32.xlu0 %v1800, 113
    %v1887 = vpop.permute.xlu0 %1886
    %1888 = vrot.lane.b32.xlu0 %v1801, 113
    %v1889 = vpop.permute.xlu0 %1888
    %v1890 = vsel %vm372, %v1887, %v1889
    %v1891 = vsel %vm372, %v1885, %v1887
    %v1892 = vsel %vm372, %v1883, %v1885
    %v1893 = vsel %vm372, %v1889, %v1883
    %v1894 = vmul.f32 %v1892, %v383
    %v1895 = vmul.f32 %v1891, %v387
    %v1896 = vmul.f32 %v1890, %v391
    %v1897 = vmul.f32 %v1893, %v395
    %1898 = vrot.lane.b32.xlu0 %v1798, 112
    %v1899 = vpop.permute.xlu0 %1898
    %1900 = vrot.lane.b32.xlu0 %v1799, 112
    %v1901 = vpop.permute.xlu0 %1900
    %1902 = vrot.lane.b32.xlu0 %v1800, 112
    %v1903 = vpop.permute.xlu0 %1902
    %1904 = vrot.lane.b32.xlu0 %v1801, 112
    %v1905 = vpop.permute.xlu0 %1904
    %v1906 = vsel %vm412, %v1903, %v1905
    %v1907 = vsel %vm412, %v1901, %v1903
    %v1908 = vsel %vm412, %v1899, %v1901
    %v1909 = vsel %vm412, %v1905, %v1899
    %v1910 = vmul.f32 %v1908, %v423
    %v1911 = vmul.f32 %v1907, %v427
    %v1912 = vmul.f32 %v1906, %v431
    %v1913 = vmul.f32 %v1909, %v435
    %1914 = vrot.lane.b32.xlu0 %v1798, 111
    %v1915 = vpop.permute.xlu0 %1914
    %1916 = vrot.lane.b32.xlu0 %v1799, 111
    %v1917 = vpop.permute.xlu0 %1916
    %1918 = vrot.lane.b32.xlu0 %v1800, 111
    %v1919 = vpop.permute.xlu0 %1918
    %1920 = vrot.lane.b32.xlu0 %v1801, 111
    %v1921 = vpop.permute.xlu0 %1920
    %v1922 = vsel %vm452, %v1919, %v1921
    %v1923 = vsel %vm452, %v1917, %v1919
    %v1924 = vsel %vm452, %v1915, %v1917
    %v1925 = vsel %vm452, %v1921, %v1915
    %v1926 = vmul.f32 %v1924, %v463
    %v1927 = vmul.f32 %v1923, %v467
    %v1928 = vmul.f32 %v1922, %v471
    %v1929 = vmul.f32 %v1925, %v475
    %1930 = vrot.lane.b32.xlu0 %v159, 34
    %v1931 = vpop.permute.xlu0 %1930
    %1932 = vrot.lane.b32.xlu0 %v160, 34
    %v1933 = vpop.permute.xlu0 %1932
    %1934 = vrot.lane.b32.xlu0 %v161, 34
    %v1935 = vpop.permute.xlu0 %1934
    %1936 = vrot.lane.b32.xlu0 %v162, 34
    %v1937 = vpop.permute.xlu0 %1936
    %vm1938 = vcmp.lt.s32.totalorder %v172, 34
    %v1939 = vsel %vm1938, %v1935, %v1937
    %v1940 = vsel %vm1938, %v1933, %v1935
    %v1941 = vsel %vm1938, %v1931, %v1933
    %v1942 = vsel %vm1938, %v1937, %v1931
    %s1943 = scalar_lea.vmem [#allocation2], 33
    %v1944 = vld [vmem:[%s1943] ss:$8 sm:$0xf]
    %v1946 = vlaneseq
    %v1947 = vshrl.u32 %v1946, 7
    %v1948 = vsub.s32 0, %v1947
    %v1949 = vrot.slane %v1944, %v1948
    %v1950 = vlaneseq
    %v1951 = vshrl.u32 %v1950, 7
    %v1952 = vsub.s32 1, %v1951
    %v1953 = vrot.slane %v1944, %v1952
    %v1954 = vlaneseq
    %v1955 = vshrl.u32 %v1954, 7
    %v1956 = vsub.s32 2, %v1955
    %v1957 = vrot.slane %v1944, %v1956
    %v1958 = vlaneseq
    %v1959 = vshrl.u32 %v1958, 7
    %v1960 = vsub.s32 3, %v1959
    %v1961 = vrot.slane %v1944, %v1960
    %v1966 = vmul.f32 %v1942, %v1949
    %v1967 = vmul.f32 %v1941, %v1953
    %v1968 = vmul.f32 %v1940, %v1957
    %v1969 = vmul.f32 %v1939, %v1961
    %1970 = vrot.lane.b32.xlu0 %v159, 33
    %v1971 = vpop.permute.xlu0 %1970
    %1972 = vrot.lane.b32.xlu0 %v160, 33
    %v1973 = vpop.permute.xlu0 %1972
    %1974 = vrot.lane.b32.xlu0 %v161, 33
    %v1975 = vpop.permute.xlu0 %1974
    %1976 = vrot.lane.b32.xlu0 %v162, 33
    %v1977 = vpop.permute.xlu0 %1976
    %vm1978 = vcmp.lt.s32.totalorder %v172, 33
    %v1979 = vsel %vm1978, %v1975, %v1977
    %v1980 = vsel %vm1978, %v1973, %v1975
    %v1981 = vsel %vm1978, %v1971, %v1973
    %v1982 = vsel %vm1978, %v1977, %v1971
    %s1983 = scalar_lea.vmem [#allocation2], 34
    %v1984 = vld [vmem:[%s1983] ss:$8 sm:$0xf]
    %v1986 = vlaneseq
    %v1987 = vshrl.u32 %v1986, 7
    %v1988 = vsub.s32 0, %v1987
    %v1989 = vrot.slane %v1984, %v1988
    %v1990 = vlaneseq
    %v1991 = vshrl.u32 %v1990, 7
    %v1992 = vsub.s32 1, %v1991
    %v1993 = vrot.slane %v1984, %v1992
    %v1994 = vlaneseq
    %v1995 = vshrl.u32 %v1994, 7
    %v1996 = vsub.s32 2, %v1995
    %v1997 = vrot.slane %v1984, %v1996
    %v1998 = vlaneseq
    %v1999 = vshrl.u32 %v1998, 7
    %v2000 = vsub.s32 3, %v1999
    %v2001 = vrot.slane %v1984, %v2000
    %v2006 = vmul.f32 %v1982, %v1989
    %v2007 = vmul.f32 %v1981, %v1993
    %v2008 = vmul.f32 %v1980, %v1997
    %v2009 = vmul.f32 %v1979, %v2001
    %2010 = vrot.lane.b32.xlu0 %v159, 32
    %v2011 = vpop.permute.xlu0 %2010
    %2012 = vrot.lane.b32.xlu0 %v160, 32
    %v2013 = vpop.permute.xlu0 %2012
    %2014 = vrot.lane.b32.xlu0 %v161, 32
    %v2015 = vpop.permute.xlu0 %2014
    %2016 = vrot.lane.b32.xlu0 %v162, 32
    %v2017 = vpop.permute.xlu0 %2016
    %vm2018 = vcmp.lt.s32.totalorder %v172, 32
    %v2019 = vsel %vm2018, %v2015, %v2017
    %v2020 = vsel %vm2018, %v2013, %v2015
    %v2021 = vsel %vm2018, %v2011, %v2013
    %v2022 = vsel %vm2018, %v2017, %v2011
    %s2023 = scalar_lea.vmem [#allocation2], 35
    %v2024 = vld [vmem:[%s2023] ss:$8 sm:$0xf]
    %v2026 = vlaneseq
    %v2027 = vshrl.u32 %v2026, 7
    %v2028 = vsub.s32 0, %v2027
    %v2029 = vrot.slane %v2024, %v2028
    %v2030 = vlaneseq
    %v2031 = vshrl.u32 %v2030, 7
    %v2032 = vsub.s32 1, %v2031
    %v2033 = vrot.slane %v2024, %v2032
    %v2034 = vlaneseq
    %v2035 = vshrl.u32 %v2034, 7
    %v2036 = vsub.s32 2, %v2035
    %v2037 = vrot.slane %v2024, %v2036
    %v2038 = vlaneseq
    %v2039 = vshrl.u32 %v2038, 7
    %v2040 = vsub.s32 3, %v2039
    %v2041 = vrot.slane %v2024, %v2040
    %v2046 = vmul.f32 %v2022, %v2029
    %v2047 = vmul.f32 %v2021, %v2033
    %v2048 = vmul.f32 %v2020, %v2037
    %v2049 = vmul.f32 %v2019, %v2041
    %2050 = vrot.lane.b32.xlu0 %v159, 31
    %v2051 = vpop.permute.xlu0 %2050
    %2052 = vrot.lane.b32.xlu0 %v160, 31
    %v2053 = vpop.permute.xlu0 %2052
    %2054 = vrot.lane.b32.xlu0 %v161, 31
    %v2055 = vpop.permute.xlu0 %2054
    %2056 = vrot.lane.b32.xlu0 %v162, 31
    %v2057 = vpop.permute.xlu0 %2056
    %vm2058 = vcmp.lt.s32.totalorder %v172, 31
    %v2059 = vsel %vm2058, %v2055, %v2057
    %v2060 = vsel %vm2058, %v2053, %v2055
    %v2061 = vsel %vm2058, %v2051, %v2053
    %v2062 = vsel %vm2058, %v2057, %v2051
    %s2063 = scalar_lea.vmem [#allocation2], 36
    %v2064 = vld [vmem:[%s2063] ss:$8 sm:$0xf]
    %v2066 = vlaneseq
    %v2067 = vshrl.u32 %v2066, 7
    %v2068 = vsub.s32 0, %v2067
    %v2069 = vrot.slane %v2064, %v2068
    %v2070 = vlaneseq
    %v2071 = vshrl.u32 %v2070, 7
    %v2072 = vsub.s32 1, %v2071
    %v2073 = vrot.slane %v2064, %v2072
    %v2074 = vlaneseq
    %v2075 = vshrl.u32 %v2074, 7
    %v2076 = vsub.s32 2, %v2075
    %v2077 = vrot.slane %v2064, %v2076
    %v2078 = vlaneseq
    %v2079 = vshrl.u32 %v2078, 7
    %v2080 = vsub.s32 3, %v2079
    %v2081 = vrot.slane %v2064, %v2080
    %v2086 = vmul.f32 %v2062, %v2069
    %v2087 = vmul.f32 %v2061, %v2073
    %v2088 = vmul.f32 %v2060, %v2077
    %v2089 = vmul.f32 %v2059, %v2081
    %2090 = vrot.lane.b32.xlu0 %v159, 30
    %v2091 = vpop.permute.xlu0 %2090
    %2092 = vrot.lane.b32.xlu0 %v160, 30
    %v2093 = vpop.permute.xlu0 %2092
    %2094 = vrot.lane.b32.xlu0 %v161, 30
    %v2095 = vpop.permute.xlu0 %2094
    %2096 = vrot.lane.b32.xlu0 %v162, 30
    %v2097 = vpop.permute.xlu0 %2096
    %vm2098 = vcmp.lt.s32.totalorder %v172, 30
    %v2099 = vsel %vm2098, %v2095, %v2097
    %v2100 = vsel %vm2098, %v2093, %v2095
    %v2101 = vsel %vm2098, %v2091, %v2093
    %v2102 = vsel %vm2098, %v2097, %v2091
    %s2103 = scalar_lea.vmem [#allocation2], 37
    %v2104 = vld [vmem:[%s2103] ss:$8 sm:$0xf]
    %v2106 = vlaneseq
    %v2107 = vshrl.u32 %v2106, 7
    %v2108 = vsub.s32 0, %v2107
    %v2109 = vrot.slane %v2104, %v2108
    %v2110 = vlaneseq
    %v2111 = vshrl.u32 %v2110, 7
    %v2112 = vsub.s32 1, %v2111
    %v2113 = vrot.slane %v2104, %v2112
    %v2114 = vlaneseq
    %v2115 = vshrl.u32 %v2114, 7
    %v2116 = vsub.s32 2, %v2115
    %v2117 = vrot.slane %v2104, %v2116
    %v2118 = vlaneseq
    %v2119 = vshrl.u32 %v2118, 7
    %v2120 = vsub.s32 3, %v2119
    %v2121 = vrot.slane %v2104, %v2120
    %v2126 = vmul.f32 %v2102, %v2109
    %v2127 = vmul.f32 %v2101, %v2113
    %v2128 = vmul.f32 %v2100, %v2117
    %v2129 = vmul.f32 %v2099, %v2121
    %2130 = vrot.lane.b32.xlu0 %v159, 18
    %v2131 = vpop.permute.xlu0 %2130
    %2132 = vrot.lane.b32.xlu0 %v160, 18
    %v2133 = vpop.permute.xlu0 %2132
    %2134 = vrot.lane.b32.xlu0 %v161, 18
    %v2135 = vpop.permute.xlu0 %2134
    %2136 = vrot.lane.b32.xlu0 %v162, 18
    %v2137 = vpop.permute.xlu0 %2136
    %vm2138 = vcmp.lt.s32.totalorder %v172, 18
    %v2139 = vsel %vm2138, %v2135, %v2137
    %v2140 = vsel %vm2138, %v2133, %v2135
    %v2141 = vsel %vm2138, %v2131, %v2133
    %v2142 = vsel %vm2138, %v2137, %v2131
    %s2143 = scalar_lea.vmem [#allocation2], 38
    %v2144 = vld [vmem:[%s2143] ss:$8 sm:$0xf]
    %v2146 = vlaneseq
    %v2147 = vshrl.u32 %v2146, 7
    %v2148 = vsub.s32 0, %v2147
    %v2149 = vrot.slane %v2144, %v2148
    %v2150 = vlaneseq
    %v2151 = vshrl.u32 %v2150, 7
    %v2152 = vsub.s32 1, %v2151
    %v2153 = vrot.slane %v2144, %v2152
    %v2154 = vlaneseq
    %v2155 = vshrl.u32 %v2154, 7
    %v2156 = vsub.s32 2, %v2155
    %v2157 = vrot.slane %v2144, %v2156
    %v2158 = vlaneseq
    %v2159 = vshrl.u32 %v2158, 7
    %v2160 = vsub.s32 3, %v2159
    %v2161 = vrot.slane %v2144, %v2160
    %v2166 = vmul.f32 %v2142, %v2149
    %v2167 = vmul.f32 %v2141, %v2153
    %v2168 = vmul.f32 %v2140, %v2157
    %v2169 = vmul.f32 %v2139, %v2161
    %2170 = vrot.lane.b32.xlu0 %v159, 14
    %v2171 = vpop.permute.xlu0 %2170
    %2172 = vrot.lane.b32.xlu0 %v160, 14
    %v2173 = vpop.permute.xlu0 %2172
    %2174 = vrot.lane.b32.xlu0 %v161, 14
    %v2175 = vpop.permute.xlu0 %2174
    %2176 = vrot.lane.b32.xlu0 %v162, 14
    %v2177 = vpop.permute.xlu0 %2176
    %vm2178 = vcmp.lt.s32.totalorder %v172, 14
    %v2179 = vsel %vm2178, %v2175, %v2177
    %v2180 = vsel %vm2178, %v2173, %v2175
    %v2181 = vsel %vm2178, %v2171, %v2173
    %v2182 = vsel %vm2178, %v2177, %v2171
    %s2183 = scalar_lea.vmem [#allocation2], 39
    %v2184 = vld [vmem:[%s2183] ss:$8 sm:$0xf]
    %v2186 = vlaneseq
    %v2187 = vshrl.u32 %v2186, 7
    %v2188 = vsub.s32 0, %v2187
    %v2189 = vrot.slane %v2184, %v2188
    %v2190 = vlaneseq
    %v2191 = vshrl.u32 %v2190, 7
    %v2192 = vsub.s32 1, %v2191
    %v2193 = vrot.slane %v2184, %v2192
    %v2194 = vlaneseq
    %v2195 = vshrl.u32 %v2194, 7
    %v2196 = vsub.s32 2, %v2195
    %v2197 = vrot.slane %v2184, %v2196
    %v2198 = vlaneseq
    %v2199 = vshrl.u32 %v2198, 7
    %v2200 = vsub.s32 3, %v2199
    %v2201 = vrot.slane %v2184, %v2200
    %v2206 = vmul.f32 %v2182, %v2189
    %v2207 = vmul.f32 %v2181, %v2193
    %v2208 = vmul.f32 %v2180, %v2197
    %v2209 = vmul.f32 %v2179, %v2201
    %2210 = vrot.lane.b32.xlu0 %v159, 2
    %v2211 = vpop.permute.xlu0 %2210
    %2212 = vrot.lane.b32.xlu0 %v160, 2
    %v2213 = vpop.permute.xlu0 %2212
    %2214 = vrot.lane.b32.xlu0 %v161, 2
    %v2215 = vpop.permute.xlu0 %2214
    %2216 = vrot.lane.b32.xlu0 %v162, 2
    %v2217 = vpop.permute.xlu0 %2216
    %vm2218 = vcmp.lt.s32.totalorder %v172, 2
    %v2219 = vsel %vm2218, %v2215, %v2217
    %v2220 = vsel %vm2218, %v2213, %v2215
    %v2221 = vsel %vm2218, %v2211, %v2213
    %v2222 = vsel %vm2218, %v2217, %v2211
    %s2223 = scalar_lea.vmem [#allocation2], 64
    %v2224 = vld [vmem:[%s2223] ss:$8 sm:$0xf]
    %v2226 = vlaneseq
    %v2227 = vshrl.u32 %v2226, 7
    %v2228 = vsub.s32 0, %v2227
    %v2229 = vrot.slane %v2224, %v2228
    %v2230 = vlaneseq
    %v2231 = vshrl.u32 %v2230, 7
    %v2232 = vsub.s32 1, %v2231
    %v2233 = vrot.slane %v2224, %v2232
    %v2234 = vlaneseq
    %v2235 = vshrl.u32 %v2234, 7
    %v2236 = vsub.s32 2, %v2235
    %v2237 = vrot.slane %v2224, %v2236
    %v2238 = vlaneseq
    %v2239 = vshrl.u32 %v2238, 7
    %v2240 = vsub.s32 3, %v2239
    %v2241 = vrot.slane %v2224, %v2240
    %v2246 = vmul.f32 %v2222, %v2229
    %v2247 = vmul.f32 %v2221, %v2233
    %v2248 = vmul.f32 %v2220, %v2237
    %v2249 = vmul.f32 %v2219, %v2241
    %2250 = vrot.lane.b32.xlu0 %v159, 126
    %v2251 = vpop.permute.xlu0 %2250
    %2252 = vrot.lane.b32.xlu0 %v160, 126
    %v2253 = vpop.permute.xlu0 %2252
    %2254 = vrot.lane.b32.xlu0 %v161, 126
    %v2255 = vpop.permute.xlu0 %2254
    %2256 = vrot.lane.b32.xlu0 %v162, 126
    %v2257 = vpop.permute.xlu0 %2256
    %vm2258 = vcmp.lt.s32.totalorder %v172, 126
    %v2259 = vsel %vm2258, %v2255, %v2257
    %v2260 = vsel %vm2258, %v2253, %v2255
    %v2261 = vsel %vm2258, %v2251, %v2253
    %v2262 = vsel %vm2258, %v2257, %v2251
    %s2263 = scalar_lea.vmem [#allocation2], 65
    %v2264 = vld [vmem:[%s2263] ss:$8 sm:$0xf]
    %v2266 = vlaneseq
    %v2267 = vshrl.u32 %v2266, 7
    %v2268 = vsub.s32 0, %v2267
    %v2269 = vrot.slane %v2264, %v2268
    %v2270 = vlaneseq
    %v2271 = vshrl.u32 %v2270, 7
    %v2272 = vsub.s32 1, %v2271
    %v2273 = vrot.slane %v2264, %v2272
    %v2274 = vlaneseq
    %v2275 = vshrl.u32 %v2274, 7
    %v2276 = vsub.s32 2, %v2275
    %v2277 = vrot.slane %v2264, %v2276
    %v2278 = vlaneseq
    %v2279 = vshrl.u32 %v2278, 7
    %v2280 = vsub.s32 3, %v2279
    %v2281 = vrot.slane %v2264, %v2280
    %v2286 = vmul.f32 %v2261, %v2269
    %v2287 = vmul.f32 %v2260, %v2273
    %v2288 = vmul.f32 %v2259, %v2277
    %v2289 = vmul.f32 %v2262, %v2281
    %2290 = vrot.lane.b32.xlu0 %v159, 114
    %v2291 = vpop.permute.xlu0 %2290
    %2292 = vrot.lane.b32.xlu0 %v160, 114
    %v2293 = vpop.permute.xlu0 %2292
    %2294 = vrot.lane.b32.xlu0 %v161, 114
    %v2295 = vpop.permute.xlu0 %2294
    %2296 = vrot.lane.b32.xlu0 %v162, 114
    %v2297 = vpop.permute.xlu0 %2296
    %vm2298 = vcmp.lt.s32.totalorder %v172, 114
    %v2299 = vsel %vm2298, %v2295, %v2297
    %v2300 = vsel %vm2298, %v2293, %v2295
    %v2301 = vsel %vm2298, %v2291, %v2293
    %v2302 = vsel %vm2298, %v2297, %v2291
    %s2303 = scalar_lea.vmem [#allocation2], 66
    %v2304 = vld [vmem:[%s2303] ss:$8 sm:$0xf]
    %v2306 = vlaneseq
    %v2307 = vshrl.u32 %v2306, 7
    %v2308 = vsub.s32 0, %v2307
    %v2309 = vrot.slane %v2304, %v2308
    %v2310 = vlaneseq
    %v2311 = vshrl.u32 %v2310, 7
    %v2312 = vsub.s32 1, %v2311
    %v2313 = vrot.slane %v2304, %v2312
    %v2314 = vlaneseq
    %v2315 = vshrl.u32 %v2314, 7
    %v2316 = vsub.s32 2, %v2315
    %v2317 = vrot.slane %v2304, %v2316
    %v2318 = vlaneseq
    %v2319 = vshrl.u32 %v2318, 7
    %v2320 = vsub.s32 3, %v2319
    %v2321 = vrot.slane %v2304, %v2320
    %v2326 = vmul.f32 %v2301, %v2309
    %v2327 = vmul.f32 %v2300, %v2313
    %v2328 = vmul.f32 %v2299, %v2317
    %v2329 = vmul.f32 %v2302, %v2321
    %2330 = vrot.lane.b32.xlu0 %v159, 110
    %v2331 = vpop.permute.xlu0 %2330
    %2332 = vrot.lane.b32.xlu0 %v160, 110
    %v2333 = vpop.permute.xlu0 %2332
    %2334 = vrot.lane.b32.xlu0 %v161, 110
    %v2335 = vpop.permute.xlu0 %2334
    %2336 = vrot.lane.b32.xlu0 %v162, 110
    %v2337 = vpop.permute.xlu0 %2336
    %vm2338 = vcmp.lt.s32.totalorder %v172, 110
    %v2339 = vsel %vm2338, %v2335, %v2337
    %v2340 = vsel %vm2338, %v2333, %v2335
    %v2341 = vsel %vm2338, %v2331, %v2333
    %v2342 = vsel %vm2338, %v2337, %v2331
    %s2343 = scalar_lea.vmem [#allocation2], 67
    %v2344 = vld [vmem:[%s2343] ss:$8 sm:$0xf]
    %v2346 = vlaneseq
    %v2347 = vshrl.u32 %v2346, 7
    %v2348 = vsub.s32 0, %v2347
    %v2349 = vrot.slane %v2344, %v2348
    %v2350 = vlaneseq
    %v2351 = vshrl.u32 %v2350, 7
    %v2352 = vsub.s32 1, %v2351
    %v2353 = vrot.slane %v2344, %v2352
    %v2354 = vlaneseq
    %v2355 = vshrl.u32 %v2354, 7
    %v2356 = vsub.s32 2, %v2355
    %v2357 = vrot.slane %v2344, %v2356
    %v2358 = vlaneseq
    %v2359 = vshrl.u32 %v2358, 7
    %v2360 = vsub.s32 3, %v2359
    %v2361 = vrot.slane %v2344, %v2360
    %v2366 = vmul.f32 %v2341, %v2349
    %v2367 = vmul.f32 %v2340, %v2353
    %v2368 = vmul.f32 %v2339, %v2357
    %v2369 = vmul.f32 %v2342, %v2361
    %2370 = vrot.lane.b32.xlu0 %v159, 98
    %v2371 = vpop.permute.xlu0 %2370
    %2372 = vrot.lane.b32.xlu0 %v160, 98
    %v2373 = vpop.permute.xlu0 %2372
    %2374 = vrot.lane.b32.xlu0 %v161, 98
    %v2375 = vpop.permute.xlu0 %2374
    %2376 = vrot.lane.b32.xlu0 %v162, 98
    %v2377 = vpop.permute.xlu0 %2376
    %vm2378 = vcmp.lt.s32.totalorder %v172, 98
    %v2379 = vsel %vm2378, %v2375, %v2377
    %v2380 = vsel %vm2378, %v2373, %v2375
    %v2381 = vsel %vm2378, %v2371, %v2373
    %v2382 = vsel %vm2378, %v2377, %v2371
    %s2383 = scalar_lea.vmem [#allocation2], 68
    %v2384 = vld [vmem:[%s2383] ss:$8 sm:$0xf]
    %v2386 = vlaneseq
    %v2387 = vshrl.u32 %v2386, 7
    %v2388 = vsub.s32 0, %v2387
    %v2389 = vrot.slane %v2384, %v2388
    %v2390 = vlaneseq
    %v2391 = vshrl.u32 %v2390, 7
    %v2392 = vsub.s32 1, %v2391
    %v2393 = vrot.slane %v2384, %v2392
    %v2394 = vlaneseq
    %v2395 = vshrl.u32 %v2394, 7
    %v2396 = vsub.s32 2, %v2395
    %v2397 = vrot.slane %v2384, %v2396
    %v2398 = vlaneseq
    %v2399 = vshrl.u32 %v2398, 7
    %v2400 = vsub.s32 3, %v2399
    %v2401 = vrot.slane %v2384, %v2400
    %v2406 = vmul.f32 %v2381, %v2389
    %v2407 = vmul.f32 %v2380, %v2393
    %v2408 = vmul.f32 %v2379, %v2397
    %v2409 = vmul.f32 %v2382, %v2401
    %2410 = vrot.lane.b32.xlu0 %v159, 97
    %v2411 = vpop.permute.xlu0 %2410
    %2412 = vrot.lane.b32.xlu0 %v160, 97
    %v2413 = vpop.permute.xlu0 %2412
    %2414 = vrot.lane.b32.xlu0 %v161, 97
    %v2415 = vpop.permute.xlu0 %2414
    %2416 = vrot.lane.b32.xlu0 %v162, 97
    %v2417 = vpop.permute.xlu0 %2416
    %vm2418 = vcmp.lt.s32.totalorder %v172, 97
    %v2419 = vsel %vm2418, %v2415, %v2417
    %v2420 = vsel %vm2418, %v2413, %v2415
    %v2421 = vsel %vm2418, %v2411, %v2413
    %v2422 = vsel %vm2418, %v2417, %v2411
    %s2423 = scalar_lea.vmem [#allocation2], 69
    %v2424 = vld [vmem:[%s2423] ss:$8 sm:$0xf]
    %v2426 = vlaneseq
    %v2427 = vshrl.u32 %v2426, 7
    %v2428 = vsub.s32 0, %v2427
    %v2429 = vrot.slane %v2424, %v2428
    %v2430 = vlaneseq
    %v2431 = vshrl.u32 %v2430, 7
    %v2432 = vsub.s32 1, %v2431
    %v2433 = vrot.slane %v2424, %v2432
    %v2434 = vlaneseq
    %v2435 = vshrl.u32 %v2434, 7
    %v2436 = vsub.s32 2, %v2435
    %v2437 = vrot.slane %v2424, %v2436
    %v2438 = vlaneseq
    %v2439 = vshrl.u32 %v2438, 7
    %v2440 = vsub.s32 3, %v2439
    %v2441 = vrot.slane %v2424, %v2440
    %v2446 = vmul.f32 %v2421, %v2429
    %v2447 = vmul.f32 %v2420, %v2433
    %v2448 = vmul.f32 %v2419, %v2437
    %v2449 = vmul.f32 %v2422, %v2441
    %2450 = vrot.lane.b32.xlu0 %v159, 96
    %v2451 = vpop.permute.xlu0 %2450
    %2452 = vrot.lane.b32.xlu0 %v160, 96
    %v2453 = vpop.permute.xlu0 %2452
    %2454 = vrot.lane.b32.xlu0 %v161, 96
    %v2455 = vpop.permute.xlu0 %2454
    %2456 = vrot.lane.b32.xlu0 %v162, 96
    %v2457 = vpop.permute.xlu0 %2456
    %vm2458 = vcmp.lt.s32.totalorder %v172, 96
    %v2459 = vsel %vm2458, %v2455, %v2457
    %v2460 = vsel %vm2458, %v2453, %v2455
    %v2461 = vsel %vm2458, %v2451, %v2453
    %v2462 = vsel %vm2458, %v2457, %v2451
    %s2463 = scalar_lea.vmem [#allocation2], 70
    %v2464 = vld [vmem:[%s2463] ss:$8 sm:$0xf]
    %v2466 = vlaneseq
    %v2467 = vshrl.u32 %v2466, 7
    %v2468 = vsub.s32 0, %v2467
    %v2469 = vrot.slane %v2464, %v2468
    %v2470 = vlaneseq
    %v2471 = vshrl.u32 %v2470, 7
    %v2472 = vsub.s32 1, %v2471
    %v2473 = vrot.slane %v2464, %v2472
    %v2474 = vlaneseq
    %v2475 = vshrl.u32 %v2474, 7
    %v2476 = vsub.s32 2, %v2475
    %v2477 = vrot.slane %v2464, %v2476
    %v2478 = vlaneseq
    %v2479 = vshrl.u32 %v2478, 7
    %v2480 = vsub.s32 3, %v2479
    %v2481 = vrot.slane %v2464, %v2480
    %v2486 = vmul.f32 %v2461, %v2469
    %v2487 = vmul.f32 %v2460, %v2473
    %v2488 = vmul.f32 %v2459, %v2477
    %v2489 = vmul.f32 %v2462, %v2481
    %2490 = vrot.lane.b32.xlu0 %v159, 95
    %v2491 = vpop.permute.xlu0 %2490
    %2492 = vrot.lane.b32.xlu0 %v160, 95
    %v2493 = vpop.permute.xlu0 %2492
    %2494 = vrot.lane.b32.xlu0 %v161, 95
    %v2495 = vpop.permute.xlu0 %2494
    %2496 = vrot.lane.b32.xlu0 %v162, 95
    %v2497 = vpop.permute.xlu0 %2496
    %vm2498 = vcmp.lt.s32.totalorder %v172, 95
    %v2499 = vsel %vm2498, %v2495, %v2497
    %v2500 = vsel %vm2498, %v2493, %v2495
    %v2501 = vsel %vm2498, %v2491, %v2493
    %v2502 = vsel %vm2498, %v2497, %v2491
    %s2503 = scalar_lea.vmem [#allocation2], 71
    %v2504 = vld [vmem:[%s2503] ss:$8 sm:$0xf]
    %v2506 = vlaneseq
    %v2507 = vshrl.u32 %v2506, 7
    %v2508 = vsub.s32 0, %v2507
    %v2509 = vrot.slane %v2504, %v2508
    %v2510 = vlaneseq
    %v2511 = vshrl.u32 %v2510, 7
    %v2512 = vsub.s32 1, %v2511
    %v2513 = vrot.slane %v2504, %v2512
    %v2514 = vlaneseq
    %v2515 = vshrl.u32 %v2514, 7
    %v2516 = vsub.s32 2, %v2515
    %v2517 = vrot.slane %v2504, %v2516
    %v2518 = vlaneseq
    %v2519 = vshrl.u32 %v2518, 7
    %v2520 = vsub.s32 3, %v2519
    %v2521 = vrot.slane %v2504, %v2520
    %v2526 = vmul.f32 %v2501, %v2509
    %v2527 = vmul.f32 %v2500, %v2513
    %v2528 = vmul.f32 %v2499, %v2517
    %v2529 = vmul.f32 %v2502, %v2521
    %2530 = vrot.lane.b32.xlu0 %v159, 94
    %v2531 = vpop.permute.xlu0 %2530
    %2532 = vrot.lane.b32.xlu0 %v160, 94
    %v2533 = vpop.permute.xlu0 %2532
    %2534 = vrot.lane.b32.xlu0 %v161, 94
    %v2535 = vpop.permute.xlu0 %2534
    %2536 = vrot.lane.b32.xlu0 %v162, 94
    %v2537 = vpop.permute.xlu0 %2536
    %vm2538 = vcmp.lt.s32.totalorder %v172, 94
    %v2539 = vsel %vm2538, %v2535, %v2537
    %v2540 = vsel %vm2538, %v2533, %v2535
    %v2541 = vsel %vm2538, %v2531, %v2533
    %v2542 = vsel %vm2538, %v2537, %v2531
    %s2543 = scalar_lea.vmem [#allocation2], 96
    %v2544 = vld [vmem:[%s2543] ss:$8 sm:$0xf]
    %v2546 = vlaneseq
    %v2547 = vshrl.u32 %v2546, 7
    %v2548 = vsub.s32 0, %v2547
    %v2549 = vrot.slane %v2544, %v2548
    %v2550 = vlaneseq
    %v2551 = vshrl.u32 %v2550, 7
    %v2552 = vsub.s32 1, %v2551
    %v2553 = vrot.slane %v2544, %v2552
    %v2554 = vlaneseq
    %v2555 = vshrl.u32 %v2554, 7
    %v2556 = vsub.s32 2, %v2555
    %v2557 = vrot.slane %v2544, %v2556
    %v2558 = vlaneseq
    %v2559 = vshrl.u32 %v2558, 7
    %v2560 = vsub.s32 3, %v2559
    %v2561 = vrot.slane %v2544, %v2560
    %v2566 = vmul.f32 %v2541, %v2549
    %v2567 = vmul.f32 %v2540, %v2553
    %v2568 = vmul.f32 %v2539, %v2557
    %v2569 = vmul.f32 %v2542, %v2561
    %v2570 = vld [vmem:[#allocation10] sm:$0xf]
    %v2571 = vld [vmem:[#allocation10 + $0x4] sm:$0xf]
    %v2572 = vpack.c.bf16 %v1830, %v1814
    %v2573 = vpack.c.bf16 %v1831, %v1815
    %v2574 = vpack.c.bf16 %v1832, %v1816
    %v2575 = vpack.c.bf16 %v1833, %v1817
    %v2576 = vpack.c.bf16 %v1862, %v1846
    %v2577 = vpack.c.bf16 %v1863, %v1847
    %v2578 = vpack.c.bf16 %v1864, %v1848
    %v2579 = vpack.c.bf16 %v1865, %v1849
    %v2580 = vpack.c.bf16 %v1878, %v1798
    %v2581 = vpack.c.bf16 %v1879, %v1799
    %v2582 = vpack.c.bf16 %v1880, %v1800
    %v2583 = vpack.c.bf16 %v1881, %v1801
    %v2584 = vpack.c.bf16 %v1910, %v1894
    %v2585 = vpack.c.bf16 %v1911, %v1895
    %v2586 = vpack.c.bf16 %v1912, %v1896
    %v2587 = vpack.c.bf16 %v1913, %v1897
    %v2588 = vpack.c.bf16 %v1926, %v1926
    %v2589 = vpack.c.bf16 %v1927, %v1927
    %v2590 = vpack.c.bf16 %v1928, %v1928
    %v2591 = vpack.c.bf16 %v1929, %v1929
    %v2592 = vld [vmem:[#allocation12] sm:$0xf]
    %v2593 = vld [vmem:[#allocation12 + $0x4] sm:$0xf]
    %v2596 = vunpack.c.l.b16 %v2592
    %v2597 = vunpack.c.l.b16 %v2593
    %v2598 = vpack.c.b16 %v2597, %v2596
    %v2600 = vsel %vm511, %v2598, 0
    %2602 = vmatprep.subr.bf16.mxu0 0
    %2603 = vmatpush1.bf16.msra.mxu0 0
    %2604 = vmatprep.subr.bf16.mxu0 0
    %2605 = vmatpush1.bf16.msra.mxu0 0
    %2606 = vmatprep.subr.bf16.mxu0 0
    %2607 = vmatpush1.bf16.msra.mxu0 0
    %2608 = vmatprep.subr.bf16.mxu0 %v520
    %2609 = vmatpush1.bf16.msra.mxu0 %v517
    %2610 = vmatprep.subr.bf16.mxu0 %v497
    %2611 = vmatpush1.bf16.msra.mxu0 %v496
    %2612 = vmatprep.subr.bf16.mxu0 %v493
    %2613 = vmatpush1.bf16.msra.mxu0 %v492
    %2614 = vmatprep.subr.bf16.mxu0 %v489
    %2615 = vmatpush1.bf16.msra.mxu0 %v488
    %2616 = vmatprep.subr.bf16.mxu0 %v485
    %2617 = vmatpush1.bf16.msra.mxu0 %v484
    %2618 = vmatprep.subr.bf16.mxu0 0
    %2619 = vmatpush2.bf16.msra.mxu0 0
    %2620 = vmatprep.subr.bf16.mxu0 0
    %2621 = vmatpush2.bf16.msra.mxu0 0
    %2622 = vmatprep.subr.bf16.mxu0 0
    %2623 = vmatpush2.bf16.msra.mxu0 0
    %2624 = vmatprep.subr.bf16.mxu0 0
    %2625 = vmatpush2.bf16.msra.mxu0 0
    %2626 = vmatprep.subr.bf16.mxu0 0
    %2627 = vmatpush2.bf16.msra.mxu0 0
    %2628 = vmatprep.subr.bf16.mxu0 0
    %2629 = vmatpush2.bf16.msra.mxu0 0
    %2630 = vmatprep.subr.bf16.mxu0 0
    %2631 = vmatpush2.bf16.msra.mxu0 0
    %2632 = vmatprep.subr.bf16.mxu0 0
    %2633 = vmatpush2.bf16.msra.mxu0 0
    %2634 = vmatprep.mubr.bf16.mxu0 0
    %2635 = vmatmul.mubr.bf16.gmra.mxu0 %v2600
    %v2636 = vpop.f32.mrf.mxu0
    %v2637 = vadd.f32 0.0, %v2636
    %v2638 = vpop.f32.mrf.mxu0
    %v2639 = vadd.f32 0.0, %v2638
    %v2640 = vpop.f32.mrf.mxu0
    %v2641 = vadd.f32 0.0, %v2640
    %v2642 = vpop.f32.mrf.mxu0
    %v2643 = vadd.f32 0.0, %v2642
    %2644 = vdwg.mxu0
    %2645 = vmatprep.subr.bf16.mxu0 0
    %2646 = vmatpush1.bf16.msra.mxu0 0
    %2647 = vmatprep.subr.bf16.mxu0 0
    %2648 = vmatpush1.bf16.msra.mxu0 0
    %2649 = vmatprep.subr.bf16.mxu0 0
    %2650 = vmatpush1.bf16.msra.mxu0 0
    %2651 = vmatprep.subr.bf16.mxu0 %v526
    %2652 = vmatpush1.bf16.msra.mxu0 %v523
    %2653 = vmatprep.subr.bf16.mxu0 %v499
    %2654 = vmatpush1.bf16.msra.mxu0 %v498
    %2655 = vmatprep.subr.bf16.mxu0 %v495
    %2656 = vmatpush1.bf16.msra.mxu0 %v494
    %2657 = vmatprep.subr.bf16.mxu0 %v491
    %2658 = vmatpush1.bf16.msra.mxu0 %v490
    %2659 = vmatprep.subr.bf16.mxu0 %v487
    %2660 = vmatpush1.bf16.msra.mxu0 %v486
    %2661 = vmatprep.subr.bf16.mxu0 0
    %2662 = vmatpush2.bf16.msra.mxu0 0
    %2663 = vmatprep.subr.bf16.mxu0 0
    %2664 = vmatpush2.bf16.msra.mxu0 0
    %2665 = vmatprep.subr.bf16.mxu0 0
    %2666 = vmatpush2.bf16.msra.mxu0 0
    %2667 = vmatprep.subr.bf16.mxu0 0
    %2668 = vmatpush2.bf16.msra.mxu0 0
    %2669 = vmatprep.subr.bf16.mxu0 0
    %2670 = vmatpush2.bf16.msra.mxu0 0
    %2671 = vmatprep.subr.bf16.mxu0 0
    %2672 = vmatpush2.bf16.msra.mxu0 0
    %2673 = vmatprep.subr.bf16.mxu0 0
    %2674 = vmatpush2.bf16.msra.mxu0 0
    %2675 = vmatprep.subr.bf16.mxu0 0
    %2676 = vmatpush2.bf16.msra.mxu0 0
    %2677 = vmatprep.mubr.bf16.mxu0 0
    %2678 = vmatmul.mubr.bf16.gmra.mxu0 %v2600
    %v2679 = vpop.f32.mrf.mxu0
    %v2680 = vadd.f32 0.0, %v2679
    %v2681 = vpop.f32.mrf.mxu0
    %v2682 = vadd.f32 0.0, %v2681
    %v2683 = vpop.f32.mrf.mxu0
    %v2684 = vadd.f32 0.0, %v2683
    %v2685 = vpop.f32.mrf.mxu0
    %v2686 = vadd.f32 0.0, %v2685
    %2687 = vdwg.mxu0
    %v2690 = vunpack.c.l.b16 %v2570
    %v2691 = vunpack.c.l.b16 %v2571
    %v2692 = vpack.c.b16 %v2691, %v2690
    %v2694 = vsel %vm511, %v2692, 0
    %v2697 = vsel %vm515, %v2588, 0
    %v2700 = vsel %vm515, %v2589, 0
    %v2703 = vsel %vm515, %v2590, 0
    %v2706 = vsel %vm515, %v2591, 0
    %2708 = vmatprep.subr.bf16.mxu0 0
    %2709 = vmatpush1.bf16.msra.mxu0 0
    %2710 = vmatprep.subr.bf16.mxu0 0
    %2711 = vmatpush1.bf16.msra.mxu0 0
    %2712 = vmatprep.subr.bf16.mxu0 0
    %2713 = vmatpush1.bf16.msra.mxu0 0
    %2714 = vmatprep.subr.bf16.mxu0 %v2700
    %2715 = vmatpush1.bf16.msra.mxu0 %v2697
    %2716 = vmatprep.subr.bf16.mxu0 %v2585
    %2717 = vmatpush1.bf16.msra.mxu0 %v2584
    %2718 = vmatprep.subr.bf16.mxu0 %v2581
    %2719 = vmatpush1.bf16.msra.mxu0 %v2580
    %2720 = vmatprep.subr.bf16.mxu0 %v2577
    %2721 = vmatpush1.bf16.msra.mxu0 %v2576
    %2722 = vmatprep.subr.bf16.mxu0 %v2573
    %2723 = vmatpush1.bf16.msra.mxu0 %v2572
    %2724 = vmatprep.subr.bf16.mxu0 0
    %2725 = vmatpush2.bf16.msra.mxu0 0
    %2726 = vmatprep.subr.bf16.mxu0 0
    %2727 = vmatpush2.bf16.msra.mxu0 0
    %2728 = vmatprep.subr.bf16.mxu0 0
    %2729 = vmatpush2.bf16.msra.mxu0 0
    %2730 = vmatprep.subr.bf16.mxu0 0
    %2731 = vmatpush2.bf16.msra.mxu0 0
    %2732 = vmatprep.subr.bf16.mxu0 0
    %2733 = vmatpush2.bf16.msra.mxu0 0
    %2734 = vmatprep.subr.bf16.mxu0 0
    %2735 = vmatpush2.bf16.msra.mxu0 0
    %2736 = vmatprep.subr.bf16.mxu0 0
    %2737 = vmatpush2.bf16.msra.mxu0 0
    %2738 = vmatprep.subr.bf16.mxu0 0
    %2739 = vmatpush2.bf16.msra.mxu0 0
    %2740 = vmatprep.mubr.bf16.mxu0 0
    %2741 = vmatmul.mubr.bf16.gmra.mxu0 %v2694
    %v2742 = vpop.f32.mrf.mxu0
    %v2743 = vadd.f32 %v2637, %v2742
    %v2744 = vpop.f32.mrf.mxu0
    %v2745 = vadd.f32 %v2639, %v2744
    %v2746 = vpop.f32.mrf.mxu0
    %v2747 = vadd.f32 %v2641, %v2746
    %v2748 = vpop.f32.mrf.mxu0
    %v2749 = vadd.f32 %v2643, %v2748
    %2750 = vdwg.mxu0
    %2751 = vmatprep.subr.bf16.mxu0 0
    %2752 = vmatpush1.bf16.msra.mxu0 0
    %2753 = vmatprep.subr.bf16.mxu0 0
    %2754 = vmatpush1.bf16.msra.mxu0 0
    %2755 = vmatprep.subr.bf16.mxu0 0
    %2756 = vmatpush1.bf16.msra.mxu0 0
    %2757 = vmatprep.subr.bf16.mxu0 %v2706
    %2758 = vmatpush1.bf16.msra.mxu0 %v2703
    %2759 = vmatprep.subr.bf16.mxu0 %v2587
    %2760 = vmatpush1.bf16.msra.mxu0 %v2586
    %2761 = vmatprep.subr.bf16.mxu0 %v2583
    %2762 = vmatpush1.bf16.msra.mxu0 %v2582
    %2763 = vmatprep.subr.bf16.mxu0 %v2579
    %2764 = vmatpush1.bf16.msra.mxu0 %v2578
    %2765 = vmatprep.subr.bf16.mxu0 %v2575
    %2766 = vmatpush1.bf16.msra.mxu0 %v2574
    %2767 = vmatprep.subr.bf16.mxu0 0
    %2768 = vmatpush2.bf16.msra.mxu0 0
    %2769 = vmatprep.subr.bf16.mxu0 0
    %2770 = vmatpush2.bf16.msra.mxu0 0
    %2771 = vmatprep.subr.bf16.mxu0 0
    %2772 = vmatpush2.bf16.msra.mxu0 0
    %2773 = vmatprep.subr.bf16.mxu0 0
    %2774 = vmatpush2.bf16.msra.mxu0 0
    %2775 = vmatprep.subr.bf16.mxu0 0
    %2776 = vmatpush2.bf16.msra.mxu0 0
    %2777 = vmatprep.subr.bf16.mxu0 0
    %2778 = vmatpush2.bf16.msra.mxu0 0
    %2779 = vmatprep.subr.bf16.mxu0 0
    %2780 = vmatpush2.bf16.msra.mxu0 0
    %2781 = vmatprep.subr.bf16.mxu0 0
    %2782 = vmatpush2.bf16.msra.mxu0 0
    %2783 = vmatprep.mubr.bf16.mxu0 0
    %2784 = vmatmul.mubr.bf16.gmra.mxu0 %v2694
    %v2785 = vpop.f32.mrf.mxu0
    %v2786 = vadd.f32 %v2680, %v2785
    %v2787 = vpop.f32.mrf.mxu0
    %v2788 = vadd.f32 %v2682, %v2787
    %v2789 = vpop.f32.mrf.mxu0
    %v2790 = vadd.f32 %v2684, %v2789
    %v2791 = vpop.f32.mrf.mxu0
    %v2792 = vadd.f32 %v2686, %v2791
    %2793 = vdwg.mxu0
    %v2794 = vld [vmem:[#allocation13] sm:$0xf]
    %v2795 = vld [vmem:[#allocation13 + $0x4] sm:$0xf]
    %v2796 = vpack.c.bf16 %v2006, %v1966
    %v2797 = vpack.c.bf16 %v2007, %v1967
    %v2798 = vpack.c.bf16 %v2008, %v1968
    %v2799 = vpack.c.bf16 %v2009, %v1969
    %v2800 = vpack.c.bf16 %v2086, %v2046
    %v2801 = vpack.c.bf16 %v2087, %v2047
    %v2802 = vpack.c.bf16 %v2088, %v2048
    %v2803 = vpack.c.bf16 %v2089, %v2049
    %v2804 = vpack.c.bf16 %v2166, %v2126
    %v2805 = vpack.c.bf16 %v2167, %v2127
    %v2806 = vpack.c.bf16 %v2168, %v2128
    %v2807 = vpack.c.bf16 %v2169, %v2129
    %v2808 = vpack.c.bf16 %v2246, %v2206
    %v2809 = vpack.c.bf16 %v2247, %v2207
    %v2810 = vpack.c.bf16 %v2248, %v2208
    %v2811 = vpack.c.bf16 %v2249, %v2209
    %v2812 = vpack.c.bf16 %v2326, %v2286
    %v2813 = vpack.c.bf16 %v2327, %v2287
    %v2814 = vpack.c.bf16 %v2328, %v2288
    %v2815 = vpack.c.bf16 %v2329, %v2289
    %v2816 = vpack.c.bf16 %v2406, %v2366
    %v2817 = vpack.c.bf16 %v2407, %v2367
    %v2818 = vpack.c.bf16 %v2408, %v2368
    %v2819 = vpack.c.bf16 %v2409, %v2369
    %v2820 = vpack.c.bf16 %v2486, %v2446
    %v2821 = vpack.c.bf16 %v2487, %v2447
    %v2822 = vpack.c.bf16 %v2488, %v2448
    %v2823 = vpack.c.bf16 %v2489, %v2449
    %v2824 = vpack.c.bf16 %v2566, %v2526
    %v2825 = vpack.c.bf16 %v2567, %v2527
    %v2826 = vpack.c.bf16 %v2568, %v2528
    %v2827 = vpack.c.bf16 %v2569, %v2529
    %v2830 = vunpack.c.l.b16 %v2794
    %v2831 = vunpack.c.l.b16 %v2795
    %v2832 = vpack.c.b16 %v2831, %v2830
    %2834 = vmatprep.subr.bf16.mxu0 %v2825
    %2835 = vmatpush1.bf16.msra.mxu0 %v2824
    %2836 = vmatprep.subr.bf16.mxu0 %v2821
    %2837 = vmatpush1.bf16.msra.mxu0 %v2820
    %2838 = vmatprep.subr.bf16.mxu0 %v2817
    %2839 = vmatpush1.bf16.msra.mxu0 %v2816
    %2840 = vmatprep.subr.bf16.mxu0 %v2813
    %2841 = vmatpush1.bf16.msra.mxu0 %v2812
    %2842 = vmatprep.subr.bf16.mxu0 %v2809
    %2843 = vmatpush1.bf16.msra.mxu0 %v2808
    %2844 = vmatprep.subr.bf16.mxu0 %v2805
    %2845 = vmatpush1.bf16.msra.mxu0 %v2804
    %2846 = vmatprep.subr.bf16.mxu0 %v2801
    %2847 = vmatpush1.bf16.msra.mxu0 %v2800
    %2848 = vmatprep.subr.bf16.mxu0 %v2797
    %2849 = vmatpush1.bf16.msra.mxu0 %v2796
    %2850 = vmatprep.subr.bf16.mxu0 0
    %2851 = vmatpush2.bf16.msra.mxu0 0
    %2852 = vmatprep.subr.bf16.mxu0 0
    %2853 = vmatpush2.bf16.msra.mxu0 0
    %2854 = vmatprep.subr.bf16.mxu0 0
    %2855 = vmatpush2.bf16.msra.mxu0 0
    %2856 = vmatprep.subr.bf16.mxu0 0
    %2857 = vmatpush2.bf16.msra.mxu0 0
    %2858 = vmatprep.subr.bf16.mxu0 0
    %2859 = vmatpush2.bf16.msra.mxu0 0
    %2860 = vmatprep.subr.bf16.mxu0 0
    %2861 = vmatpush2.bf16.msra.mxu0 0
    %2862 = vmatprep.subr.bf16.mxu0 0
    %2863 = vmatpush2.bf16.msra.mxu0 0
    %2864 = vmatprep.subr.bf16.mxu0 0
    %2865 = vmatpush2.bf16.msra.mxu0 0
    %2866 = vmatprep.mubr.bf16.mxu0 0
    %2867 = vmatmul.mubr.bf16.gmra.mxu0 %v2832
    %v2868 = vpop.f32.mrf.mxu0
    %v2869 = vadd.f32 0.0, %v2868
    %v2870 = vpop.f32.mrf.mxu0
    %v2871 = vadd.f32 0.0, %v2870
    %v2872 = vpop.f32.mrf.mxu0
    %v2873 = vadd.f32 0.0, %v2872
    %v2874 = vpop.f32.mrf.mxu0
    %v2875 = vadd.f32 0.0, %v2874
    %2876 = vdwg.mxu0
    %2877 = vmatprep.subr.bf16.mxu0 %v2827
    %2878 = vmatpush1.bf16.msra.mxu0 %v2826
    %2879 = vmatprep.subr.bf16.mxu0 %v2823
    %2880 = vmatpush1.bf16.msra.mxu0 %v2822
    %2881 = vmatprep.subr.bf16.mxu0 %v2819
    %2882 = vmatpush1.bf16.msra.mxu0 %v2818
    %2883 = vmatprep.subr.bf16.mxu0 %v2815
    %2884 = vmatpush1.bf16.msra.mxu0 %v2814
    %2885 = vmatprep.subr.bf16.mxu0 %v2811
    %2886 = vmatpush1.bf16.msra.mxu0 %v2810
    %2887 = vmatprep.subr.bf16.mxu0 %v2807
    %2888 = vmatpush1.bf16.msra.mxu0 %v2806
    %2889 = vmatprep.subr.bf16.mxu0 %v2803
    %2890 = vmatpush1.bf16.msra.mxu0 %v2802
    %2891 = vmatprep.subr.bf16.mxu0 %v2799
    %2892 = vmatpush1.bf16.msra.mxu0 %v2798
    %2893 = vmatprep.subr.bf16.mxu0 0
    %2894 = vmatpush2.bf16.msra.mxu0 0
    %2895 = vmatprep.subr.bf16.mxu0 0
    %2896 = vmatpush2.bf16.msra.mxu0 0
    %2897 = vmatprep.subr.bf16.mxu0 0
    %2898 = vmatpush2.bf16.msra.mxu0 0
    %2899 = vmatprep.subr.bf16.mxu0 0
    %2900 = vmatpush2.bf16.msra.mxu0 0
    %2901 = vmatprep.subr.bf16.mxu0 0
    %2902 = vmatpush2.bf16.msra.mxu0 0
    %2903 = vmatprep.subr.bf16.mxu0 0
    %2904 = vmatpush2.bf16.msra.mxu0 0
    %2905 = vmatprep.subr.bf16.mxu0 0
    %2906 = vmatpush2.bf16.msra.mxu0 0
    %2907 = vmatprep.subr.bf16.mxu0 0
    %2908 = vmatpush2.bf16.msra.mxu0 0
    %2909 = vmatprep.mubr.bf16.mxu0 0
    %2910 = vmatmul.mubr.bf16.gmra.mxu0 %v2832
    %v2911 = vpop.f32.mrf.mxu0
    %v2912 = vadd.f32 0.0, %v2911
    %v2913 = vpop.f32.mrf.mxu0
    %v2914 = vadd.f32 0.0, %v2913
    %v2915 = vpop.f32.mrf.mxu0
    %v2916 = vadd.f32 0.0, %v2915
    %v2917 = vpop.f32.mrf.mxu0
    %v2918 = vadd.f32 0.0, %v2917
    %2919 = vdwg.mxu0
    %v2920 = vadd.f32 %v2743, %v2869
    %v2921 = vadd.f32 %v2745, %v2871
    %v2922 = vadd.f32 %v2786, %v2912
    %v2923 = vadd.f32 %v2788, %v2914
    %v2924 = vadd.f32 %v2747, %v2873
    %v2925 = vadd.f32 %v2749, %v2875
    %v2926 = vadd.f32 %v2790, %v2916
    %v2927 = vadd.f32 %v2792, %v2918
    %v2928 = vld [vmem:[%s13] sm:$0xff]
    %v2929 = vld [vmem:[%s13 + $0x8] sm:$0xff]
    %2931 = vset.pattern.permute.xlu0 0
    %2932 = vperm.xlu0 %2931, %v2928
    %v2933 = vpop.permute.xlu0 %2932
    %2936 = vset.pattern.permute.xlu0 0
    %2937 = vperm.xlu0 %2936, %v2929
    %v2938 = vpop.permute.xlu0 %2937
    %v2940 = vadd.f32 %v2920, %v2933
    %v2941 = vadd.f32 %v2921, %v2933
    %v2942 = vadd.f32 %v2922, %v2933
    %v2943 = vadd.f32 %v2923, %v2933
    %v2944 = vadd.f32 %v2924, %v2938
    %v2945 = vadd.f32 %v2925, %v2938
    %v2946 = vadd.f32 %v2926, %v2938
    %v2947 = vadd.f32 %v2927, %v2938
    %2948 = vst [vmem:[%s14] sm:$0xff] %v2940
    %2949 = vst [vmem:[%s14 + $0x8] sm:$0xff] %v2941
    %2950 = vst [vmem:[%s14 + $0x10] sm:$0xff] %v2942
    %2951 = vst [vmem:[%s14 + $0x18] sm:$0xff] %v2943
    %2952 = vst [vmem:[%s14 + $0x20] sm:$0xff] %v2944
    %2953 = vst [vmem:[%s14 + $0x28] sm:$0xff] %v2945
    %2954 = vst [vmem:[%s14 + $0x30] sm:$0xff] %v2946
    %2955 = vst [vmem:[%s14 + $0x38] sm:$0xff] %v2947
    // Predicated region
    $region90: #{forward.1} parent=1 // pred_check
      _
    $region91: #{forward.1} parent=1 // pred_check_branch
      %2957 = sbr.rel (0) target = $region93
    $region92: #{forward.1} parent=1 // pred_region
      _
    $region93: #{forward.1} parent=1 // pred_fallthru
      _
    // Predicated region
    $region94: #{forward.1} parent=1 // pred_check
      _
    $region95: #{forward.1} parent=1 // pred_check_branch
      %2959 = sbr.rel (0) target = $region97
    $region96: #{forward.1} parent=1 // pred_region
      _
    $region97: #{forward.1} parent=1 // pred_fallthru
      _
    %2960 = vsyncpa [#allocation3], 1
    %2961 = vsyncpa [#allocation5], 1
    %2962 = vsyncpa [#allocation8], 1
    %2963 = vsyncpa [#allocation11], 1
    %2964 = vsyncpa [#allocation14], 1

</llo_original>
